<compile_context>
chip_gen: v6e
topology: v6e:2x2x1
jax: 0.10.0
libtpu: 0.0.40
codegen_flags: <defaults>
</compile_context>

<pallas_src>
import numpy as np
import jax
import jax.numpy as jnp
from jax.experimental import pallas as pl
from jax.experimental.pallas import tpu as pltpu

IMAGE_SIZE = 16                 # opts.image_size
IN_FEATURES = IMAGE_SIZE ** 2   # 256
H1, H2, H3, OUT = 512, 256, 128, 1
OUT_PAD = 128                   # pad the 1-wide output to a full lane group
NEG_SLOPE = 0.2
BF16 = jnp.bfloat16


def _leaky_relu(x, neg_slope=NEG_SLOPE):
    return jnp.where(x > 0, x, neg_slope * x)


def discriminator_kernel(x_ref,
                         w1_ref, b1_ref,
                         w2_ref, b2_ref,
                         w3_ref, b3_ref,
                         w4_ref, b4_ref,
                         o_ref):
    # All matmuls: bf16 operands on the MXU with f32 accumulation.
    # Bias add + LeakyReLU stay in f32 (broadcast of the (1, H) bias row).
    h = jnp.dot(x_ref[...], w1_ref[...],
                preferred_element_type=jnp.float32) + b1_ref[...]
    h = _leaky_relu(h)
    h = jnp.dot(h.astype(BF16), w2_ref[...],
                preferred_element_type=jnp.float32) + b2_ref[...]
    h = _leaky_relu(h)
    h = jnp.dot(h.astype(BF16), w3_ref[...],
                preferred_element_type=jnp.float32) + b3_ref[...]
    h = _leaky_relu(h)
    # Final layer is padded to OUT_PAD columns so the store is lane-dense.
    h = jnp.dot(h.astype(BF16), w4_ref[...],
                preferred_element_type=jnp.float32) + b4_ref[...]
    o_ref[...] = h.astype(o_ref.dtype)


def discriminator_forward(x, params, *, batch_tile=256):
    """x: (B, IN_FEATURES) float32.  params: dict of W1..W4 (in,out), b1..b4 (1,out)."""
    B, F = x.shape
    assert F == IN_FEATURES

    # Pad batch to a multiple of the tile so any B works.
    b_pad = ((B + batch_tile - 1) // batch_tile) * batch_tile
    x_bf = x.astype(BF16)
    if b_pad != B:
        x_bf = jnp.pad(x_bf, ((0, b_pad - B), (0, 0)))

    # bf16 weights; zero-pad the final layer from 1 -> OUT_PAD output columns.
    w1 = params["W1"].astype(BF16)
    w2 = params["W2"].astype(BF16)
    w3 = params["W3"].astype(BF16)
    w4 = jnp.zeros((H3, OUT_PAD), BF16).at[:, :OUT].set(params["W4"].astype(BF16))
    b1 = params["b1"].astype(jnp.float32)
    b2 = params["b2"].astype(jnp.float32)
    b3 = params["b3"].astype(jnp.float32)
    b4 = jnp.zeros((1, OUT_PAD), jnp.float32).at[:, :OUT].set(
        params["b4"].astype(jnp.float32))

    grid = (b_pad // batch_tile,)

    # Weights / biases: full tensor every step, constant index_map ->
    # Pallas keeps the same block resident in VMEM (no per-step re-DMA).
    def full_spec(shape):
        return pl.BlockSpec(shape, lambda i: (0, 0))

    in_specs = [
        pl.BlockSpec((batch_tile, IN_FEATURES), lambda i: (i, 0)),  # x tile
        full_spec((IN_FEATURES, H1)), full_spec((1, H1)),
        full_spec((H1, H2)),          full_spec((1, H2)),
        full_spec((H2, H3)),          full_spec((1, H3)),
        full_spec((H3, OUT_PAD)),     full_spec((1, OUT_PAD)),
    ]
    out_spec = pl.BlockSpec((batch_tile, OUT_PAD), lambda i: (i, 0))

    out = pl.pallas_call(
        discriminator_kernel,
        out_shape=jax.ShapeDtypeStruct((b_pad, OUT_PAD), jnp.float32),
        grid_spec=pltpu.PrefetchScalarGridSpec(
            num_scalar_prefetch=0,
            grid=grid,
            in_specs=in_specs,
            out_specs=out_spec,
        ),
        compiler_params=pltpu.CompilerParams(
            dimension_semantics=("parallel",)),
    )(x_bf, w1, b1, w2, b2, w3, b3, w4, b4)

    # Slice away batch padding and the lane padding of the final layer.
    return out[:B, :OUT]


def init_params(key):
    """Deterministic init mimicking torch.nn.Linear defaults:
    U(-1/sqrt(fan_in), 1/sqrt(fan_in)) for weight and bias."""
    dims = [(IN_FEATURES, H1), (H1, H2), (H2, H3), (H3, OUT)]
    params = {}
    for idx, (fan_in, fan_out) in enumerate(dims, start=1):
        key, kw, kb = jax.random.split(key, 3)
        bound = 1.0 / np.sqrt(fan_in)
        params[f"W{idx}"] = jax.random.uniform(
            kw, (fan_in, fan_out), jnp.float32, -bound, bound)
        params[f"b{idx}"] = jax.random.uniform(
            kb, (1, fan_out), jnp.float32, -bound, bound)
    return params


def reference_forward(x, params):
    """Reference with the same bf16-operand / f32-accumulate numerics as the kernel."""
    h = x.astype(BF16)
    for idx in range(1, 5):
        w = params[f"W{idx}"].astype(BF16)
        h = jnp.dot(h, w, preferred_element_type=jnp.float32) + params[f"b{idx}"]
        if idx < 4:
            h = jnp.where(h > 0, h, NEG_SLOPE * h).astype(BF16)
    return h


if __name__ == "__main__":
    key = jax.random.PRNGKey(0)
    key, kx = jax.random.split(key)
    B = 512                      # 2 grid steps at batch_tile=256
    x = jax.random.normal(kx, (B, IN_FEATURES), jnp.float32)
    params = init_params(key)

    out = discriminator_forward(x, params, batch_tile=256)
    out = jax.block_until_ready(out)

    ref = reference_forward(x, params)
    np.testing.assert_allclose(np.asarray(out), np.asarray(ref),
                               rtol=1e-3, atol=1e-3)
    assert out.shape == (B, 1)
    print("KERNEL_OK")
</pallas_src>

<mosaic_0001>
module attributes {stable_mosaic.version = 11 : i64} {
  func.func @discriminator_kernel(%arg0: i32, %arg1: memref<256x256xbf16, #tpu.memory_space<vmem>>, %arg2: memref<256x512xbf16, #tpu.memory_space<vmem>>, %arg3: memref<1x512xf32, #tpu.memory_space<vmem>>, %arg4: memref<512x256xbf16, #tpu.memory_space<vmem>>, %arg5: memref<1x256xf32, #tpu.memory_space<vmem>>, %arg6: memref<256x128xbf16, #tpu.memory_space<vmem>>, %arg7: memref<1x128xf32, #tpu.memory_space<vmem>>, %arg8: memref<128x128xbf16, #tpu.memory_space<vmem>>, %arg9: memref<1x128xf32, #tpu.memory_space<vmem>>, %arg10: memref<256x128xf32, #tpu.memory_space<vmem>>) attributes {dimension_semantics = [#tpu.dimension_semantics<parallel>], iteration_bounds = array<i64: 2>, scalar_prefetch = 0 : i64, scratch_operands = 0 : i64, tpu.core_type = #tpu.core_type<tc>, window_params = [{transform_indices = @transform_0, window_bounds = array<i64: 256, 256>}, {pipeline_mode = #tpu.pipeline_mode<synchronous>, transform_indices = @transform_1, window_bounds = array<i64: 256, 512>}, {pipeline_mode = #tpu.pipeline_mode<synchronous>, transform_indices = @transform_2, window_bounds = array<i64: 1, 512>}, {pipeline_mode = #tpu.pipeline_mode<synchronous>, transform_indices = @transform_3, window_bounds = array<i64: 512, 256>}, {pipeline_mode = #tpu.pipeline_mode<synchronous>, transform_indices = @transform_4, window_bounds = array<i64: 1, 256>}, {pipeline_mode = #tpu.pipeline_mode<synchronous>, transform_indices = @transform_5, window_bounds = array<i64: 256, 128>}, {pipeline_mode = #tpu.pipeline_mode<synchronous>, transform_indices = @transform_6, window_bounds = array<i64: 1, 128>}, {pipeline_mode = #tpu.pipeline_mode<synchronous>, transform_indices = @transform_7, window_bounds = array<i64: 128, 128>}, {pipeline_mode = #tpu.pipeline_mode<synchronous>, transform_indices = @transform_8, window_bounds = array<i64: 1, 128>}, {transform_indices = @transform_9, window_bounds = array<i64: 256, 128>}]} {
    %c0 = arith.constant 0 : index
    %c0_0 = arith.constant 0 : index
    %0 = vector.load %arg1[%c0, %c0_0] : memref<256x256xbf16, #tpu.memory_space<vmem>>, vector<256x256xbf16>
    %c0_1 = arith.constant 0 : index
    %c0_2 = arith.constant 0 : index
    %1 = vector.load %arg2[%c0_1, %c0_2] : memref<256x512xbf16, #tpu.memory_space<vmem>>, vector<256x512xbf16>
    %cst = arith.constant dense<0.000000e+00> : vector<256x512xf32>
    %2 = tpu.matmul %0, %1, %cst {dimension_numbers = #tpu.dot_dimension_numbers<[1], [0], [0], [1], [0, 0, 1, 1], [], []>} : vector<256x256xbf16>, vector<256x512xbf16>, vector<256x512xf32> -> vector<256x512xf32>
    %c0_3 = arith.constant 0 : index
    %c0_4 = arith.constant 0 : index
    %3 = vector.load %arg3[%c0_3, %c0_4] : memref<1x512xf32, #tpu.memory_space<vmem>>, vector<1x512xf32>
    %4 = vector.broadcast %3 : vector<1x512xf32> to vector<256x512xf32>
    %5 = arith.addf %2, %4 : vector<256x512xf32>
    %cst_5 = arith.constant 0.000000e+00 : f32
    %6 = vector.broadcast %cst_5 : f32 to vector<256x512xf32>
    %7 = arith.cmpf ogt, %5, %6 : vector<256x512xf32>
    %cst_6 = arith.constant 2.000000e-01 : f32
    %8 = vector.broadcast %cst_6 : f32 to vector<256x512xf32>
    %9 = arith.mulf %8, %5 : vector<256x512xf32>
    %10 = arith.select %7, %5, %9 : vector<256x512xi1>, vector<256x512xf32>
    %11 = arith.truncf %10 : vector<256x512xf32> to vector<256x512xbf16>
    %c0_7 = arith.constant 0 : index
    %c0_8 = arith.constant 0 : index
    %12 = vector.load %arg4[%c0_7, %c0_8] : memref<512x256xbf16, #tpu.memory_space<vmem>>, vector<512x256xbf16>
    %cst_9 = arith.constant dense<0.000000e+00> : vector<256x256xf32>
    %13 = tpu.matmul %11, %12, %cst_9 {dimension_numbers = #tpu.dot_dimension_numbers<[1], [0], [0], [1], [0, 0, 1, 1], [], []>} : vector<256x512xbf16>, vector<512x256xbf16>, vector<256x256xf32> -> vector<256x256xf32>
    %c0_10 = arith.constant 0 : index
    %c0_11 = arith.constant 0 : index
    %14 = vector.load %arg5[%c0_10, %c0_11] : memref<1x256xf32, #tpu.memory_space<vmem>>, vector<1x256xf32>
    %15 = vector.broadcast %14 : vector<1x256xf32> to vector<256x256xf32>
    %16 = arith.addf %13, %15 : vector<256x256xf32>
    %cst_12 = arith.constant 0.000000e+00 : f32
    %17 = vector.broadcast %cst_12 : f32 to vector<256x256xf32>
    %18 = arith.cmpf ogt, %16, %17 : vector<256x256xf32>
    %cst_13 = arith.constant 2.000000e-01 : f32
    %19 = vector.broadcast %cst_13 : f32 to vector<256x256xf32>
    %20 = arith.mulf %19, %16 : vector<256x256xf32>
    %21 = arith.select %18, %16, %20 : vector<256x256xi1>, vector<256x256xf32>
    %22 = arith.truncf %21 : vector<256x256xf32> to vector<256x256xbf16>
    %c0_14 = arith.constant 0 : index
    %c0_15 = arith.constant 0 : index
    %23 = vector.load %arg6[%c0_14, %c0_15] : memref<256x128xbf16, #tpu.memory_space<vmem>>, vector<256x128xbf16>
    %cst_16 = arith.constant dense<0.000000e+00> : vector<256x128xf32>
    %24 = tpu.matmul %22, %23, %cst_16 {dimension_numbers = #tpu.dot_dimension_numbers<[1], [0], [0], [1], [0, 0, 1, 1], [], []>} : vector<256x256xbf16>, vector<256x128xbf16>, vector<256x128xf32> -> vector<256x128xf32>
    %c0_17 = arith.constant 0 : index
    %c0_18 = arith.constant 0 : index
    %25 = vector.load %arg7[%c0_17, %c0_18] : memref<1x128xf32, #tpu.memory_space<vmem>>, vector<1x128xf32>
    %26 = vector.broadcast %25 : vector<1x128xf32> to vector<256x128xf32>
    %27 = arith.addf %24, %26 : vector<256x128xf32>
    %cst_19 = arith.constant 0.000000e+00 : f32
    %28 = vector.broadcast %cst_19 : f32 to vector<256x128xf32>
    %29 = arith.cmpf ogt, %27, %28 : vector<256x128xf32>
    %cst_20 = arith.constant 2.000000e-01 : f32
    %30 = vector.broadcast %cst_20 : f32 to vector<256x128xf32>
    %31 = arith.mulf %30, %27 : vector<256x128xf32>
    %32 = arith.select %29, %27, %31 : vector<256x128xi1>, vector<256x128xf32>
    %33 = arith.truncf %32 : vector<256x128xf32> to vector<256x128xbf16>
    %c0_21 = arith.constant 0 : index
    %c0_22 = arith.constant 0 : index
    %34 = vector.load %arg8[%c0_21, %c0_22] : memref<128x128xbf16, #tpu.memory_space<vmem>>, vector<128x128xbf16>
    %cst_23 = arith.constant dense<0.000000e+00> : vector<256x128xf32>
    %35 = tpu.matmul %33, %34, %cst_23 {dimension_numbers = #tpu.dot_dimension_numbers<[1], [0], [0], [1], [0, 0, 1, 1], [], []>} : vector<256x128xbf16>, vector<128x128xbf16>, vector<256x128xf32> -> vector<256x128xf32>
    %c0_24 = arith.constant 0 : index
    %c0_25 = arith.constant 0 : index
    %36 = vector.load %arg9[%c0_24, %c0_25] : memref<1x128xf32, #tpu.memory_space<vmem>>, vector<1x128xf32>
    %37 = vector.broadcast %36 : vector<1x128xf32> to vector<256x128xf32>
    %38 = arith.addf %35, %37 : vector<256x128xf32>
    %c0_26 = arith.constant 0 : index
    %c0_27 = arith.constant 0 : index
    %39 = vector.load %arg10[%c0_26, %c0_27] : memref<256x128xf32, #tpu.memory_space<vmem>>, vector<256x128xf32>
    tpu.vector_store %arg10[%c0_26, %c0_27], %38 {strides = array<i32>} : memref<256x128xf32, #tpu.memory_space<vmem>>, vector<256x128xf32>,
    return
  }
  func.func @transform_0(%arg0: i32) -> (i32, i32) {
    %c0_i32 = arith.constant 0 : i32
    %c0_i32_0 = arith.constant 0 : i32
    return %arg0, %c0_i32 : i32, i32
  }
  func.func @transform_1(%arg0: i32) -> (i32, i32) {
    %c0_i32 = arith.constant 0 : i32
    %c0_i32_0 = arith.constant 0 : i32
    %c0_i32_1 = arith.constant 0 : i32
    return %c0_i32, %c0_i32_0 : i32, i32
  }
  func.func @transform_2(%arg0: i32) -> (i32, i32) {
    %c0_i32 = arith.constant 0 : i32
    %c0_i32_0 = arith.constant 0 : i32
    %c0_i32_1 = arith.constant 0 : i32
    return %c0_i32, %c0_i32_0 : i32, i32
  }
  func.func @transform_3(%arg0: i32) -> (i32, i32) {
    %c0_i32 = arith.constant 0 : i32
    %c0_i32_0 = arith.constant 0 : i32
    %c0_i32_1 = arith.constant 0 : i32
    return %c0_i32, %c0_i32_0 : i32, i32
  }
  func.func @transform_4(%arg0: i32) -> (i32, i32) {
    %c0_i32 = arith.constant 0 : i32
    %c0_i32_0 = arith.constant 0 : i32
    %c0_i32_1 = arith.constant 0 : i32
    return %c0_i32, %c0_i32_0 : i32, i32
  }
  func.func @transform_5(%arg0: i32) -> (i32, i32) {
    %c0_i32 = arith.constant 0 : i32
    %c0_i32_0 = arith.constant 0 : i32
    %c0_i32_1 = arith.constant 0 : i32
    return %c0_i32, %c0_i32_0 : i32, i32
  }
  func.func @transform_6(%arg0: i32) -> (i32, i32) {
    %c0_i32 = arith.constant 0 : i32
    %c0_i32_0 = arith.constant 0 : i32
    %c0_i32_1 = arith.constant 0 : i32
    return %c0_i32, %c0_i32_0 : i32, i32
  }
  func.func @transform_7(%arg0: i32) -> (i32, i32) {
    %c0_i32 = arith.constant 0 : i32
    %c0_i32_0 = arith.constant 0 : i32
    %c0_i32_1 = arith.constant 0 : i32
    return %c0_i32, %c0_i32_0 : i32, i32
  }
  func.func @transform_8(%arg0: i32) -> (i32, i32) {
    %c0_i32 = arith.constant 0 : i32
    %c0_i32_0 = arith.constant 0 : i32
    %c0_i32_1 = arith.constant 0 : i32
    return %c0_i32, %c0_i32_0 : i32, i32
  }
  func.func @transform_9(%arg0: i32) -> (i32, i32) {
    %c0_i32 = arith.constant 0 : i32
    %c0_i32_0 = arith.constant 0 : i32
    return %arg0, %c0_i32 : i32, i32
  }
}

</mosaic_0001>

<llo_original>
// kernel: tpu_custom_call.1
$region0: #{tpu_custom_call.1}
  #allocation0 [shape = 'u32[]', space=smem, size = 0x4, offset = 0x4, fixed_abs, tag = 'smem constant byte address 0x4 - core index']
  #allocation1 [shape = 'u32[144,128]{1,0:T(1,128)}', space=vmem, size = 0x12000, scoped, tag = 'internal scratch']
  %s0 = inlined_call_operand.hbm [shape: bf16[512,256], index: 0, kind: input, shape index: {}]
  %s1 = inlined_call_operand.hbm [shape: bf16[256,512], index: 1, kind: input, shape index: {}]
  %s2 = inlined_call_operand.hbm [shape: f32[1,512], index: 2, kind: input, shape index: {}]
  %s3 = inlined_call_operand.hbm [shape: bf16[512,256], index: 3, kind: input, shape index: {}]
  %s4 = inlined_call_operand.vmem [shape: f32[1,256], index: 4, kind: input, shape index: {}]
  %s5 = inlined_call_operand.hbm [shape: bf16[256,128], index: 5, kind: input, shape index: {}]
  %s6 = inlined_call_operand.vmem [shape: f32[1,128], index: 6, kind: input, shape index: {}]
  %s7 = inlined_call_operand.hbm [shape: bf16[128,128], index: 7, kind: input, shape index: {}]
  %s8 = inlined_call_operand.vmem [shape: f32[1,128], index: 8, kind: input, shape index: {}]
  %s9 = inlined_call_operand.hbm [shape: f32[512,128], index: 9, kind: output, shape index: {}]
  %s10 = sld [smem:[#allocation0]]
  $region93: #{tpu_custom_call.1} parent=0
    _
  %s12 = ssub.s32 1, %s10
  %s13 = scalar_select 0, %s12, %s10
  $region1: #{tpu_custom_call.1} parent=0
    #allocation2 [shape = 'u8[262144]{0}', space=vmem, size = 0x40000, scoped, tag = 'input window, operand 0']
    #allocation3 [shape = 's32[2]{0}', space=sflag, size = 0x8, scoped, tag = 'scoped memory for tpu_custom_call.1']
    #allocation4 [shape = 's32[2]{0}', space=sflag, size = 0x8, scoped, tag = 'scoped memory for tpu_custom_call.1']
    #allocation5 [shape = 'u8[262144]{0}', space=vmem, size = 0x40000, scoped, tag = 'input window, operand 1, single buffered']
    #allocation6 [shape = 's32[1]{0}', space=sflag, size = 0x4, scoped, tag = 'scoped memory for tpu_custom_call.1']
    #allocation7 [shape = 'u8[2048]{0}', space=vmem, size = 0x800, scoped, tag = 'input window, operand 2, single buffered']
    #allocation8 [shape = 'u8[262144]{0}', space=vmem, size = 0x40000, scoped, tag = 'input window, operand 3, single buffered']
    #allocation9 [shape = 's32[1]{0}', space=sflag, size = 0x4, scoped, tag = 'scoped memory for tpu_custom_call.1']
    #allocation10 [shape = 'u8[65536]{0}', space=vmem, size = 0x10000, scoped, tag = 'input window, operand 5, single buffered']
    #allocation11 [shape = 'u8[32768]{0}', space=vmem, size = 0x8000, scoped, tag = 'input window, operand 7, single buffered']
    #allocation12 [shape = 's32[1]{0}', space=sflag, size = 0x4, scoped, tag = 'scoped memory for tpu_custom_call.1']
    #allocation13 [shape = 'u8[262144]{0}', space=vmem, size = 0x40000, scoped, tag = 'output window, operand 0']
    %14 = vsyncpa [#allocation3], 0
    %s15 = scalar_lea.sflag [#allocation3], 1
    %16 = vsyncpa %s15, 0
    %17 = vsyncpa [#allocation6], 0
    %18 = vsyncpa [#allocation9], 0
    %19 = vsyncpa [#allocation12], 0
    %20 = vsyncpa [#allocation4], 0
    %s21 = scalar_lea.sflag [#allocation4], 1
    %22 = vsyncpa %s21, 0
    loop: start=0, step=1, limit=4
    $region2: #{tpu_custom_call.1} parent=1 // loop_pre_header
      _
    $region3: #{tpu_custom_call.1} parent=1 // loop_header
      %s24 = sphi 0, %s28
      %p25 = scmp.ge.s32.totalorder %s24, 4
      %s34 = sphi 0, %s36
      %s37 = sphi 0, %s34
      %s38 = sphi 0, %s37
      %s54 = sphi 0, %s38
      %s58 = sphi 0, %s58
      %s60 = sphi 0, %s58
      %s61 = sphi 0, %s60
      %s75 = sphi 0, %s61
      %s79 = sphi 0, %s79
      %s81 = sphi 0, %s79
      %s82 = sphi 0, %s81
      %s96 = sphi 0, %s82
      %s100 = sphi 0, %s100
      %s102 = sphi 0, %s100
      %s103 = sphi 0, %s102
      %s117 = sphi 0, %s103
      %s121 = sphi 0, %s121
      %s123 = sphi 0, %s121
      %s124 = sphi 0, %s123
      %s138 = sphi 0, %s124
      %s142 = sphi 0, %s142
      %s144 = sphi 0, %s142
      %s145 = sphi 0, %s144
      %s159 = sphi 0, %s145
      %s163 = sphi 0, %s163
      %s165 = sphi 0, %s163
      %s166 = sphi 0, %s165
      %s180 = sphi 0, %s166
      %s184 = sphi 0, %s184
      %s186 = sphi 0, %s184
      %s187 = sphi 0, %s186
      %s201 = sphi 0, %s187
      %s205 = sphi 0, %s205
      %s207 = sphi 0, %s205
      %s208 = sphi 0, %s207
      %s222 = sphi 0, %s208
      %s228 = sphi 0, %s230
      %s231 = sphi 0, %s228
      %s232 = sphi 0, %s231
      %s248 = sphi 0, %s232
    $region4: #{tpu_custom_call.1} parent=1 // loop_header_branch
      %27 = sbr.rel (%p25) target = $region8
    $region5: #{tpu_custom_call.1} parent=1 // loop_body
      %s29 = ssub.s32 %s24, 1
      %s30 = ssub.s32 %s24, 2
      %s31 = sadd.s32 %s24, 1
      %s32 = ssub.s32 %s24, %s31
      %p33 = scmp.eq.s32.totalorder %s32, 0
      %s35 = sadd.s32 %s34, 1
      %s36 = scalar_select %p33, %s34, %s35
      %p39 = pneg %p33
      %p40 = scmp.eq.s32.totalorder %s24, 1
      %p41 = por %p39, %p40
      %p42 = scmp.ne.s32.totalorder %s34, %s37
      %p43 = scmp.eq.s32.totalorder %s24, 0
      %p44 = por %p42, %p43
      %p45 = scmp.ne.s32.totalorder %s34, %s37
      %p46 = scmp.eq.s32.totalorder %s29, 1
      %p47 = por %p45, %p46
      %p48 = scmp.ne.s32.totalorder %s37, %s38
      %p49 = scmp.eq.s32.totalorder %s29, 0
      %p50 = por %p48, %p49
      %p51 = scmp.ne.s32.totalorder %s37, %s38
      %p52 = scmp.eq.s32.totalorder %s30, 1
      %p53 = por %p51, %p52
      %p55 = scmp.ne.s32.totalorder %s38, %s54
      %p56 = scmp.eq.s32.totalorder %s30, 0
      %p57 = por %p55, %p56
      %s59 = sadd.s32 %s58, 1
      %p62 = scmp.eq.s32.totalorder %s24, 1
      %p63 = scmp.ne.s32.totalorder %s58, %s60
      %p64 = scmp.eq.s32.totalorder %s24, 0
      %p65 = por %p63, %p64
      %p66 = scmp.ne.s32.totalorder %s58, %s60
      %p67 = scmp.eq.s32.totalorder %s29, 1
      %p68 = por %p66, %p67
      %p69 = scmp.ne.s32.totalorder %s60, %s61
      %p70 = scmp.eq.s32.totalorder %s29, 0
      %p71 = por %p69, %p70
      %p72 = scmp.ne.s32.totalorder %s60, %s61
      %p73 = scmp.eq.s32.totalorder %s30, 1
      %p74 = por %p72, %p73
      %p76 = scmp.ne.s32.totalorder %s61, %s75
      %p77 = scmp.eq.s32.totalorder %s30, 0
      %p78 = por %p76, %p77
      %s80 = sadd.s32 %s79, 1
      %p83 = scmp.eq.s32.totalorder %s24, 1
      %p84 = scmp.ne.s32.totalorder %s79, %s81
      %p85 = scmp.eq.s32.totalorder %s24, 0
      %p86 = por %p84, %p85
      %p87 = scmp.ne.s32.totalorder %s79, %s81
      %p88 = scmp.eq.s32.totalorder %s29, 1
      %p89 = por %p87, %p88
      %p90 = scmp.ne.s32.totalorder %s81, %s82
      %p91 = scmp.eq.s32.totalorder %s29, 0
      %p92 = por %p90, %p91
      %p93 = scmp.ne.s32.totalorder %s81, %s82
      %p94 = scmp.eq.s32.totalorder %s30, 1
      %p95 = por %p93, %p94
      %p97 = scmp.ne.s32.totalorder %s82, %s96
      %p98 = scmp.eq.s32.totalorder %s30, 0
      %p99 = por %p97, %p98
      %s101 = sadd.s32 %s100, 1
      %p104 = scmp.eq.s32.totalorder %s24, 1
      %p105 = scmp.ne.s32.totalorder %s100, %s102
      %p106 = scmp.eq.s32.totalorder %s24, 0
      %p107 = por %p105, %p106
      %p108 = scmp.ne.s32.totalorder %s100, %s102
      %p109 = scmp.eq.s32.totalorder %s29, 1
      %p110 = por %p108, %p109
      %p111 = scmp.ne.s32.totalorder %s102, %s103
      %p112 = scmp.eq.s32.totalorder %s29, 0
      %p113 = por %p111, %p112
      %p114 = scmp.ne.s32.totalorder %s102, %s103
      %p115 = scmp.eq.s32.totalorder %s30, 1
      %p116 = por %p114, %p115
      %p118 = scmp.ne.s32.totalorder %s103, %s117
      %p119 = scmp.eq.s32.totalorder %s30, 0
      %p120 = por %p118, %p119
      %s122 = sadd.s32 %s121, 1
      %p125 = scmp.eq.s32.totalorder %s24, 1
      %p126 = scmp.ne.s32.totalorder %s121, %s123
      %p127 = scmp.eq.s32.totalorder %s24, 0
      %p128 = por %p126, %p127
      %p129 = scmp.ne.s32.totalorder %s121, %s123
      %p130 = scmp.eq.s32.totalorder %s29, 1
      %p131 = por %p129, %p130
      %p132 = scmp.ne.s32.totalorder %s123, %s124
      %p133 = scmp.eq.s32.totalorder %s29, 0
      %p134 = por %p132, %p133
      %p135 = scmp.ne.s32.totalorder %s123, %s124
      %p136 = scmp.eq.s32.totalorder %s30, 1
      %p137 = por %p135, %p136
      %p139 = scmp.ne.s32.totalorder %s124, %s138
      %p140 = scmp.eq.s32.totalorder %s30, 0
      %p141 = por %p139, %p140
      %s143 = sadd.s32 %s142, 1
      %p146 = scmp.eq.s32.totalorder %s24, 1
      %p147 = scmp.ne.s32.totalorder %s142, %s144
      %p148 = scmp.eq.s32.totalorder %s24, 0
      %p149 = por %p147, %p148
      %p150 = scmp.ne.s32.totalorder %s142, %s144
      %p151 = scmp.eq.s32.totalorder %s29, 1
      %p152 = por %p150, %p151
      %p153 = scmp.ne.s32.totalorder %s144, %s145
      %p154 = scmp.eq.s32.totalorder %s29, 0
      %p155 = por %p153, %p154
      %p156 = scmp.ne.s32.totalorder %s144, %s145
      %p157 = scmp.eq.s32.totalorder %s30, 1
      %p158 = por %p156, %p157
      %p160 = scmp.ne.s32.totalorder %s145, %s159
      %p161 = scmp.eq.s32.totalorder %s30, 0
      %p162 = por %p160, %p161
      %s164 = sadd.s32 %s163, 1
      %p167 = scmp.eq.s32.totalorder %s24, 1
      %p168 = scmp.ne.s32.totalorder %s163, %s165
      %p169 = scmp.eq.s32.totalorder %s24, 0
      %p170 = por %p168, %p169
      %p171 = scmp.ne.s32.totalorder %s163, %s165
      %p172 = scmp.eq.s32.totalorder %s29, 1
      %p173 = por %p171, %p172
      %p174 = scmp.ne.s32.totalorder %s165, %s166
      %p175 = scmp.eq.s32.totalorder %s29, 0
      %p176 = por %p174, %p175
      %p177 = scmp.ne.s32.totalorder %s165, %s166
      %p178 = scmp.eq.s32.totalorder %s30, 1
      %p179 = por %p177, %p178
      %p181 = scmp.ne.s32.totalorder %s166, %s180
      %p182 = scmp.eq.s32.totalorder %s30, 0
      %p183 = por %p181, %p182
      %s185 = sadd.s32 %s184, 1
      %p188 = scmp.eq.s32.totalorder %s24, 1
      %p189 = scmp.ne.s32.totalorder %s184, %s186
      %p190 = scmp.eq.s32.totalorder %s24, 0
      %p191 = por %p189, %p190
      %p192 = scmp.ne.s32.totalorder %s184, %s186
      %p193 = scmp.eq.s32.totalorder %s29, 1
      %p194 = por %p192, %p193
      %p195 = scmp.ne.s32.totalorder %s186, %s187
      %p196 = scmp.eq.s32.totalorder %s29, 0
      %p197 = por %p195, %p196
      %p198 = scmp.ne.s32.totalorder %s186, %s187
      %p199 = scmp.eq.s32.totalorder %s30, 1
      %p200 = por %p198, %p199
      %p202 = scmp.ne.s32.totalorder %s187, %s201
      %p203 = scmp.eq.s32.totalorder %s30, 0
      %p204 = por %p202, %p203
      %s206 = sadd.s32 %s205, 1
      %p209 = scmp.eq.s32.totalorder %s24, 1
      %p210 = scmp.ne.s32.totalorder %s205, %s207
      %p211 = scmp.eq.s32.totalorder %s24, 0
      %p212 = por %p210, %p211
      %p213 = scmp.ne.s32.totalorder %s205, %s207
      %p214 = scmp.eq.s32.totalorder %s29, 1
      %p215 = por %p213, %p214
      %p216 = scmp.ne.s32.totalorder %s207, %s208
      %p217 = scmp.eq.s32.totalorder %s29, 0
      %p218 = por %p216, %p217
      %p219 = scmp.ne.s32.totalorder %s207, %s208
      %p220 = scmp.eq.s32.totalorder %s30, 1
      %p221 = por %p219, %p220
      %p223 = scmp.ne.s32.totalorder %s208, %s222
      %p224 = scmp.eq.s32.totalorder %s30, 0
      %p225 = por %p223, %p224
      %s226 = ssub.s32 %s24, %s31
      %p227 = scmp.eq.s32.totalorder %s226, 0
      %s229 = sadd.s32 %s228, 1
      %s230 = scalar_select %p227, %s228, %s229
      %p233 = pneg %p227
      %p234 = scmp.eq.s32.totalorder %s24, 1
      %p235 = por %p233, %p234
      %p236 = scmp.ne.s32.totalorder %s228, %s231
      %p237 = scmp.eq.s32.totalorder %s24, 0
      %p238 = por %p236, %p237
      %p239 = scmp.ne.s32.totalorder %s228, %s231
      %p240 = scmp.eq.s32.totalorder %s29, 1
      %p241 = por %p239, %p240
      %p242 = scmp.ne.s32.totalorder %s231, %s232
      %p243 = scmp.eq.s32.totalorder %s29, 0
      %p244 = por %p242, %p243
      %p245 = scmp.ne.s32.totalorder %s231, %s232
      %p246 = scmp.eq.s32.totalorder %s30, 1
      %p247 = por %p245, %p246
      %p249 = scmp.ne.s32.totalorder %s232, %s248
      %p250 = scmp.eq.s32.totalorder %s30, 0
      %p251 = por %p249, %p250
      %p252 = scmp.le.s32.totalorder 1, %s24
      %p253 = scmp.lt.s32.totalorder %s24, 3
      %p254 = pnand %p252, %p253
      %p255 = pneg %p254
      // Predicated region
      $region9: #{tpu_custom_call.1} parent=5 // pred_check
        _
      $region10: #{tpu_custom_call.1} parent=5 // pred_check_branch
        %257 = sbr.rel (%p254) target = $region12
      $region11: #{tpu_custom_call.1} parent=5 // pred_region
        %s258 = ssub.s32 %s24, 1
        // Predicated region
        $region13: #{tpu_custom_call.1} parent=11 // pred_check
          %p259 = pneg %p71
        $region14: #{tpu_custom_call.1} parent=11 // pred_check_branch
          %261 = sbr.rel (%p259) target = $region16
        $region15: #{tpu_custom_call.1} parent=11 // pred_region
          %s263 = ssub.s32 8192, 8192
          %264 = vsyncadd [#allocation6], %s263
          %s265 = sshll.u32 [#allocation5], 4
          %s266 = int_to_ptr.vmem [resolvable:$true] %s265
          %271 = dma.hbm_to_vmem [thread:$0]  %s1, 8192, %s266, [#allocation6], 256, 256, 16
        $region16: #{tpu_custom_call.1} parent=11 // pred_fallthru
          _
        // Predicated region
        $region17: #{tpu_custom_call.1} parent=11 // pred_check
          %p272 = pneg %p92
        $region18: #{tpu_custom_call.1} parent=11 // pred_check_branch
          %274 = sbr.rel (%p272) target = $region20
        $region19: #{tpu_custom_call.1} parent=11 // pred_region
          %s276 = ssub.s32 64, 64
          %277 = vsyncadd [#allocation6], %s276
          %s279 = sshll.u32 [#allocation7], 4
          %s280 = int_to_ptr.vmem [resolvable:$true] %s279
          %282 = dma.hbm_to_vmem [thread:$0]  %s2, 64, %s280, [#allocation6]
        $region20: #{tpu_custom_call.1} parent=11 // pred_fallthru
          _
        // Predicated region
        $region21: #{tpu_custom_call.1} parent=11 // pred_check
          %p283 = pneg %p113
        $region22: #{tpu_custom_call.1} parent=11 // pred_check_branch
          %285 = sbr.rel (%p283) target = $region24
        $region23: #{tpu_custom_call.1} parent=11 // pred_region
          %s287 = ssub.s32 8192, 8192
          %288 = vsyncadd [#allocation9], %s287
          %s289 = sshll.u32 [#allocation8], 4
          %s290 = int_to_ptr.vmem [resolvable:$true] %s289
          %295 = dma.hbm_to_vmem [thread:$0]  %s3, 8192, %s290, [#allocation9], 128, 128, 8
        $region24: #{tpu_custom_call.1} parent=11 // pred_fallthru
          _
        // Predicated region
        $region25: #{tpu_custom_call.1} parent=11 // pred_check
          %p296 = pneg %p134
        $region26: #{tpu_custom_call.1} parent=11 // pred_check_branch
          %298 = sbr.rel (%p296) target = $region28
        $region27: #{tpu_custom_call.1} parent=11 // pred_region
          _
        $region28: #{tpu_custom_call.1} parent=11 // pred_fallthru
          _
        // Predicated region
        $region29: #{tpu_custom_call.1} parent=11 // pred_check
          %p299 = pneg %p155
        $region30: #{tpu_custom_call.1} parent=11 // pred_check_branch
          %301 = sbr.rel (%p299) target = $region32
        $region31: #{tpu_custom_call.1} parent=11 // pred_region
          %s303 = ssub.s32 2048, 2048
          %304 = vsyncadd [#allocation9], %s303
          %s305 = sshll.u32 [#allocation10], 4
          %s306 = int_to_ptr.vmem [resolvable:$true] %s305
          %311 = dma.hbm_to_vmem [thread:$0]  %s5, 2048, %s306, [#allocation9], 64, 64, 4
        $region32: #{tpu_custom_call.1} parent=11 // pred_fallthru
          _
        // Predicated region
        $region33: #{tpu_custom_call.1} parent=11 // pred_check
          %p312 = pneg %p176
        $region34: #{tpu_custom_call.1} parent=11 // pred_check_branch
          %314 = sbr.rel (%p312) target = $region36
        $region35: #{tpu_custom_call.1} parent=11 // pred_region
          _
        $region36: #{tpu_custom_call.1} parent=11 // pred_fallthru
          _
        // Predicated region
        $region37: #{tpu_custom_call.1} parent=11 // pred_check
          %p315 = pneg %p197
        $region38: #{tpu_custom_call.1} parent=11 // pred_check_branch
          %317 = sbr.rel (%p315) target = $region40
        $region39: #{tpu_custom_call.1} parent=11 // pred_region
          %s319 = ssub.s32 1024, 1024
          %320 = vsyncadd [#allocation12], %s319
          %s321 = sshll.u32 [#allocation11], 4
          %s322 = int_to_ptr.vmem [resolvable:$true] %s321
          %327 = dma.hbm_to_vmem [thread:$0]  %s7, 1024, %s322, [#allocation12], 64, 64, 4
        $region40: #{tpu_custom_call.1} parent=11 // pred_fallthru
          _
        // Predicated region
        $region41: #{tpu_custom_call.1} parent=11 // pred_check
          %p328 = pneg %p218
        $region42: #{tpu_custom_call.1} parent=11 // pred_check_branch
          %330 = sbr.rel (%p328) target = $region44
        $region43: #{tpu_custom_call.1} parent=11 // pred_region
          _
        $region44: #{tpu_custom_call.1} parent=11 // pred_fallthru
          _
      $region12: #{tpu_custom_call.1} parent=5 // pred_fallthru
        _
      %p331 = scmp.lt.s32.totalorder %s24, 2
      // Predicated region
      $region45: #{tpu_custom_call.1} parent=5 // pred_check
        %p332 = pneg %p331
      $region46: #{tpu_custom_call.1} parent=5 // pred_check_branch
        %334 = sbr.rel (%p332) target = $region48
      $region47: #{tpu_custom_call.1} parent=5 // pred_region
        // Predicated region
        $region49: #{tpu_custom_call.1} parent=47 // pred_check
          %p335 = pneg %p44
        $region50: #{tpu_custom_call.1} parent=47 // pred_check_branch
          %337 = sbr.rel (%p335) target = $region52
        $region51: #{tpu_custom_call.1} parent=47 // pred_region
          %s338 = sand.u32 %s34, 1
          %s339 = scalar_lea.sflag [#allocation3], %s338
          %s340 = sand.u32 %s34, 1
          %s341 = smul.addr %s340, 256
          %s342 = scalar_lea.vmem [#allocation2], %s341
          %s343 = smul.u32 32, %s24
          %s345 = ssub.s32 4096, 4096
          %346 = vsyncadd %s339, %s345
          %s347 = smul.addr %s343, 2
          %s348 = smul.addr %s347, 64
          %s349 = scalar_lea.hbm %s0, %s348
          %s350 = sshll.u32 %s342, 4
          %s351 = int_to_ptr.vmem [resolvable:$true] %s350
          %356 = dma.hbm_to_vmem [thread:$0]  %s349, 4096, %s351, %s339, 128, 128, 8
        $region52: #{tpu_custom_call.1} parent=47 // pred_fallthru
          _
      $region48: #{tpu_custom_call.1} parent=5 // pred_fallthru
        _
      %p357 = scmp.le.s32.totalorder 1, %s24
      %p358 = scmp.lt.s32.totalorder %s24, 3
      %p359 = pnand %p357, %p358
      %p360 = pneg %p359
      // Predicated region
      $region53: #{tpu_custom_call.1} parent=5 // pred_check
        _
      $region54: #{tpu_custom_call.1} parent=5 // pred_check_branch
        %362 = sbr.rel (%p359) target = $region56
      $region55: #{tpu_custom_call.1} parent=5 // pred_region
        %s363 = ssub.s32 %s24, 1
        %s364 = sand.u32 %s37, 1
        %s365 = scalar_lea.sflag [#allocation3], %s364
        %s366 = sand.u32 %s37, 1
        %s367 = smul.addr %s366, 256
        %s368 = scalar_lea.vmem [#allocation2], %s367
        // Predicated region
        $region57: #{tpu_custom_call.1} parent=55 // pred_check
          %p369 = pneg %p50
        $region58: #{tpu_custom_call.1} parent=55 // pred_check_branch
          %371 = sbr.rel (%p369) target = $region60
        $region59: #{tpu_custom_call.1} parent=55 // pred_region
          %372 = dma.done %s365, 4096
        $region60: #{tpu_custom_call.1} parent=55 // pred_fallthru
          _
        // Predicated region
        $region61: #{tpu_custom_call.1} parent=55 // pred_check
          %p373 = pneg %p71
        $region62: #{tpu_custom_call.1} parent=55 // pred_check_branch
          %375 = sbr.rel (%p373) target = $region64
        $region63: #{tpu_custom_call.1} parent=55 // pred_region
          %376 = dma.done [#allocation6], 8192
        $region64: #{tpu_custom_call.1} parent=55 // pred_fallthru
          _
        // Predicated region
        $region65: #{tpu_custom_call.1} parent=55 // pred_check
          %p377 = pneg %p92
        $region66: #{tpu_custom_call.1} parent=55 // pred_check_branch
          %379 = sbr.rel (%p377) target = $region68
        $region67: #{tpu_custom_call.1} parent=55 // pred_region
          %380 = dma.done [#allocation6], 64
        $region68: #{tpu_custom_call.1} parent=55 // pred_fallthru
          _
        // Predicated region
        $region69: #{tpu_custom_call.1} parent=55 // pred_check
          %p381 = pneg %p113
        $region70: #{tpu_custom_call.1} parent=55 // pred_check_branch
          %383 = sbr.rel (%p381) target = $region72
        $region71: #{tpu_custom_call.1} parent=55 // pred_region
          %384 = dma.done [#allocation9], 8192
        $region72: #{tpu_custom_call.1} parent=55 // pred_fallthru
          _
        // Predicated region
        $region73: #{tpu_custom_call.1} parent=55 // pred_check
          %p385 = pneg %p155
        $region74: #{tpu_custom_call.1} parent=55 // pred_check_branch
          %387 = sbr.rel (%p385) target = $region76
        $region75: #{tpu_custom_call.1} parent=55 // pred_region
          %388 = dma.done [#allocation9], 2048
        $region76: #{tpu_custom_call.1} parent=55 // pred_fallthru
          _
        // Predicated region
        $region77: #{tpu_custom_call.1} parent=55 // pred_check
          %p389 = pneg %p197
        $region78: #{tpu_custom_call.1} parent=55 // pred_check_branch
          %391 = sbr.rel (%p389) target = $region80
        $region79: #{tpu_custom_call.1} parent=55 // pred_region
          %392 = dma.done [#allocation12], 1024
        $region80: #{tpu_custom_call.1} parent=55 // pred_fallthru
          _
        %s393 = sand.u32 %s37, 1
        %s394 = scalar_lea.sflag [#allocation3], %s393
        %s395 = sand.u32 %s37, 1
        %s396 = smul.addr %s395, 256
        %s397 = scalar_lea.vmem [#allocation2], %s396
        %p398 = pneg %p50
        %p399 = pneg %p47
        %p400 = pneg %p71
        %p401 = pneg %p68
        %p402 = pneg %p92
        %p403 = pneg %p89
        %p404 = pneg %p113
        %p405 = pneg %p110
        %p406 = pneg %p134
        %p407 = pneg %p131
        %p408 = pneg %p155
        %p409 = pneg %p152
        %p410 = pneg %p176
        %p411 = pneg %p173
        %p412 = pneg %p197
        %p413 = pneg %p194
        %p414 = pneg %p218
        %p415 = pneg %p215
        %p416 = pneg %p244
        %p417 = pneg %p241
        %s418 = sand.u32 %s231, 1
        %s419 = scalar_lea.sflag [#allocation4], %s418
        %s420 = sand.u32 %s231, 1
        %s421 = smul.addr %s420, 256
        %s422 = scalar_lea.vmem [#allocation13], %s421
        %s423 = smul.u32 32, %s29
        %s424 = smul.u32 32, %s29
        %v426 = vld [vmem:[%s368] sm:$0xff]
        %v427 = vld [vmem:[%s368 + $0x8] sm:$0xff]
        %v428 = vld [vmem:[%s368 + $0x10] sm:$0xff]
        %v429 = vld [vmem:[%s368 + $0x18] sm:$0xff]
        %v430 = vld [vmem:[%s368 + $0x20] sm:$0xff]
        %v431 = vld [vmem:[%s368 + $0x28] sm:$0xff]
        %v432 = vld [vmem:[%s368 + $0x30] sm:$0xff]
        %v433 = vld [vmem:[%s368 + $0x38] sm:$0xff]
        %v434 = vld [vmem:[%s368 + $0x40] sm:$0xff]
        %v435 = vld [vmem:[%s368 + $0x48] sm:$0xff]
        %v436 = vld [vmem:[%s368 + $0x50] sm:$0xff]
        %v437 = vld [vmem:[%s368 + $0x58] sm:$0xff]
        %v438 = vld [vmem:[%s368 + $0x60] sm:$0xff]
        %v439 = vld [vmem:[%s368 + $0x68] sm:$0xff]
        %v440 = vld [vmem:[%s368 + $0x70] sm:$0xff]
        %v441 = vld [vmem:[%s368 + $0x78] sm:$0xff]
        %v442 = vld [vmem:[%s368 + $0x80] sm:$0xff]
        %v443 = vld [vmem:[%s368 + $0x88] sm:$0xff]
        %v444 = vld [vmem:[%s368 + $0x90] sm:$0xff]
        %v445 = vld [vmem:[%s368 + $0x98] sm:$0xff]
        %v446 = vld [vmem:[%s368 + $0xa0] sm:$0xff]
        %v447 = vld [vmem:[%s368 + $0xa8] sm:$0xff]
        %v448 = vld [vmem:[%s368 + $0xb0] sm:$0xff]
        %v449 = vld [vmem:[%s368 + $0xb8] sm:$0xff]
        %v450 = vld [vmem:[%s368 + $0xc0] sm:$0xff]
        %v451 = vld [vmem:[%s368 + $0xc8] sm:$0xff]
        %v452 = vld [vmem:[%s368 + $0xd0] sm:$0xff]
        %v453 = vld [vmem:[%s368 + $0xd8] sm:$0xff]
        %v454 = vld [vmem:[%s368 + $0xe0] sm:$0xff]
        %v455 = vld [vmem:[%s368 + $0xe8] sm:$0xff]
        %v456 = vld [vmem:[%s368 + $0xf0] sm:$0xff]
        %v457 = vld [vmem:[%s368 + $0xf8] sm:$0xff]
        %v458 = vld [vmem:[#allocation5] sm:$0xff]
        %v459 = vld [vmem:[#allocation5 + $0x8] sm:$0xff]
        %v460 = vld [vmem:[#allocation5 + $0x10] sm:$0xff]
        %v461 = vld [vmem:[#allocation5 + $0x18] sm:$0xff]
        %v462 = vld [vmem:[#allocation5 + $0x20] sm:$0xff]
        %v463 = vld [vmem:[#allocation5 + $0x28] sm:$0xff]
        %v464 = vld [vmem:[#allocation5 + $0x30] sm:$0xff]
        %v465 = vld [vmem:[#allocation5 + $0x38] sm:$0xff]
        %v466 = vld [vmem:[#allocation5 + $0x40] sm:$0xff]
        %v467 = vld [vmem:[#allocation5 + $0x48] sm:$0xff]
        %v468 = vld [vmem:[#allocation5 + $0x50] sm:$0xff]
        %v469 = vld [vmem:[#allocation5 + $0x58] sm:$0xff]
        %v470 = vld [vmem:[#allocation5 + $0x60] sm:$0xff]
        %v471 = vld [vmem:[#allocation5 + $0x68] sm:$0xff]
        %v472 = vld [vmem:[#allocation5 + $0x70] sm:$0xff]
        %v473 = vld [vmem:[#allocation5 + $0x78] sm:$0xff]
        %v474 = vld [vmem:[#allocation5 + $0x80] sm:$0xff]
        %v475 = vld [vmem:[#allocation5 + $0x88] sm:$0xff]
        %v476 = vld [vmem:[#allocation5 + $0x90] sm:$0xff]
        %v477 = vld [vmem:[#allocation5 + $0x98] sm:$0xff]
        %v478 = vld [vmem:[#allocation5 + $0xa0] sm:$0xff]
        %v479 = vld [vmem:[#allocation5 + $0xa8] sm:$0xff]
        %v480 = vld [vmem:[#allocation5 + $0xb0] sm:$0xff]
        %v481 = vld [vmem:[#allocation5 + $0xb8] sm:$0xff]
        %v482 = vld [vmem:[#allocation5 + $0xc0] sm:$0xff]
        %v483 = vld [vmem:[#allocation5 + $0xc8] sm:$0xff]
        %v484 = vld [vmem:[#allocation5 + $0xd0] sm:$0xff]
        %v485 = vld [vmem:[#allocation5 + $0xd8] sm:$0xff]
        %v486 = vld [vmem:[#allocation5 + $0xe0] sm:$0xff]
        %v487 = vld [vmem:[#allocation5 + $0xe8] sm:$0xff]
        %v488 = vld [vmem:[#allocation5 + $0xf0] sm:$0xff]
        %v489 = vld [vmem:[#allocation5 + $0xf8] sm:$0xff]
        %v490 = vld [vmem:[#allocation5 + $0x100] sm:$0xff]
        %v491 = vld [vmem:[#allocation5 + $0x108] sm:$0xff]
        %v492 = vld [vmem:[#allocation5 + $0x110] sm:$0xff]
        %v493 = vld [vmem:[#allocation5 + $0x118] sm:$0xff]
        %v494 = vld [vmem:[#allocation5 + $0x120] sm:$0xff]
        %v495 = vld [vmem:[#allocation5 + $0x128] sm:$0xff]
        %v496 = vld [vmem:[#allocation5 + $0x130] sm:$0xff]
        %v497 = vld [vmem:[#allocation5 + $0x138] sm:$0xff]
        %v498 = vld [vmem:[#allocation5 + $0x140] sm:$0xff]
        %v499 = vld [vmem:[#allocation5 + $0x148] sm:$0xff]
        %v500 = vld [vmem:[#allocation5 + $0x150] sm:$0xff]
        %v501 = vld [vmem:[#allocation5 + $0x158] sm:$0xff]
        %v502 = vld [vmem:[#allocation5 + $0x160] sm:$0xff]
        %v503 = vld [vmem:[#allocation5 + $0x168] sm:$0xff]
        %v504 = vld [vmem:[#allocation5 + $0x170] sm:$0xff]
        %v505 = vld [vmem:[#allocation5 + $0x178] sm:$0xff]
        %v506 = vld [vmem:[#allocation5 + $0x180] sm:$0xff]
        %v507 = vld [vmem:[#allocation5 + $0x188] sm:$0xff]
        %v508 = vld [vmem:[#allocation5 + $0x190] sm:$0xff]
        %v509 = vld [vmem:[#allocation5 + $0x198] sm:$0xff]
        %v510 = vld [vmem:[#allocation5 + $0x1a0] sm:$0xff]
        %v511 = vld [vmem:[#allocation5 + $0x1a8] sm:$0xff]
        %v512 = vld [vmem:[#allocation5 + $0x1b0] sm:$0xff]
        %v513 = vld [vmem:[#allocation5 + $0x1b8] sm:$0xff]
        %v514 = vld [vmem:[#allocation5 + $0x1c0] sm:$0xff]
        %v515 = vld [vmem:[#allocation5 + $0x1c8] sm:$0xff]
        %v516 = vld [vmem:[#allocation5 + $0x1d0] sm:$0xff]
        %v517 = vld [vmem:[#allocation5 + $0x1d8] sm:$0xff]
        %v518 = vld [vmem:[#allocation5 + $0x1e0] sm:$0xff]
        %v519 = vld [vmem:[#allocation5 + $0x1e8] sm:$0xff]
        %v520 = vld [vmem:[#allocation5 + $0x1f0] sm:$0xff]
        %v521 = vld [vmem:[#allocation5 + $0x1f8] sm:$0xff]
        %v522 = vld [vmem:[#allocation7] sm:$0xf]
        %v524 = vlaneseq
        %v525 = vshrl.u32 %v524, 7
        %v526 = vsub.s32 0, %v525
        %v527 = vrot.slane %v522, %v526
        %v528 = vlaneseq
        %v529 = vshrl.u32 %v528, 7
        %v530 = vsub.s32 1, %v529
        %v531 = vrot.slane %v522, %v530
        %v532 = vlaneseq
        %v533 = vshrl.u32 %v532, 7
        %v534 = vsub.s32 2, %v533
        %v535 = vrot.slane %v522, %v534
        %v536 = vlaneseq
        %v537 = vshrl.u32 %v536, 7
        %v538 = vsub.s32 3, %v537
        %v539 = vrot.slane %v522, %v538
        %v576 = vunpack.c.l.b16 %v426
        %v577 = vunpack.c.h.b16 %v426
        %v578 = vunpack.c.l.b16 %v427
        %v579 = vunpack.c.h.b16 %v427
        %v580 = vunpack.c.l.b16 %v428
        %v581 = vunpack.c.h.b16 %v428
        %v582 = vunpack.c.l.b16 %v429
        %v583 = vunpack.c.h.b16 %v429
        %v584 = vunpack.c.l.b16 %v430
        %v585 = vunpack.c.h.b16 %v430
        %v586 = vunpack.c.l.b16 %v431
        %v587 = vunpack.c.h.b16 %v431
        %v588 = vunpack.c.l.b16 %v432
        %v589 = vunpack.c.h.b16 %v432
        %v590 = vunpack.c.l.b16 %v433
        %v591 = vunpack.c.h.b16 %v433
        %v592 = vunpack.c.l.b16 %v434
        %v593 = vunpack.c.h.b16 %v434
        %v594 = vunpack.c.l.b16 %v435
        %v595 = vunpack.c.h.b16 %v435
        %v596 = vunpack.c.l.b16 %v436
        %v597 = vunpack.c.h.b16 %v436
        %v598 = vunpack.c.l.b16 %v437
        %v599 = vunpack.c.h.b16 %v437
        %v600 = vunpack.c.l.b16 %v438
        %v601 = vunpack.c.h.b16 %v438
        %v602 = vunpack.c.l.b16 %v439
        %v603 = vunpack.c.h.b16 %v439
        %v604 = vunpack.c.l.b16 %v440
        %v605 = vunpack.c.h.b16 %v440
        %v606 = vunpack.c.l.b16 %v441
        %v607 = vunpack.c.h.b16 %v441
        %v608 = vunpack.c.l.b16 %v442
        %v609 = vunpack.c.h.b16 %v442
        %v610 = vunpack.c.l.b16 %v443
        %v611 = vunpack.c.h.b16 %v443
        %v612 = vunpack.c.l.b16 %v444
        %v613 = vunpack.c.h.b16 %v444
        %v614 = vunpack.c.l.b16 %v445
        %v615 = vunpack.c.h.b16 %v445
        %v616 = vunpack.c.l.b16 %v446
        %v617 = vunpack.c.h.b16 %v446
        %v618 = vunpack.c.l.b16 %v447
        %v619 = vunpack.c.h.b16 %v447
        %v620 = vunpack.c.l.b16 %v448
        %v621 = vunpack.c.h.b16 %v448
        %v622 = vunpack.c.l.b16 %v449
        %v623 = vunpack.c.h.b16 %v449
        %v624 = vunpack.c.l.b16 %v450
        %v625 = vunpack.c.h.b16 %v450
        %v626 = vunpack.c.l.b16 %v451
        %v627 = vunpack.c.h.b16 %v451
        %v628 = vunpack.c.l.b16 %v452
        %v629 = vunpack.c.h.b16 %v452
        %v630 = vunpack.c.l.b16 %v453
        %v631 = vunpack.c.h.b16 %v453
        %v632 = vunpack.c.l.b16 %v454
        %v633 = vunpack.c.h.b16 %v454
        %v634 = vunpack.c.l.b16 %v455
        %v635 = vunpack.c.h.b16 %v455
        %v636 = vunpack.c.l.b16 %v456
        %v637 = vunpack.c.h.b16 %v456
        %v638 = vunpack.c.l.b16 %v457
        %v639 = vunpack.c.h.b16 %v457
        %v640 = vpack.c.b16 %v578, %v576
        %v641 = vpack.c.b16 %v579, %v577
        %v642 = vpack.c.b16 %v582, %v580
        %v643 = vpack.c.b16 %v583, %v581
        %v644 = vpack.c.b16 %v586, %v584
        %v645 = vpack.c.b16 %v587, %v585
        %v646 = vpack.c.b16 %v590, %v588
        %v647 = vpack.c.b16 %v591, %v589
        %v648 = vpack.c.b16 %v594, %v592
        %v649 = vpack.c.b16 %v595, %v593
        %v650 = vpack.c.b16 %v598, %v596
        %v651 = vpack.c.b16 %v599, %v597
        %v652 = vpack.c.b16 %v602, %v600
        %v653 = vpack.c.b16 %v603, %v601
        %v654 = vpack.c.b16 %v606, %v604
        %v655 = vpack.c.b16 %v607, %v605
        %v656 = vpack.c.b16 %v610, %v608
        %v657 = vpack.c.b16 %v611, %v609
        %v658 = vpack.c.b16 %v614, %v612
        %v659 = vpack.c.b16 %v615, %v613
        %v660 = vpack.c.b16 %v618, %v616
        %v661 = vpack.c.b16 %v619, %v617
        %v662 = vpack.c.b16 %v622, %v620
        %v663 = vpack.c.b16 %v623, %v621
        %v664 = vpack.c.b16 %v626, %v624
        %v665 = vpack.c.b16 %v627, %v625
        %v666 = vpack.c.b16 %v630, %v628
        %v667 = vpack.c.b16 %v631, %v629
        %v668 = vpack.c.b16 %v634, %v632
        %v669 = vpack.c.b16 %v635, %v633
        %v670 = vpack.c.b16 %v638, %v636
        %v671 = vpack.c.b16 %v639, %v637
        %v768 = vunpack.c.l.b16 %v458
        %v769 = vunpack.c.h.b16 %v458
        %v770 = vunpack.c.l.b16 %v459
        %v771 = vunpack.c.h.b16 %v459
        %v772 = vunpack.c.l.b16 %v460
        %v773 = vunpack.c.h.b16 %v460
        %v774 = vunpack.c.l.b16 %v461
        %v775 = vunpack.c.h.b16 %v461
        %v776 = vunpack.c.l.b16 %v462
        %v777 = vunpack.c.h.b16 %v462
        %v778 = vunpack.c.l.b16 %v463
        %v779 = vunpack.c.h.b16 %v463
        %v780 = vunpack.c.l.b16 %v464
        %v781 = vunpack.c.h.b16 %v464
        %v782 = vunpack.c.l.b16 %v465
        %v783 = vunpack.c.h.b16 %v465
        %v784 = vunpack.c.l.b16 %v466
        %v785 = vunpack.c.h.b16 %v466
        %v786 = vunpack.c.l.b16 %v467
        %v787 = vunpack.c.h.b16 %v467
        %v788 = vunpack.c.l.b16 %v468
        %v789 = vunpack.c.h.b16 %v468
        %v790 = vunpack.c.l.b16 %v469
        %v791 = vunpack.c.h.b16 %v469
        %v792 = vunpack.c.l.b16 %v470
        %v793 = vunpack.c.h.b16 %v470
        %v794 = vunpack.c.l.b16 %v471
        %v795 = vunpack.c.h.b16 %v471
        %v796 = vunpack.c.l.b16 %v472
        %v797 = vunpack.c.h.b16 %v472
        %v798 = vunpack.c.l.b16 %v473
        %v799 = vunpack.c.h.b16 %v473
        %v800 = vunpack.c.l.b16 %v474
        %v801 = vunpack.c.h.b16 %v474
        %v802 = vunpack.c.l.b16 %v475
        %v803 = vunpack.c.h.b16 %v475
        %v804 = vunpack.c.l.b16 %v476
        %v805 = vunpack.c.h.b16 %v476
        %v806 = vunpack.c.l.b16 %v477
        %v807 = vunpack.c.h.b16 %v477
        %v808 = vunpack.c.l.b16 %v478
        %v809 = vunpack.c.h.b16 %v478
        %v810 = vunpack.c.l.b16 %v479
        %v811 = vunpack.c.h.b16 %v479
        %v812 = vunpack.c.l.b16 %v480
        %v813 = vunpack.c.h.b16 %v480
        %v814 = vunpack.c.l.b16 %v481
        %v815 = vunpack.c.h.b16 %v481
        %v816 = vunpack.c.l.b16 %v482
        %v817 = vunpack.c.h.b16 %v482
        %v818 = vunpack.c.l.b16 %v483
        %v819 = vunpack.c.h.b16 %v483
        %v820 = vunpack.c.l.b16 %v484
        %v821 = vunpack.c.h.b16 %v484
        %v822 = vunpack.c.l.b16 %v485
        %v823 = vunpack.c.h.b16 %v485
        %v824 = vunpack.c.l.b16 %v486
        %v825 = vunpack.c.h.b16 %v486
        %v826 = vunpack.c.l.b16 %v487
        %v827 = vunpack.c.h.b16 %v487
        %v828 = vunpack.c.l.b16 %v488
        %v829 = vunpack.c.h.b16 %v488
        %v830 = vunpack.c.l.b16 %v489
        %v831 = vunpack.c.h.b16 %v489
        %v832 = vunpack.c.l.b16 %v490
        %v833 = vunpack.c.h.b16 %v490
        %v834 = vunpack.c.l.b16 %v491
        %v835 = vunpack.c.h.b16 %v491
        %v836 = vunpack.c.l.b16 %v492
        %v837 = vunpack.c.h.b16 %v492
        %v838 = vunpack.c.l.b16 %v493
        %v839 = vunpack.c.h.b16 %v493
        %v840 = vunpack.c.l.b16 %v494
        %v841 = vunpack.c.h.b16 %v494
        %v842 = vunpack.c.l.b16 %v495
        %v843 = vunpack.c.h.b16 %v495
        %v844 = vunpack.c.l.b16 %v496
        %v845 = vunpack.c.h.b16 %v496
        %v846 = vunpack.c.l.b16 %v497
        %v847 = vunpack.c.h.b16 %v497
        %v848 = vunpack.c.l.b16 %v498
        %v849 = vunpack.c.h.b16 %v498
        %v850 = vunpack.c.l.b16 %v499
        %v851 = vunpack.c.h.b16 %v499
        %v852 = vunpack.c.l.b16 %v500
        %v853 = vunpack.c.h.b16 %v500
        %v854 = vunpack.c.l.b16 %v501
        %v855 = vunpack.c.h.b16 %v501
        %v856 = vunpack.c.l.b16 %v502
        %v857 = vunpack.c.h.b16 %v502
        %v858 = vunpack.c.l.b16 %v503
        %v859 = vunpack.c.h.b16 %v503
        %v860 = vunpack.c.l.b16 %v504
        %v861 = vunpack.c.h.b16 %v504
        %v862 = vunpack.c.l.b16 %v505
        %v863 = vunpack.c.h.b16 %v505
        %v864 = vunpack.c.l.b16 %v506
        %v865 = vunpack.c.h.b16 %v506
        %v866 = vunpack.c.l.b16 %v507
        %v867 = vunpack.c.h.b16 %v507
        %v868 = vunpack.c.l.b16 %v508
        %v869 = vunpack.c.h.b16 %v508
        %v870 = vunpack.c.l.b16 %v509
        %v871 = vunpack.c.h.b16 %v509
        %v872 = vunpack.c.l.b16 %v510
        %v873 = vunpack.c.h.b16 %v510
        %v874 = vunpack.c.l.b16 %v511
        %v875 = vunpack.c.h.b16 %v511
        %v876 = vunpack.c.l.b16 %v512
        %v877 = vunpack.c.h.b16 %v512
        %v878 = vunpack.c.l.b16 %v513
        %v879 = vunpack.c.h.b16 %v513
        %v880 = vunpack.c.l.b16 %v514
        %v881 = vunpack.c.h.b16 %v514
        %v882 = vunpack.c.l.b16 %v515
        %v883 = vunpack.c.h.b16 %v515
        %v884 = vunpack.c.l.b16 %v516
        %v885 = vunpack.c.h.b16 %v516
        %v886 = vunpack.c.l.b16 %v517
        %v887 = vunpack.c.h.b16 %v517
        %v888 = vunpack.c.l.b16 %v518
        %v889 = vunpack.c.h.b16 %v518
        %v890 = vunpack.c.l.b16 %v519
        %v891 = vunpack.c.h.b16 %v519
        %v892 = vunpack.c.l.b16 %v520
        %v893 = vunpack.c.h.b16 %v520
        %v894 = vunpack.c.l.b16 %v521
        %v895 = vunpack.c.h.b16 %v521
        %v896 = vpack.c.b16 %v772, %v768
        %v897 = vpack.c.b16 %v773, %v769
        %v898 = vpack.c.b16 %v774, %v770
        %v899 = vpack.c.b16 %v775, %v771
        %v900 = vpack.c.b16 %v780, %v776
        %v901 = vpack.c.b16 %v781, %v777
        %v902 = vpack.c.b16 %v782, %v778
        %v903 = vpack.c.b16 %v783, %v779
        %v904 = vpack.c.b16 %v788, %v784
        %v905 = vpack.c.b16 %v789, %v785
        %v906 = vpack.c.b16 %v790, %v786
        %v907 = vpack.c.b16 %v791, %v787
        %v908 = vpack.c.b16 %v796, %v792
        %v909 = vpack.c.b16 %v797, %v793
        %v910 = vpack.c.b16 %v798, %v794
        %v911 = vpack.c.b16 %v799, %v795
        %v912 = vpack.c.b16 %v804, %v800
        %v913 = vpack.c.b16 %v805, %v801
        %v914 = vpack.c.b16 %v806, %v802
        %v915 = vpack.c.b16 %v807, %v803
        %v916 = vpack.c.b16 %v812, %v808
        %v917 = vpack.c.b16 %v813, %v809
        %v918 = vpack.c.b16 %v814, %v810
        %v919 = vpack.c.b16 %v815, %v811
        %v920 = vpack.c.b16 %v820, %v816
        %v921 = vpack.c.b16 %v821, %v817
        %v922 = vpack.c.b16 %v822, %v818
        %v923 = vpack.c.b16 %v823, %v819
        %v924 = vpack.c.b16 %v828, %v824
        %v925 = vpack.c.b16 %v829, %v825
        %v926 = vpack.c.b16 %v830, %v826
        %v927 = vpack.c.b16 %v831, %v827
        %v928 = vpack.c.b16 %v836, %v832
        %v929 = vpack.c.b16 %v837, %v833
        %v930 = vpack.c.b16 %v838, %v834
        %v931 = vpack.c.b16 %v839, %v835
        %v932 = vpack.c.b16 %v844, %v840
        %v933 = vpack.c.b16 %v845, %v841
        %v934 = vpack.c.b16 %v846, %v842
        %v935 = vpack.c.b16 %v847, %v843
        %v936 = vpack.c.b16 %v852, %v848
        %v937 = vpack.c.b16 %v853, %v849
        %v938 = vpack.c.b16 %v854, %v850
        %v939 = vpack.c.b16 %v855, %v851
        %v940 = vpack.c.b16 %v860, %v856
        %v941 = vpack.c.b16 %v861, %v857
        %v942 = vpack.c.b16 %v862, %v858
        %v943 = vpack.c.b16 %v863, %v859
        %v944 = vpack.c.b16 %v868, %v864
        %v945 = vpack.c.b16 %v869, %v865
        %v946 = vpack.c.b16 %v870, %v866
        %v947 = vpack.c.b16 %v871, %v867
        %v948 = vpack.c.b16 %v876, %v872
        %v949 = vpack.c.b16 %v877, %v873
        %v950 = vpack.c.b16 %v878, %v874
        %v951 = vpack.c.b16 %v879, %v875
        %v952 = vpack.c.b16 %v884, %v880
        %v953 = vpack.c.b16 %v885, %v881
        %v954 = vpack.c.b16 %v886, %v882
        %v955 = vpack.c.b16 %v887, %v883
        %v956 = vpack.c.b16 %v892, %v888
        %v957 = vpack.c.b16 %v893, %v889
        %v958 = vpack.c.b16 %v894, %v890
        %v959 = vpack.c.b16 %v895, %v891
        %1024 = vmatprep.subr.bf16.mxu0 %v925
        %1025 = vmatpush1.bf16.msra.mxu0 %v924
        %1026 = vmatprep.subr.bf16.mxu0 %v921
        %1027 = vmatpush1.bf16.msra.mxu0 %v920
        %1028 = vmatprep.subr.bf16.mxu0 %v917
        %1029 = vmatpush1.bf16.msra.mxu0 %v916
        %1030 = vmatprep.subr.bf16.mxu0 %v913
        %1031 = vmatpush1.bf16.msra.mxu0 %v912
        %1032 = vmatprep.subr.bf16.mxu0 %v909
        %1033 = vmatpush1.bf16.msra.mxu0 %v908
        %1034 = vmatprep.subr.bf16.mxu0 %v905
        %1035 = vmatpush1.bf16.msra.mxu0 %v904
        %1036 = vmatprep.subr.bf16.mxu0 %v901
        %1037 = vmatpush1.bf16.msra.mxu0 %v900
        %1038 = vmatprep.subr.bf16.mxu0 %v897
        %1039 = vmatpush1.bf16.msra.mxu0 %v896
        %1040 = vmatprep.subr.bf16.mxu0 %v957
        %1041 = vmatpush2.bf16.msra.mxu0 %v956
        %1042 = vmatprep.subr.bf16.mxu0 %v953
        %1043 = vmatpush2.bf16.msra.mxu0 %v952
        %1044 = vmatprep.subr.bf16.mxu0 %v949
        %1045 = vmatpush2.bf16.msra.mxu0 %v948
        %1046 = vmatprep.subr.bf16.mxu0 %v945
        %1047 = vmatpush2.bf16.msra.mxu0 %v944
        %1048 = vmatprep.subr.bf16.mxu0 %v941
        %1049 = vmatpush2.bf16.msra.mxu0 %v940
        %1050 = vmatprep.subr.bf16.mxu0 %v937
        %1051 = vmatpush2.bf16.msra.mxu0 %v936
        %1052 = vmatprep.subr.bf16.mxu0 %v933
        %1053 = vmatpush2.bf16.msra.mxu0 %v932
        %1054 = vmatprep.subr.bf16.mxu0 %v929
        %1055 = vmatpush2.bf16.msra.mxu0 %v928
        %1056 = vmatprep.mubr.bf16.mxu0 %v641
        %1057 = vmatmul.mubr.bf16.gmra.mxu0 %v640
        %v1058 = vpop.f32.mrf.mxu0
        %v1059 = vadd.f32 %v527, %v1058
        %v1060 = vpop.f32.mrf.mxu0
        %v1061 = vadd.f32 %v531, %v1060
        %v1062 = vpop.f32.mrf.mxu0
        %v1063 = vadd.f32 %v527, %v1062
        %v1064 = vpop.f32.mrf.mxu0
        %v1065 = vadd.f32 %v531, %v1064
        %1066 = vmatprep.mubr.bf16.mxu0 %v643
        %1067 = vmatmul.mubr.bf16.gmra.mxu0 %v642
        %v1068 = vpop.f32.mrf.mxu0
        %v1069 = vadd.f32 %v527, %v1068
        %v1070 = vpop.f32.mrf.mxu0
        %v1071 = vadd.f32 %v531, %v1070
        %v1072 = vpop.f32.mrf.mxu0
        %v1073 = vadd.f32 %v527, %v1072
        %v1074 = vpop.f32.mrf.mxu0
        %v1075 = vadd.f32 %v531, %v1074
        %1076 = vmatprep.mubr.bf16.mxu0 %v645
        %1077 = vmatmul.mubr.bf16.gmra.mxu0 %v644
        %v1078 = vpop.f32.mrf.mxu0
        %v1079 = vadd.f32 %v527, %v1078
        %v1080 = vpop.f32.mrf.mxu0
        %v1081 = vadd.f32 %v531, %v1080
        %v1082 = vpop.f32.mrf.mxu0
        %v1083 = vadd.f32 %v527, %v1082
        %v1084 = vpop.f32.mrf.mxu0
        %v1085 = vadd.f32 %v531, %v1084
        %1086 = vmatprep.mubr.bf16.mxu0 %v647
        %1087 = vmatmul.mubr.bf16.gmra.mxu0 %v646
        %v1088 = vpop.f32.mrf.mxu0
        %v1089 = vadd.f32 %v527, %v1088
        %v1090 = vpop.f32.mrf.mxu0
        %v1091 = vadd.f32 %v531, %v1090
        %v1092 = vpop.f32.mrf.mxu0
        %v1093 = vadd.f32 %v527, %v1092
        %v1094 = vpop.f32.mrf.mxu0
        %v1095 = vadd.f32 %v531, %v1094
        %1096 = vmatprep.mubr.bf16.mxu0 %v649
        %1097 = vmatmul.mubr.bf16.gmra.mxu0 %v648
        %v1098 = vpop.f32.mrf.mxu0
        %v1099 = vadd.f32 %v527, %v1098
        %v1100 = vpop.f32.mrf.mxu0
        %v1101 = vadd.f32 %v531, %v1100
        %v1102 = vpop.f32.mrf.mxu0
        %v1103 = vadd.f32 %v527, %v1102
        %v1104 = vpop.f32.mrf.mxu0
        %v1105 = vadd.f32 %v531, %v1104
        %1106 = vmatprep.mubr.bf16.mxu0 %v651
        %1107 = vmatmul.mubr.bf16.gmra.mxu0 %v650
        %v1108 = vpop.f32.mrf.mxu0
        %v1109 = vadd.f32 %v527, %v1108
        %v1110 = vpop.f32.mrf.mxu0
        %v1111 = vadd.f32 %v531, %v1110
        %v1112 = vpop.f32.mrf.mxu0
        %v1113 = vadd.f32 %v527, %v1112
        %v1114 = vpop.f32.mrf.mxu0
        %v1115 = vadd.f32 %v531, %v1114
        %1116 = vmatprep.mubr.bf16.mxu0 %v653
        %1117 = vmatmul.mubr.bf16.gmra.mxu0 %v652
        %v1118 = vpop.f32.mrf.mxu0
        %v1119 = vadd.f32 %v527, %v1118
        %v1120 = vpop.f32.mrf.mxu0
        %v1121 = vadd.f32 %v531, %v1120
        %v1122 = vpop.f32.mrf.mxu0
        %v1123 = vadd.f32 %v527, %v1122
        %v1124 = vpop.f32.mrf.mxu0
        %v1125 = vadd.f32 %v531, %v1124
        %1126 = vmatprep.mubr.bf16.mxu0 %v655
        %1127 = vmatmul.mubr.bf16.gmra.mxu0 %v654
        %v1128 = vpop.f32.mrf.mxu0
        %v1129 = vadd.f32 %v527, %v1128
        %v1130 = vpop.f32.mrf.mxu0
        %v1131 = vadd.f32 %v531, %v1130
        %v1132 = vpop.f32.mrf.mxu0
        %v1133 = vadd.f32 %v527, %v1132
        %v1134 = vpop.f32.mrf.mxu0
        %v1135 = vadd.f32 %v531, %v1134
        %1136 = vmatprep.mubr.bf16.mxu0 %v657
        %1137 = vmatmul.mubr.bf16.gmra.mxu0 %v656
        %v1138 = vpop.f32.mrf.mxu0
        %v1139 = vadd.f32 %v527, %v1138
        %v1140 = vpop.f32.mrf.mxu0
        %v1141 = vadd.f32 %v531, %v1140
        %v1142 = vpop.f32.mrf.mxu0
        %v1143 = vadd.f32 %v527, %v1142
        %v1144 = vpop.f32.mrf.mxu0
        %v1145 = vadd.f32 %v531, %v1144
        %1146 = vmatprep.mubr.bf16.mxu0 %v659
        %1147 = vmatmul.mubr.bf16.gmra.mxu0 %v658
        %v1148 = vpop.f32.mrf.mxu0
        %v1149 = vadd.f32 %v527, %v1148
        %v1150 = vpop.f32.mrf.mxu0
        %v1151 = vadd.f32 %v531, %v1150
        %v1152 = vpop.f32.mrf.mxu0
        %v1153 = vadd.f32 %v527, %v1152
        %v1154 = vpop.f32.mrf.mxu0
        %v1155 = vadd.f32 %v531, %v1154
        %1156 = vmatprep.mubr.bf16.mxu0 %v661
        %1157 = vmatmul.mubr.bf16.gmra.mxu0 %v660
        %v1158 = vpop.f32.mrf.mxu0
        %v1159 = vadd.f32 %v527, %v1158
        %v1160 = vpop.f32.mrf.mxu0
        %v1161 = vadd.f32 %v531, %v1160
        %v1162 = vpop.f32.mrf.mxu0
        %v1163 = vadd.f32 %v527, %v1162
        %v1164 = vpop.f32.mrf.mxu0
        %v1165 = vadd.f32 %v531, %v1164
        %1166 = vmatprep.mubr.bf16.mxu0 %v663
        %1167 = vmatmul.mubr.bf16.gmra.mxu0 %v662
        %v1168 = vpop.f32.mrf.mxu0
        %v1169 = vadd.f32 %v527, %v1168
        %v1170 = vpop.f32.mrf.mxu0
        %v1171 = vadd.f32 %v531, %v1170
        %v1172 = vpop.f32.mrf.mxu0
        %v1173 = vadd.f32 %v527, %v1172
        %v1174 = vpop.f32.mrf.mxu0
        %v1175 = vadd.f32 %v531, %v1174
        %1176 = vmatprep.mubr.bf16.mxu0 %v665
        %1177 = vmatmul.mubr.bf16.gmra.mxu0 %v664
        %v1178 = vpop.f32.mrf.mxu0
        %v1179 = vadd.f32 %v527, %v1178
        %v1180 = vpop.f32.mrf.mxu0
        %v1181 = vadd.f32 %v531, %v1180
        %v1182 = vpop.f32.mrf.mxu0
        %v1183 = vadd.f32 %v527, %v1182
        %v1184 = vpop.f32.mrf.mxu0
        %v1185 = vadd.f32 %v531, %v1184
        %1186 = vmatprep.mubr.bf16.mxu0 %v667
        %1187 = vmatmul.mubr.bf16.gmra.mxu0 %v666
        %v1188 = vpop.f32.mrf.mxu0
        %v1189 = vadd.f32 %v527, %v1188
        %v1190 = vpop.f32.mrf.mxu0
        %v1191 = vadd.f32 %v531, %v1190
        %v1192 = vpop.f32.mrf.mxu0
        %v1193 = vadd.f32 %v527, %v1192
        %v1194 = vpop.f32.mrf.mxu0
        %v1195 = vadd.f32 %v531, %v1194
        %1196 = vmatprep.mubr.bf16.mxu0 %v669
        %1197 = vmatmul.mubr.bf16.gmra.mxu0 %v668
        %v1198 = vpop.f32.mrf.mxu0
        %v1199 = vadd.f32 %v527, %v1198
        %v1200 = vpop.f32.mrf.mxu0
        %v1201 = vadd.f32 %v531, %v1200
        %v1202 = vpop.f32.mrf.mxu0
        %v1203 = vadd.f32 %v527, %v1202
        %v1204 = vpop.f32.mrf.mxu0
        %v1205 = vadd.f32 %v531, %v1204
        %1206 = vmatprep.mubr.bf16.mxu0 %v671
        %1207 = vmatmul.mubr.bf16.gmra.mxu0 %v670
        %v1208 = vpop.f32.mrf.mxu0
        %v1209 = vadd.f32 %v527, %v1208
        %v1210 = vpop.f32.mrf.mxu0
        %v1211 = vadd.f32 %v531, %v1210
        %v1212 = vpop.f32.mrf.mxu0
        %v1213 = vadd.f32 %v527, %v1212
        %v1214 = vpop.f32.mrf.mxu0
        %v1215 = vadd.f32 %v531, %v1214
        %1216 = vdwg.mxu0
        %1217 = vmatprep.subr.bf16.mxu0 %v927
        %1218 = vmatpush1.bf16.msra.mxu0 %v926
        %1219 = vmatprep.subr.bf16.mxu0 %v923
        %1220 = vmatpush1.bf16.msra.mxu0 %v922
        %1221 = vmatprep.subr.bf16.mxu0 %v919
        %1222 = vmatpush1.bf16.msra.mxu0 %v918
        %1223 = vmatprep.subr.bf16.mxu0 %v915
        %1224 = vmatpush1.bf16.msra.mxu0 %v914
        %1225 = vmatprep.subr.bf16.mxu0 %v911
        %1226 = vmatpush1.bf16.msra.mxu0 %v910
        %1227 = vmatprep.subr.bf16.mxu0 %v907
        %1228 = vmatpush1.bf16.msra.mxu0 %v906
        %1229 = vmatprep.subr.bf16.mxu0 %v903
        %1230 = vmatpush1.bf16.msra.mxu0 %v902
        %1231 = vmatprep.subr.bf16.mxu0 %v899
        %1232 = vmatpush1.bf16.msra.mxu0 %v898
        %1233 = vmatprep.subr.bf16.mxu0 %v959
        %1234 = vmatpush2.bf16.msra.mxu0 %v958
        %1235 = vmatprep.subr.bf16.mxu0 %v955
        %1236 = vmatpush2.bf16.msra.mxu0 %v954
        %1237 = vmatprep.subr.bf16.mxu0 %v951
        %1238 = vmatpush2.bf16.msra.mxu0 %v950
        %1239 = vmatprep.subr.bf16.mxu0 %v947
        %1240 = vmatpush2.bf16.msra.mxu0 %v946
        %1241 = vmatprep.subr.bf16.mxu0 %v943
        %1242 = vmatpush2.bf16.msra.mxu0 %v942
        %1243 = vmatprep.subr.bf16.mxu0 %v939
        %1244 = vmatpush2.bf16.msra.mxu0 %v938
        %1245 = vmatprep.subr.bf16.mxu0 %v935
        %1246 = vmatpush2.bf16.msra.mxu0 %v934
        %1247 = vmatprep.subr.bf16.mxu0 %v931
        %1248 = vmatpush2.bf16.msra.mxu0 %v930
        %1249 = vmatprep.mubr.bf16.mxu0 %v641
        %1250 = vmatmul.mubr.bf16.gmra.mxu0 %v640
        %v1251 = vpop.f32.mrf.mxu0
        %v1252 = vadd.f32 %v535, %v1251
        %v1253 = vpop.f32.mrf.mxu0
        %v1254 = vadd.f32 %v539, %v1253
        %v1255 = vpop.f32.mrf.mxu0
        %v1256 = vadd.f32 %v535, %v1255
        %v1257 = vpop.f32.mrf.mxu0
        %v1258 = vadd.f32 %v539, %v1257
        %1259 = vmatprep.mubr.bf16.mxu0 %v643
        %1260 = vmatmul.mubr.bf16.gmra.mxu0 %v642
        %v1261 = vpop.f32.mrf.mxu0
        %v1262 = vadd.f32 %v535, %v1261
        %v1263 = vpop.f32.mrf.mxu0
        %v1264 = vadd.f32 %v539, %v1263
        %v1265 = vpop.f32.mrf.mxu0
        %v1266 = vadd.f32 %v535, %v1265
        %v1267 = vpop.f32.mrf.mxu0
        %v1268 = vadd.f32 %v539, %v1267
        %1269 = vmatprep.mubr.bf16.mxu0 %v645
        %1270 = vmatmul.mubr.bf16.gmra.mxu0 %v644
        %v1271 = vpop.f32.mrf.mxu0
        %v1272 = vadd.f32 %v535, %v1271
        %v1273 = vpop.f32.mrf.mxu0
        %v1274 = vadd.f32 %v539, %v1273
        %v1275 = vpop.f32.mrf.mxu0
        %v1276 = vadd.f32 %v535, %v1275
        %v1277 = vpop.f32.mrf.mxu0
        %v1278 = vadd.f32 %v539, %v1277
        %1279 = vmatprep.mubr.bf16.mxu0 %v647
        %1280 = vmatmul.mubr.bf16.gmra.mxu0 %v646
        %v1281 = vpop.f32.mrf.mxu0
        %v1282 = vadd.f32 %v535, %v1281
        %v1283 = vpop.f32.mrf.mxu0
        %v1284 = vadd.f32 %v539, %v1283
        %v1285 = vpop.f32.mrf.mxu0
        %v1286 = vadd.f32 %v535, %v1285
        %v1287 = vpop.f32.mrf.mxu0
        %v1288 = vadd.f32 %v539, %v1287
        %1289 = vmatprep.mubr.bf16.mxu0 %v649
        %1290 = vmatmul.mubr.bf16.gmra.mxu0 %v648
        %v1291 = vpop.f32.mrf.mxu0
        %v1292 = vadd.f32 %v535, %v1291
        %v1293 = vpop.f32.mrf.mxu0
        %v1294 = vadd.f32 %v539, %v1293
        %v1295 = vpop.f32.mrf.mxu0
        %v1296 = vadd.f32 %v535, %v1295
        %v1297 = vpop.f32.mrf.mxu0
        %v1298 = vadd.f32 %v539, %v1297
        %1299 = vmatprep.mubr.bf16.mxu0 %v651
        %1300 = vmatmul.mubr.bf16.gmra.mxu0 %v650
        %v1301 = vpop.f32.mrf.mxu0
        %v1302 = vadd.f32 %v535, %v1301
        %v1303 = vpop.f32.mrf.mxu0
        %v1304 = vadd.f32 %v539, %v1303
        %v1305 = vpop.f32.mrf.mxu0
        %v1306 = vadd.f32 %v535, %v1305
        %v1307 = vpop.f32.mrf.mxu0
        %v1308 = vadd.f32 %v539, %v1307
        %1309 = vmatprep.mubr.bf16.mxu0 %v653
        %1310 = vmatmul.mubr.bf16.gmra.mxu0 %v652
        %v1311 = vpop.f32.mrf.mxu0
        %v1312 = vadd.f32 %v535, %v1311
        %v1313 = vpop.f32.mrf.mxu0
        %v1314 = vadd.f32 %v539, %v1313
        %v1315 = vpop.f32.mrf.mxu0
        %v1316 = vadd.f32 %v535, %v1315
        %v1317 = vpop.f32.mrf.mxu0
        %v1318 = vadd.f32 %v539, %v1317
        %1319 = vmatprep.mubr.bf16.mxu0 %v655
        %1320 = vmatmul.mubr.bf16.gmra.mxu0 %v654
        %v1321 = vpop.f32.mrf.mxu0
        %v1322 = vadd.f32 %v535, %v1321
        %v1323 = vpop.f32.mrf.mxu0
        %v1324 = vadd.f32 %v539, %v1323
        %v1325 = vpop.f32.mrf.mxu0
        %v1326 = vadd.f32 %v535, %v1325
        %v1327 = vpop.f32.mrf.mxu0
        %v1328 = vadd.f32 %v539, %v1327
        %1329 = vmatprep.mubr.bf16.mxu0 %v657
        %1330 = vmatmul.mubr.bf16.gmra.mxu0 %v656
        %v1331 = vpop.f32.mrf.mxu0
        %v1332 = vadd.f32 %v535, %v1331
        %v1333 = vpop.f32.mrf.mxu0
        %v1334 = vadd.f32 %v539, %v1333
        %v1335 = vpop.f32.mrf.mxu0
        %v1336 = vadd.f32 %v535, %v1335
        %v1337 = vpop.f32.mrf.mxu0
        %v1338 = vadd.f32 %v539, %v1337
        %1339 = vmatprep.mubr.bf16.mxu0 %v659
        %1340 = vmatmul.mubr.bf16.gmra.mxu0 %v658
        %v1341 = vpop.f32.mrf.mxu0
        %v1342 = vadd.f32 %v535, %v1341
        %v1343 = vpop.f32.mrf.mxu0
        %v1344 = vadd.f32 %v539, %v1343
        %v1345 = vpop.f32.mrf.mxu0
        %v1346 = vadd.f32 %v535, %v1345
        %v1347 = vpop.f32.mrf.mxu0
        %v1348 = vadd.f32 %v539, %v1347
        %1349 = vmatprep.mubr.bf16.mxu0 %v661
        %1350 = vmatmul.mubr.bf16.gmra.mxu0 %v660
        %v1351 = vpop.f32.mrf.mxu0
        %v1352 = vadd.f32 %v535, %v1351
        %v1353 = vpop.f32.mrf.mxu0
        %v1354 = vadd.f32 %v539, %v1353
        %v1355 = vpop.f32.mrf.mxu0
        %v1356 = vadd.f32 %v535, %v1355
        %v1357 = vpop.f32.mrf.mxu0
        %v1358 = vadd.f32 %v539, %v1357
        %1359 = vmatprep.mubr.bf16.mxu0 %v663
        %1360 = vmatmul.mubr.bf16.gmra.mxu0 %v662
        %v1361 = vpop.f32.mrf.mxu0
        %v1362 = vadd.f32 %v535, %v1361
        %v1363 = vpop.f32.mrf.mxu0
        %v1364 = vadd.f32 %v539, %v1363
        %v1365 = vpop.f32.mrf.mxu0
        %v1366 = vadd.f32 %v535, %v1365
        %v1367 = vpop.f32.mrf.mxu0
        %v1368 = vadd.f32 %v539, %v1367
        %1369 = vmatprep.mubr.bf16.mxu0 %v665
        %1370 = vmatmul.mubr.bf16.gmra.mxu0 %v664
        %v1371 = vpop.f32.mrf.mxu0
        %v1372 = vadd.f32 %v535, %v1371
        %v1373 = vpop.f32.mrf.mxu0
        %v1374 = vadd.f32 %v539, %v1373
        %v1375 = vpop.f32.mrf.mxu0
        %v1376 = vadd.f32 %v535, %v1375
        %v1377 = vpop.f32.mrf.mxu0
        %v1378 = vadd.f32 %v539, %v1377
        %1379 = vmatprep.mubr.bf16.mxu0 %v667
        %1380 = vmatmul.mubr.bf16.gmra.mxu0 %v666
        %v1381 = vpop.f32.mrf.mxu0
        %v1382 = vadd.f32 %v535, %v1381
        %v1383 = vpop.f32.mrf.mxu0
        %v1384 = vadd.f32 %v539, %v1383
        %v1385 = vpop.f32.mrf.mxu0
        %v1386 = vadd.f32 %v535, %v1385
        %v1387 = vpop.f32.mrf.mxu0
        %v1388 = vadd.f32 %v539, %v1387
        %1389 = vmatprep.mubr.bf16.mxu0 %v669
        %1390 = vmatmul.mubr.bf16.gmra.mxu0 %v668
        %v1391 = vpop.f32.mrf.mxu0
        %v1392 = vadd.f32 %v535, %v1391
        %v1393 = vpop.f32.mrf.mxu0
        %v1394 = vadd.f32 %v539, %v1393
        %v1395 = vpop.f32.mrf.mxu0
        %v1396 = vadd.f32 %v535, %v1395
        %v1397 = vpop.f32.mrf.mxu0
        %v1398 = vadd.f32 %v539, %v1397
        %1399 = vmatprep.mubr.bf16.mxu0 %v671
        %1400 = vmatmul.mubr.bf16.gmra.mxu0 %v670
        %v1401 = vpop.f32.mrf.mxu0
        %v1402 = vadd.f32 %v535, %v1401
        %v1403 = vpop.f32.mrf.mxu0
        %v1404 = vadd.f32 %v539, %v1403
        %v1405 = vpop.f32.mrf.mxu0
        %v1406 = vadd.f32 %v535, %v1405
        %v1407 = vpop.f32.mrf.mxu0
        %v1408 = vadd.f32 %v539, %v1407
        %1409 = vdwg.mxu0
        %vm1410 = vcmp.gt.f32.partialorder %v1059, 0.0
        %vm1411 = vcmp.gt.f32.partialorder %v1061, 0.0
        %vm1412 = vcmp.gt.f32.partialorder %v1252, 0.0
        %vm1413 = vcmp.gt.f32.partialorder %v1254, 0.0
        %vm1414 = vcmp.gt.f32.partialorder %v1063, 0.0
        %vm1415 = vcmp.gt.f32.partialorder %v1065, 0.0
        %vm1416 = vcmp.gt.f32.partialorder %v1256, 0.0
        %vm1417 = vcmp.gt.f32.partialorder %v1258, 0.0
        %vm1418 = vcmp.gt.f32.partialorder %v1069, 0.0
        %vm1419 = vcmp.gt.f32.partialorder %v1071, 0.0
        %vm1420 = vcmp.gt.f32.partialorder %v1262, 0.0
        %vm1421 = vcmp.gt.f32.partialorder %v1264, 0.0
        %vm1422 = vcmp.gt.f32.partialorder %v1073, 0.0
        %vm1423 = vcmp.gt.f32.partialorder %v1075, 0.0
        %vm1424 = vcmp.gt.f32.partialorder %v1266, 0.0
        %vm1425 = vcmp.gt.f32.partialorder %v1268, 0.0
        %vm1426 = vcmp.gt.f32.partialorder %v1079, 0.0
        %vm1427 = vcmp.gt.f32.partialorder %v1081, 0.0
        %vm1428 = vcmp.gt.f32.partialorder %v1272, 0.0
        %vm1429 = vcmp.gt.f32.partialorder %v1274, 0.0
        %vm1430 = vcmp.gt.f32.partialorder %v1083, 0.0
        %vm1431 = vcmp.gt.f32.partialorder %v1085, 0.0
        %vm1432 = vcmp.gt.f32.partialorder %v1276, 0.0
        %vm1433 = vcmp.gt.f32.partialorder %v1278, 0.0
        %vm1434 = vcmp.gt.f32.partialorder %v1089, 0.0
        %vm1435 = vcmp.gt.f32.partialorder %v1091, 0.0
        %vm1436 = vcmp.gt.f32.partialorder %v1282, 0.0
        %vm1437 = vcmp.gt.f32.partialorder %v1284, 0.0
        %vm1438 = vcmp.gt.f32.partialorder %v1093, 0.0
        %vm1439 = vcmp.gt.f32.partialorder %v1095, 0.0
        %vm1440 = vcmp.gt.f32.partialorder %v1286, 0.0
        %vm1441 = vcmp.gt.f32.partialorder %v1288, 0.0
        %vm1442 = vcmp.gt.f32.partialorder %v1099, 0.0
        %vm1443 = vcmp.gt.f32.partialorder %v1101, 0.0
        %vm1444 = vcmp.gt.f32.partialorder %v1292, 0.0
        %vm1445 = vcmp.gt.f32.partialorder %v1294, 0.0
        %vm1446 = vcmp.gt.f32.partialorder %v1103, 0.0
        %vm1447 = vcmp.gt.f32.partialorder %v1105, 0.0
        %vm1448 = vcmp.gt.f32.partialorder %v1296, 0.0
        %vm1449 = vcmp.gt.f32.partialorder %v1298, 0.0
        %vm1450 = vcmp.gt.f32.partialorder %v1109, 0.0
        %vm1451 = vcmp.gt.f32.partialorder %v1111, 0.0
        %vm1452 = vcmp.gt.f32.partialorder %v1302, 0.0
        %vm1453 = vcmp.gt.f32.partialorder %v1304, 0.0
        %vm1454 = vcmp.gt.f32.partialorder %v1113, 0.0
        %vm1455 = vcmp.gt.f32.partialorder %v1115, 0.0
        %vm1456 = vcmp.gt.f32.partialorder %v1306, 0.0
        %vm1457 = vcmp.gt.f32.partialorder %v1308, 0.0
        %vm1458 = vcmp.gt.f32.partialorder %v1119, 0.0
        %vm1459 = vcmp.gt.f32.partialorder %v1121, 0.0
        %vm1460 = vcmp.gt.f32.partialorder %v1312, 0.0
        %vm1461 = vcmp.gt.f32.partialorder %v1314, 0.0
        %vm1462 = vcmp.gt.f32.partialorder %v1123, 0.0
        %vm1463 = vcmp.gt.f32.partialorder %v1125, 0.0
        %vm1464 = vcmp.gt.f32.partialorder %v1316, 0.0
        %vm1465 = vcmp.gt.f32.partialorder %v1318, 0.0
        %vm1466 = vcmp.gt.f32.partialorder %v1129, 0.0
        %vm1467 = vcmp.gt.f32.partialorder %v1131, 0.0
        %vm1468 = vcmp.gt.f32.partialorder %v1322, 0.0
        %vm1469 = vcmp.gt.f32.partialorder %v1324, 0.0
        %vm1470 = vcmp.gt.f32.partialorder %v1133, 0.0
        %vm1471 = vcmp.gt.f32.partialorder %v1135, 0.0
        %vm1472 = vcmp.gt.f32.partialorder %v1326, 0.0
        %vm1473 = vcmp.gt.f32.partialorder %v1328, 0.0
        %vm1474 = vcmp.gt.f32.partialorder %v1139, 0.0
        %vm1475 = vcmp.gt.f32.partialorder %v1141, 0.0
        %vm1476 = vcmp.gt.f32.partialorder %v1332, 0.0
        %vm1477 = vcmp.gt.f32.partialorder %v1334, 0.0
        %vm1478 = vcmp.gt.f32.partialorder %v1143, 0.0
        %vm1479 = vcmp.gt.f32.partialorder %v1145, 0.0
        %vm1480 = vcmp.gt.f32.partialorder %v1336, 0.0
        %vm1481 = vcmp.gt.f32.partialorder %v1338, 0.0
        %vm1482 = vcmp.gt.f32.partialorder %v1149, 0.0
        %vm1483 = vcmp.gt.f32.partialorder %v1151, 0.0
        %vm1484 = vcmp.gt.f32.partialorder %v1342, 0.0
        %vm1485 = vcmp.gt.f32.partialorder %v1344, 0.0
        %vm1486 = vcmp.gt.f32.partialorder %v1153, 0.0
        %vm1487 = vcmp.gt.f32.partialorder %v1155, 0.0
        %vm1488 = vcmp.gt.f32.partialorder %v1346, 0.0
        %vm1489 = vcmp.gt.f32.partialorder %v1348, 0.0
        %vm1490 = vcmp.gt.f32.partialorder %v1159, 0.0
        %vm1491 = vcmp.gt.f32.partialorder %v1161, 0.0
        %vm1492 = vcmp.gt.f32.partialorder %v1352, 0.0
        %vm1493 = vcmp.gt.f32.partialorder %v1354, 0.0
        %vm1494 = vcmp.gt.f32.partialorder %v1163, 0.0
        %vm1495 = vcmp.gt.f32.partialorder %v1165, 0.0
        %vm1496 = vcmp.gt.f32.partialorder %v1356, 0.0
        %vm1497 = vcmp.gt.f32.partialorder %v1358, 0.0
        %vm1498 = vcmp.gt.f32.partialorder %v1169, 0.0
        %vm1499 = vcmp.gt.f32.partialorder %v1171, 0.0
        %vm1500 = vcmp.gt.f32.partialorder %v1362, 0.0
        %vm1501 = vcmp.gt.f32.partialorder %v1364, 0.0
        %vm1502 = vcmp.gt.f32.partialorder %v1173, 0.0
        %vm1503 = vcmp.gt.f32.partialorder %v1175, 0.0
        %vm1504 = vcmp.gt.f32.partialorder %v1366, 0.0
        %vm1505 = vcmp.gt.f32.partialorder %v1368, 0.0
        %vm1506 = vcmp.gt.f32.partialorder %v1179, 0.0
        %vm1507 = vcmp.gt.f32.partialorder %v1181, 0.0
        %vm1508 = vcmp.gt.f32.partialorder %v1372, 0.0
        %vm1509 = vcmp.gt.f32.partialorder %v1374, 0.0
        %vm1510 = vcmp.gt.f32.partialorder %v1183, 0.0
        %vm1511 = vcmp.gt.f32.partialorder %v1185, 0.0
        %vm1512 = vcmp.gt.f32.partialorder %v1376, 0.0
        %vm1513 = vcmp.gt.f32.partialorder %v1378, 0.0
        %vm1514 = vcmp.gt.f32.partialorder %v1189, 0.0
        %vm1515 = vcmp.gt.f32.partialorder %v1191, 0.0
        %vm1516 = vcmp.gt.f32.partialorder %v1382, 0.0
        %vm1517 = vcmp.gt.f32.partialorder %v1384, 0.0
        %vm1518 = vcmp.gt.f32.partialorder %v1193, 0.0
        %vm1519 = vcmp.gt.f32.partialorder %v1195, 0.0
        %vm1520 = vcmp.gt.f32.partialorder %v1386, 0.0
        %vm1521 = vcmp.gt.f32.partialorder %v1388, 0.0
        %vm1522 = vcmp.gt.f32.partialorder %v1199, 0.0
        %vm1523 = vcmp.gt.f32.partialorder %v1201, 0.0
        %vm1524 = vcmp.gt.f32.partialorder %v1392, 0.0
        %vm1525 = vcmp.gt.f32.partialorder %v1394, 0.0
        %vm1526 = vcmp.gt.f32.partialorder %v1203, 0.0
        %vm1527 = vcmp.gt.f32.partialorder %v1205, 0.0
        %vm1528 = vcmp.gt.f32.partialorder %v1396, 0.0
        %vm1529 = vcmp.gt.f32.partialorder %v1398, 0.0
        %vm1530 = vcmp.gt.f32.partialorder %v1209, 0.0
        %vm1531 = vcmp.gt.f32.partialorder %v1211, 0.0
        %vm1532 = vcmp.gt.f32.partialorder %v1402, 0.0
        %vm1533 = vcmp.gt.f32.partialorder %v1404, 0.0
        %vm1534 = vcmp.gt.f32.partialorder %v1213, 0.0
        %vm1535 = vcmp.gt.f32.partialorder %v1215, 0.0
        %vm1536 = vcmp.gt.f32.partialorder %v1406, 0.0
        %vm1537 = vcmp.gt.f32.partialorder %v1408, 0.0
        %v1538 = vmul.f32 %v1059, 0.2
        %v1539 = vmul.f32 %v1061, 0.2
        %v1540 = vmul.f32 %v1252, 0.2
        %v1541 = vmul.f32 %v1254, 0.2
        %v1542 = vmul.f32 %v1063, 0.2
        %v1543 = vmul.f32 %v1065, 0.2
        %v1544 = vmul.f32 %v1256, 0.2
        %v1545 = vmul.f32 %v1258, 0.2
        %v1546 = vmul.f32 %v1069, 0.2
        %v1547 = vmul.f32 %v1071, 0.2
        %v1548 = vmul.f32 %v1262, 0.2
        %v1549 = vmul.f32 %v1264, 0.2
        %v1550 = vmul.f32 %v1073, 0.2
        %v1551 = vmul.f32 %v1075, 0.2
        %v1552 = vmul.f32 %v1266, 0.2
        %v1553 = vmul.f32 %v1268, 0.2
        %v1554 = vmul.f32 %v1079, 0.2
        %v1555 = vmul.f32 %v1081, 0.2
        %v1556 = vmul.f32 %v1272, 0.2
        %v1557 = vmul.f32 %v1274, 0.2
        %v1558 = vmul.f32 %v1083, 0.2
        %v1559 = vmul.f32 %v1085, 0.2
        %v1560 = vmul.f32 %v1276, 0.2
        %v1561 = vmul.f32 %v1278, 0.2
        %v1562 = vmul.f32 %v1089, 0.2
        %v1563 = vmul.f32 %v1091, 0.2
        %v1564 = vmul.f32 %v1282, 0.2
        %v1565 = vmul.f32 %v1284, 0.2
        %v1566 = vmul.f32 %v1093, 0.2
        %v1567 = vmul.f32 %v1095, 0.2
        %v1568 = vmul.f32 %v1286, 0.2
        %v1569 = vmul.f32 %v1288, 0.2
        %v1570 = vmul.f32 %v1099, 0.2
        %v1571 = vmul.f32 %v1101, 0.2
        %v1572 = vmul.f32 %v1292, 0.2
        %v1573 = vmul.f32 %v1294, 0.2
        %v1574 = vmul.f32 %v1103, 0.2
        %v1575 = vmul.f32 %v1105, 0.2
        %v1576 = vmul.f32 %v1296, 0.2
        %v1577 = vmul.f32 %v1298, 0.2
        %v1578 = vmul.f32 %v1109, 0.2
        %v1579 = vmul.f32 %v1111, 0.2
        %v1580 = vmul.f32 %v1302, 0.2
        %v1581 = vmul.f32 %v1304, 0.2
        %v1582 = vmul.f32 %v1113, 0.2
        %v1583 = vmul.f32 %v1115, 0.2
        %v1584 = vmul.f32 %v1306, 0.2
        %v1585 = vmul.f32 %v1308, 0.2
        %v1586 = vmul.f32 %v1119, 0.2
        %v1587 = vmul.f32 %v1121, 0.2
        %v1588 = vmul.f32 %v1312, 0.2
        %v1589 = vmul.f32 %v1314, 0.2
        %v1590 = vmul.f32 %v1123, 0.2
        %v1591 = vmul.f32 %v1125, 0.2
        %v1592 = vmul.f32 %v1316, 0.2
        %v1593 = vmul.f32 %v1318, 0.2
        %v1594 = vmul.f32 %v1129, 0.2
        %v1595 = vmul.f32 %v1131, 0.2
        %v1596 = vmul.f32 %v1322, 0.2
        %v1597 = vmul.f32 %v1324, 0.2
        %v1598 = vmul.f32 %v1133, 0.2
        %v1599 = vmul.f32 %v1135, 0.2
        %v1600 = vmul.f32 %v1326, 0.2
        %v1601 = vmul.f32 %v1328, 0.2
        %v1602 = vmul.f32 %v1139, 0.2
        %v1603 = vmul.f32 %v1141, 0.2
        %v1604 = vmul.f32 %v1332, 0.2
        %v1605 = vmul.f32 %v1334, 0.2
        %v1606 = vmul.f32 %v1143, 0.2
        %v1607 = vmul.f32 %v1145, 0.2
        %v1608 = vmul.f32 %v1336, 0.2
        %v1609 = vmul.f32 %v1338, 0.2
        %v1610 = vmul.f32 %v1149, 0.2
        %v1611 = vmul.f32 %v1151, 0.2
        %v1612 = vmul.f32 %v1342, 0.2
        %v1613 = vmul.f32 %v1344, 0.2
        %v1614 = vmul.f32 %v1153, 0.2
        %v1615 = vmul.f32 %v1155, 0.2
        %v1616 = vmul.f32 %v1346, 0.2
        %v1617 = vmul.f32 %v1348, 0.2
        %v1618 = vmul.f32 %v1159, 0.2
        %v1619 = vmul.f32 %v1161, 0.2
        %v1620 = vmul.f32 %v1352, 0.2
        %v1621 = vmul.f32 %v1354, 0.2
        %v1622 = vmul.f32 %v1163, 0.2
        %v1623 = vmul.f32 %v1165, 0.2
        %v1624 = vmul.f32 %v1356, 0.2
        %v1625 = vmul.f32 %v1358, 0.2
        %v1626 = vmul.f32 %v1169, 0.2
        %v1627 = vmul.f32 %v1171, 0.2
        %v1628 = vmul.f32 %v1362, 0.2
        %v1629 = vmul.f32 %v1364, 0.2
        %v1630 = vmul.f32 %v1173, 0.2
        %v1631 = vmul.f32 %v1175, 0.2
        %v1632 = vmul.f32 %v1366, 0.2
        %v1633 = vmul.f32 %v1368, 0.2
        %v1634 = vmul.f32 %v1179, 0.2
        %v1635 = vmul.f32 %v1181, 0.2
        %v1636 = vmul.f32 %v1372, 0.2
        %v1637 = vmul.f32 %v1374, 0.2
        %v1638 = vmul.f32 %v1183, 0.2
        %v1639 = vmul.f32 %v1185, 0.2
        %v1640 = vmul.f32 %v1376, 0.2
        %v1641 = vmul.f32 %v1378, 0.2
        %v1642 = vmul.f32 %v1189, 0.2
        %v1643 = vmul.f32 %v1191, 0.2
        %v1644 = vmul.f32 %v1382, 0.2
        %v1645 = vmul.f32 %v1384, 0.2
        %v1646 = vmul.f32 %v1193, 0.2
        %v1647 = vmul.f32 %v1195, 0.2
        %v1648 = vmul.f32 %v1386, 0.2
        %v1649 = vmul.f32 %v1388, 0.2
        %v1650 = vmul.f32 %v1199, 0.2
        %v1651 = vmul.f32 %v1201, 0.2
        %v1652 = vmul.f32 %v1392, 0.2
        %v1653 = vmul.f32 %v1394, 0.2
        %v1654 = vmul.f32 %v1203, 0.2
        %v1655 = vmul.f32 %v1205, 0.2
        %v1656 = vmul.f32 %v1396, 0.2
        %v1657 = vmul.f32 %v1398, 0.2
        %v1658 = vmul.f32 %v1209, 0.2
        %v1659 = vmul.f32 %v1211, 0.2
        %v1660 = vmul.f32 %v1402, 0.2
        %v1661 = vmul.f32 %v1404, 0.2
        %v1662 = vmul.f32 %v1213, 0.2
        %v1663 = vmul.f32 %v1215, 0.2
        %v1664 = vmul.f32 %v1406, 0.2
        %v1665 = vmul.f32 %v1408, 0.2
        %v1666 = vsel %vm1410, %v1059, %v1538
        %v1667 = vsel %vm1411, %v1061, %v1539
        %v1668 = vsel %vm1412, %v1252, %v1540
        %v1669 = vsel %vm1413, %v1254, %v1541
        %v1670 = vsel %vm1414, %v1063, %v1542
        %v1671 = vsel %vm1415, %v1065, %v1543
        %v1672 = vsel %vm1416, %v1256, %v1544
        %v1673 = vsel %vm1417, %v1258, %v1545
        %v1674 = vsel %vm1418, %v1069, %v1546
        %v1675 = vsel %vm1419, %v1071, %v1547
        %v1676 = vsel %vm1420, %v1262, %v1548
        %v1677 = vsel %vm1421, %v1264, %v1549
        %v1678 = vsel %vm1422, %v1073, %v1550
        %v1679 = vsel %vm1423, %v1075, %v1551
        %v1680 = vsel %vm1424, %v1266, %v1552
        %v1681 = vsel %vm1425, %v1268, %v1553
        %v1682 = vsel %vm1426, %v1079, %v1554
        %v1683 = vsel %vm1427, %v1081, %v1555
        %v1684 = vsel %vm1428, %v1272, %v1556
        %v1685 = vsel %vm1429, %v1274, %v1557
        %v1686 = vsel %vm1430, %v1083, %v1558
        %v1687 = vsel %vm1431, %v1085, %v1559
        %v1688 = vsel %vm1432, %v1276, %v1560
        %v1689 = vsel %vm1433, %v1278, %v1561
        %v1690 = vsel %vm1434, %v1089, %v1562
        %v1691 = vsel %vm1435, %v1091, %v1563
        %v1692 = vsel %vm1436, %v1282, %v1564
        %v1693 = vsel %vm1437, %v1284, %v1565
        %v1694 = vsel %vm1438, %v1093, %v1566
        %v1695 = vsel %vm1439, %v1095, %v1567
        %v1696 = vsel %vm1440, %v1286, %v1568
        %v1697 = vsel %vm1441, %v1288, %v1569
        %v1698 = vsel %vm1442, %v1099, %v1570
        %v1699 = vsel %vm1443, %v1101, %v1571
        %v1700 = vsel %vm1444, %v1292, %v1572
        %v1701 = vsel %vm1445, %v1294, %v1573
        %v1702 = vsel %vm1446, %v1103, %v1574
        %v1703 = vsel %vm1447, %v1105, %v1575
        %v1704 = vsel %vm1448, %v1296, %v1576
        %v1705 = vsel %vm1449, %v1298, %v1577
        %v1706 = vsel %vm1450, %v1109, %v1578
        %v1707 = vsel %vm1451, %v1111, %v1579
        %v1708 = vsel %vm1452, %v1302, %v1580
        %v1709 = vsel %vm1453, %v1304, %v1581
        %v1710 = vsel %vm1454, %v1113, %v1582
        %v1711 = vsel %vm1455, %v1115, %v1583
        %v1712 = vsel %vm1456, %v1306, %v1584
        %v1713 = vsel %vm1457, %v1308, %v1585
        %v1714 = vsel %vm1458, %v1119, %v1586
        %v1715 = vsel %vm1459, %v1121, %v1587
        %v1716 = vsel %vm1460, %v1312, %v1588
        %v1717 = vsel %vm1461, %v1314, %v1589
        %v1718 = vsel %vm1462, %v1123, %v1590
        %v1719 = vsel %vm1463, %v1125, %v1591
        %v1720 = vsel %vm1464, %v1316, %v1592
        %v1721 = vsel %vm1465, %v1318, %v1593
        %v1722 = vsel %vm1466, %v1129, %v1594
        %v1723 = vsel %vm1467, %v1131, %v1595
        %v1724 = vsel %vm1468, %v1322, %v1596
        %v1725 = vsel %vm1469, %v1324, %v1597
        %v1726 = vsel %vm1470, %v1133, %v1598
        %v1727 = vsel %vm1471, %v1135, %v1599
        %v1728 = vsel %vm1472, %v1326, %v1600
        %v1729 = vsel %vm1473, %v1328, %v1601
        %v1730 = vsel %vm1474, %v1139, %v1602
        %v1731 = vsel %vm1475, %v1141, %v1603
        %v1732 = vsel %vm1476, %v1332, %v1604
        %v1733 = vsel %vm1477, %v1334, %v1605
        %v1734 = vsel %vm1478, %v1143, %v1606
        %v1735 = vsel %vm1479, %v1145, %v1607
        %v1736 = vsel %vm1480, %v1336, %v1608
        %v1737 = vsel %vm1481, %v1338, %v1609
        %v1738 = vsel %vm1482, %v1149, %v1610
        %v1739 = vsel %vm1483, %v1151, %v1611
        %v1740 = vsel %vm1484, %v1342, %v1612
        %v1741 = vsel %vm1485, %v1344, %v1613
        %v1742 = vsel %vm1486, %v1153, %v1614
        %v1743 = vsel %vm1487, %v1155, %v1615
        %v1744 = vsel %vm1488, %v1346, %v1616
        %v1745 = vsel %vm1489, %v1348, %v1617
        %v1746 = vsel %vm1490, %v1159, %v1618
        %v1747 = vsel %vm1491, %v1161, %v1619
        %v1748 = vsel %vm1492, %v1352, %v1620
        %v1749 = vsel %vm1493, %v1354, %v1621
        %v1750 = vsel %vm1494, %v1163, %v1622
        %v1751 = vsel %vm1495, %v1165, %v1623
        %v1752 = vsel %vm1496, %v1356, %v1624
        %v1753 = vsel %vm1497, %v1358, %v1625
        %v1754 = vsel %vm1498, %v1169, %v1626
        %v1755 = vsel %vm1499, %v1171, %v1627
        %v1756 = vsel %vm1500, %v1362, %v1628
        %v1757 = vsel %vm1501, %v1364, %v1629
        %v1758 = vsel %vm1502, %v1173, %v1630
        %v1759 = vsel %vm1503, %v1175, %v1631
        %v1760 = vsel %vm1504, %v1366, %v1632
        %v1761 = vsel %vm1505, %v1368, %v1633
        %v1762 = vsel %vm1506, %v1179, %v1634
        %v1763 = vsel %vm1507, %v1181, %v1635
        %v1764 = vsel %vm1508, %v1372, %v1636
        %v1765 = vsel %vm1509, %v1374, %v1637
        %v1766 = vsel %vm1510, %v1183, %v1638
        %v1767 = vsel %vm1511, %v1185, %v1639
        %v1768 = vsel %vm1512, %v1376, %v1640
        %v1769 = vsel %vm1513, %v1378, %v1641
        %v1770 = vsel %vm1514, %v1189, %v1642
        %v1771 = vsel %vm1515, %v1191, %v1643
        %v1772 = vsel %vm1516, %v1382, %v1644
        %v1773 = vsel %vm1517, %v1384, %v1645
        %v1774 = vsel %vm1518, %v1193, %v1646
        %v1775 = vsel %vm1519, %v1195, %v1647
        %v1776 = vsel %vm1520, %v1386, %v1648
        %v1777 = vsel %vm1521, %v1388, %v1649
        %v1778 = vsel %vm1522, %v1199, %v1650
        %v1779 = vsel %vm1523, %v1201, %v1651
        %v1780 = vsel %vm1524, %v1392, %v1652
        %v1781 = vsel %vm1525, %v1394, %v1653
        %v1782 = vsel %vm1526, %v1203, %v1654
        %v1783 = vsel %vm1527, %v1205, %v1655
        %v1784 = vsel %vm1528, %v1396, %v1656
        %v1785 = vsel %vm1529, %v1398, %v1657
        %v1786 = vsel %vm1530, %v1209, %v1658
        %v1787 = vsel %vm1531, %v1211, %v1659
        %v1788 = vsel %vm1532, %v1402, %v1660
        %v1789 = vsel %vm1533, %v1404, %v1661
        %v1790 = vsel %vm1534, %v1213, %v1662
        %v1791 = vsel %vm1535, %v1215, %v1663
        %v1792 = vsel %vm1536, %v1406, %v1664
        %v1793 = vsel %vm1537, %v1408, %v1665
        %v1794 = vpack.c.bf16 %v1670, %v1666
        %v1795 = vpack.c.bf16 %v1671, %v1667
        %v1796 = vpack.c.bf16 %v1672, %v1668
        %v1797 = vpack.c.bf16 %v1673, %v1669
        %v1798 = vpack.c.bf16 %v1678, %v1674
        %v1799 = vpack.c.bf16 %v1679, %v1675
        %v1800 = vpack.c.bf16 %v1680, %v1676
        %v1801 = vpack.c.bf16 %v1681, %v1677
        %v1802 = vpack.c.bf16 %v1686, %v1682
        %v1803 = vpack.c.bf16 %v1687, %v1683
        %v1804 = vpack.c.bf16 %v1688, %v1684
        %v1805 = vpack.c.bf16 %v1689, %v1685
        %v1806 = vpack.c.bf16 %v1694, %v1690
        %v1807 = vpack.c.bf16 %v1695, %v1691
        %v1808 = vpack.c.bf16 %v1696, %v1692
        %v1809 = vpack.c.bf16 %v1697, %v1693
        %v1810 = vpack.c.bf16 %v1702, %v1698
        %v1811 = vpack.c.bf16 %v1703, %v1699
        %v1812 = vpack.c.bf16 %v1704, %v1700
        %v1813 = vpack.c.bf16 %v1705, %v1701
        %v1814 = vpack.c.bf16 %v1710, %v1706
        %v1815 = vpack.c.bf16 %v1711, %v1707
        %v1816 = vpack.c.bf16 %v1712, %v1708
        %v1817 = vpack.c.bf16 %v1713, %v1709
        %v1818 = vpack.c.bf16 %v1718, %v1714
        %v1819 = vpack.c.bf16 %v1719, %v1715
        %v1820 = vpack.c.bf16 %v1720, %v1716
        %v1821 = vpack.c.bf16 %v1721, %v1717
        %v1822 = vpack.c.bf16 %v1726, %v1722
        %v1823 = vpack.c.bf16 %v1727, %v1723
        %v1824 = vpack.c.bf16 %v1728, %v1724
        %v1825 = vpack.c.bf16 %v1729, %v1725
        %v1826 = vpack.c.bf16 %v1734, %v1730
        %v1827 = vpack.c.bf16 %v1735, %v1731
        %v1828 = vpack.c.bf16 %v1736, %v1732
        %v1829 = vpack.c.bf16 %v1737, %v1733
        %v1830 = vpack.c.bf16 %v1742, %v1738
        %v1831 = vpack.c.bf16 %v1743, %v1739
        %v1832 = vpack.c.bf16 %v1744, %v1740
        %v1833 = vpack.c.bf16 %v1745, %v1741
        %v1834 = vpack.c.bf16 %v1750, %v1746
        %v1835 = vpack.c.bf16 %v1751, %v1747
        %v1836 = vpack.c.bf16 %v1752, %v1748
        %v1837 = vpack.c.bf16 %v1753, %v1749
        %v1838 = vpack.c.bf16 %v1758, %v1754
        %v1839 = vpack.c.bf16 %v1759, %v1755
        %v1840 = vpack.c.bf16 %v1760, %v1756
        %v1841 = vpack.c.bf16 %v1761, %v1757
        %v1842 = vpack.c.bf16 %v1766, %v1762
        %v1843 = vpack.c.bf16 %v1767, %v1763
        %v1844 = vpack.c.bf16 %v1768, %v1764
        %v1845 = vpack.c.bf16 %v1769, %v1765
        %v1846 = vpack.c.bf16 %v1774, %v1770
        %v1847 = vpack.c.bf16 %v1775, %v1771
        %v1848 = vpack.c.bf16 %v1776, %v1772
        %v1849 = vpack.c.bf16 %v1777, %v1773
        %v1850 = vpack.c.bf16 %v1782, %v1778
        %v1851 = vpack.c.bf16 %v1783, %v1779
        %v1852 = vpack.c.bf16 %v1784, %v1780
        %v1853 = vpack.c.bf16 %v1785, %v1781
        %v1854 = vpack.c.bf16 %v1790, %v1786
        %v1855 = vpack.c.bf16 %v1791, %v1787
        %v1856 = vpack.c.bf16 %v1792, %v1788
        %v1857 = vpack.c.bf16 %v1793, %v1789
        %v1858 = vld [vmem:[#allocation8] sm:$0xff]
        %v1859 = vld [vmem:[#allocation8 + $0x8] sm:$0xff]
        %v1860 = vld [vmem:[#allocation8 + $0x10] sm:$0xff]
        %v1861 = vld [vmem:[#allocation8 + $0x18] sm:$0xff]
        %v1862 = vld [vmem:[#allocation8 + $0x20] sm:$0xff]
        %v1863 = vld [vmem:[#allocation8 + $0x28] sm:$0xff]
        %v1864 = vld [vmem:[#allocation8 + $0x30] sm:$0xff]
        %v1865 = vld [vmem:[#allocation8 + $0x38] sm:$0xff]
        %v1866 = vld [vmem:[#allocation8 + $0x40] sm:$0xff]
        %v1867 = vld [vmem:[#allocation8 + $0x48] sm:$0xff]
        %v1868 = vld [vmem:[#allocation8 + $0x50] sm:$0xff]
        %v1869 = vld [vmem:[#allocation8 + $0x58] sm:$0xff]
        %v1870 = vld [vmem:[#allocation8 + $0x60] sm:$0xff]
        %v1871 = vld [vmem:[#allocation8 + $0x68] sm:$0xff]
        %v1872 = vld [vmem:[#allocation8 + $0x70] sm:$0xff]
        %v1873 = vld [vmem:[#allocation8 + $0x78] sm:$0xff]
        %v1874 = vld [vmem:[#allocation8 + $0x80] sm:$0xff]
        %v1875 = vld [vmem:[#allocation8 + $0x88] sm:$0xff]
        %v1876 = vld [vmem:[#allocation8 + $0x90] sm:$0xff]
        %v1877 = vld [vmem:[#allocation8 + $0x98] sm:$0xff]
        %v1878 = vld [vmem:[#allocation8 + $0xa0] sm:$0xff]
        %v1879 = vld [vmem:[#allocation8 + $0xa8] sm:$0xff]
        %v1880 = vld [vmem:[#allocation8 + $0xb0] sm:$0xff]
        %v1881 = vld [vmem:[#allocation8 + $0xb8] sm:$0xff]
        %v1882 = vld [vmem:[#allocation8 + $0xc0] sm:$0xff]
        %v1883 = vld [vmem:[#allocation8 + $0xc8] sm:$0xff]
        %v1884 = vld [vmem:[#allocation8 + $0xd0] sm:$0xff]
        %v1885 = vld [vmem:[#allocation8 + $0xd8] sm:$0xff]
        %v1886 = vld [vmem:[#allocation8 + $0xe0] sm:$0xff]
        %v1887 = vld [vmem:[#allocation8 + $0xe8] sm:$0xff]
        %v1888 = vld [vmem:[#allocation8 + $0xf0] sm:$0xff]
        %v1889 = vld [vmem:[#allocation8 + $0xf8] sm:$0xff]
        %v1890 = vld [vmem:[#allocation8 + $0x100] sm:$0xff]
        %v1891 = vld [vmem:[#allocation8 + $0x108] sm:$0xff]
        %v1892 = vld [vmem:[#allocation8 + $0x110] sm:$0xff]
        %v1893 = vld [vmem:[#allocation8 + $0x118] sm:$0xff]
        %v1894 = vld [vmem:[#allocation8 + $0x120] sm:$0xff]
        %v1895 = vld [vmem:[#allocation8 + $0x128] sm:$0xff]
        %v1896 = vld [vmem:[#allocation8 + $0x130] sm:$0xff]
        %v1897 = vld [vmem:[#allocation8 + $0x138] sm:$0xff]
        %v1898 = vld [vmem:[#allocation8 + $0x140] sm:$0xff]
        %v1899 = vld [vmem:[#allocation8 + $0x148] sm:$0xff]
        %v1900 = vld [vmem:[#allocation8 + $0x150] sm:$0xff]
        %v1901 = vld [vmem:[#allocation8 + $0x158] sm:$0xff]
        %v1902 = vld [vmem:[#allocation8 + $0x160] sm:$0xff]
        %v1903 = vld [vmem:[#allocation8 + $0x168] sm:$0xff]
        %v1904 = vld [vmem:[#allocation8 + $0x170] sm:$0xff]
        %v1905 = vld [vmem:[#allocation8 + $0x178] sm:$0xff]
        %v1906 = vld [vmem:[#allocation8 + $0x180] sm:$0xff]
        %v1907 = vld [vmem:[#allocation8 + $0x188] sm:$0xff]
        %v1908 = vld [vmem:[#allocation8 + $0x190] sm:$0xff]
        %v1909 = vld [vmem:[#allocation8 + $0x198] sm:$0xff]
        %v1910 = vld [vmem:[#allocation8 + $0x1a0] sm:$0xff]
        %v1911 = vld [vmem:[#allocation8 + $0x1a8] sm:$0xff]
        %v1912 = vld [vmem:[#allocation8 + $0x1b0] sm:$0xff]
        %v1913 = vld [vmem:[#allocation8 + $0x1b8] sm:$0xff]
        %v1914 = vld [vmem:[#allocation8 + $0x1c0] sm:$0xff]
        %v1915 = vld [vmem:[#allocation8 + $0x1c8] sm:$0xff]
        %v1916 = vld [vmem:[#allocation8 + $0x1d0] sm:$0xff]
        %v1917 = vld [vmem:[#allocation8 + $0x1d8] sm:$0xff]
        %v1918 = vld [vmem:[#allocation8 + $0x1e0] sm:$0xff]
        %v1919 = vld [vmem:[#allocation8 + $0x1e8] sm:$0xff]
        %v1920 = vld [vmem:[#allocation8 + $0x1f0] sm:$0xff]
        %v1921 = vld [vmem:[#allocation8 + $0x1f8] sm:$0xff]
        %v1922 = vld [vmem:[%s4] sm:$0x3]
        %v1924 = vlaneseq
        %v1925 = vshrl.u32 %v1924, 7
        %v1926 = vsub.s32 0, %v1925
        %v1927 = vrot.slane %v1922, %v1926
        %v1928 = vlaneseq
        %v1929 = vshrl.u32 %v1928, 7
        %v1930 = vsub.s32 1, %v1929
        %v1931 = vrot.slane %v1922, %v1930
        %v1998 = vunpack.c.l.b16 %v1858
        %v1999 = vunpack.c.h.b16 %v1858
        %v2000 = vunpack.c.l.b16 %v1859
        %v2001 = vunpack.c.h.b16 %v1859
        %v2002 = vunpack.c.l.b16 %v1860
        %v2003 = vunpack.c.h.b16 %v1860
        %v2004 = vunpack.c.l.b16 %v1861
        %v2005 = vunpack.c.h.b16 %v1861
        %v2006 = vunpack.c.l.b16 %v1862
        %v2007 = vunpack.c.h.b16 %v1862
        %v2008 = vunpack.c.l.b16 %v1863
        %v2009 = vunpack.c.h.b16 %v1863
        %v2010 = vunpack.c.l.b16 %v1864
        %v2011 = vunpack.c.h.b16 %v1864
        %v2012 = vunpack.c.l.b16 %v1865
        %v2013 = vunpack.c.h.b16 %v1865
        %v2014 = vunpack.c.l.b16 %v1866
        %v2015 = vunpack.c.h.b16 %v1866
        %v2016 = vunpack.c.l.b16 %v1867
        %v2017 = vunpack.c.h.b16 %v1867
        %v2018 = vunpack.c.l.b16 %v1868
        %v2019 = vunpack.c.h.b16 %v1868
        %v2020 = vunpack.c.l.b16 %v1869
        %v2021 = vunpack.c.h.b16 %v1869
        %v2022 = vunpack.c.l.b16 %v1870
        %v2023 = vunpack.c.h.b16 %v1870
        %v2024 = vunpack.c.l.b16 %v1871
        %v2025 = vunpack.c.h.b16 %v1871
        %v2026 = vunpack.c.l.b16 %v1872
        %v2027 = vunpack.c.h.b16 %v1872
        %v2028 = vunpack.c.l.b16 %v1873
        %v2029 = vunpack.c.h.b16 %v1873
        %v2030 = vunpack.c.l.b16 %v1874
        %v2031 = vunpack.c.h.b16 %v1874
        %v2032 = vunpack.c.l.b16 %v1875
        %v2033 = vunpack.c.h.b16 %v1875
        %v2034 = vunpack.c.l.b16 %v1876
        %v2035 = vunpack.c.h.b16 %v1876
        %v2036 = vunpack.c.l.b16 %v1877
        %v2037 = vunpack.c.h.b16 %v1877
        %v2038 = vunpack.c.l.b16 %v1878
        %v2039 = vunpack.c.h.b16 %v1878
        %v2040 = vunpack.c.l.b16 %v1879
        %v2041 = vunpack.c.h.b16 %v1879
        %v2042 = vunpack.c.l.b16 %v1880
        %v2043 = vunpack.c.h.b16 %v1880
        %v2044 = vunpack.c.l.b16 %v1881
        %v2045 = vunpack.c.h.b16 %v1881
        %v2046 = vunpack.c.l.b16 %v1882
        %v2047 = vunpack.c.h.b16 %v1882
        %v2048 = vunpack.c.l.b16 %v1883
        %v2049 = vunpack.c.h.b16 %v1883
        %v2050 = vunpack.c.l.b16 %v1884
        %v2051 = vunpack.c.h.b16 %v1884
        %v2052 = vunpack.c.l.b16 %v1885
        %v2053 = vunpack.c.h.b16 %v1885
        %v2054 = vunpack.c.l.b16 %v1886
        %v2055 = vunpack.c.h.b16 %v1886
        %v2056 = vunpack.c.l.b16 %v1887
        %v2057 = vunpack.c.h.b16 %v1887
        %v2058 = vunpack.c.l.b16 %v1888
        %v2059 = vunpack.c.h.b16 %v1888
        %v2060 = vunpack.c.l.b16 %v1889
        %v2061 = vunpack.c.h.b16 %v1889
        %v2062 = vunpack.c.l.b16 %v1890
        %v2063 = vunpack.c.h.b16 %v1890
        %v2064 = vunpack.c.l.b16 %v1891
        %v2065 = vunpack.c.h.b16 %v1891
        %v2066 = vunpack.c.l.b16 %v1892
        %v2067 = vunpack.c.h.b16 %v1892
        %v2068 = vunpack.c.l.b16 %v1893
        %v2069 = vunpack.c.h.b16 %v1893
        %v2070 = vunpack.c.l.b16 %v1894
        %v2071 = vunpack.c.h.b16 %v1894
        %v2072 = vunpack.c.l.b16 %v1895
        %v2073 = vunpack.c.h.b16 %v1895
        %v2074 = vunpack.c.l.b16 %v1896
        %v2075 = vunpack.c.h.b16 %v1896
        %v2076 = vunpack.c.l.b16 %v1897
        %v2077 = vunpack.c.h.b16 %v1897
        %v2078 = vunpack.c.l.b16 %v1898
        %v2079 = vunpack.c.h.b16 %v1898
        %v2080 = vunpack.c.l.b16 %v1899
        %v2081 = vunpack.c.h.b16 %v1899
        %v2082 = vunpack.c.l.b16 %v1900
        %v2083 = vunpack.c.h.b16 %v1900
        %v2084 = vunpack.c.l.b16 %v1901
        %v2085 = vunpack.c.h.b16 %v1901
        %v2086 = vunpack.c.l.b16 %v1902
        %v2087 = vunpack.c.h.b16 %v1902
        %v2088 = vunpack.c.l.b16 %v1903
        %v2089 = vunpack.c.h.b16 %v1903
        %v2090 = vunpack.c.l.b16 %v1904
        %v2091 = vunpack.c.h.b16 %v1904
        %v2092 = vunpack.c.l.b16 %v1905
        %v2093 = vunpack.c.h.b16 %v1905
        %v2094 = vunpack.c.l.b16 %v1906
        %v2095 = vunpack.c.h.b16 %v1906
        %v2096 = vunpack.c.l.b16 %v1907
        %v2097 = vunpack.c.h.b16 %v1907
        %v2098 = vunpack.c.l.b16 %v1908
        %v2099 = vunpack.c.h.b16 %v1908
        %v2100 = vunpack.c.l.b16 %v1909
        %v2101 = vunpack.c.h.b16 %v1909
        %v2102 = vunpack.c.l.b16 %v1910
        %v2103 = vunpack.c.h.b16 %v1910
        %v2104 = vunpack.c.l.b16 %v1911
        %v2105 = vunpack.c.h.b16 %v1911
        %v2106 = vunpack.c.l.b16 %v1912
        %v2107 = vunpack.c.h.b16 %v1912
        %v2108 = vunpack.c.l.b16 %v1913
        %v2109 = vunpack.c.h.b16 %v1913
        %v2110 = vunpack.c.l.b16 %v1914
        %v2111 = vunpack.c.h.b16 %v1914
        %v2112 = vunpack.c.l.b16 %v1915
        %v2113 = vunpack.c.h.b16 %v1915
        %v2114 = vunpack.c.l.b16 %v1916
        %v2115 = vunpack.c.h.b16 %v1916
        %v2116 = vunpack.c.l.b16 %v1917
        %v2117 = vunpack.c.h.b16 %v1917
        %v2118 = vunpack.c.l.b16 %v1918
        %v2119 = vunpack.c.h.b16 %v1918
        %v2120 = vunpack.c.l.b16 %v1919
        %v2121 = vunpack.c.h.b16 %v1919
        %v2122 = vunpack.c.l.b16 %v1920
        %v2123 = vunpack.c.h.b16 %v1920
        %v2124 = vunpack.c.l.b16 %v1921
        %v2125 = vunpack.c.h.b16 %v1921
        %v2126 = vpack.c.b16 %v2000, %v1998
        %v2127 = vpack.c.b16 %v2001, %v1999
        %v2128 = vpack.c.b16 %v2004, %v2002
        %v2129 = vpack.c.b16 %v2005, %v2003
        %v2130 = vpack.c.b16 %v2008, %v2006
        %v2131 = vpack.c.b16 %v2009, %v2007
        %v2132 = vpack.c.b16 %v2012, %v2010
        %v2133 = vpack.c.b16 %v2013, %v2011
        %v2134 = vpack.c.b16 %v2016, %v2014
        %v2135 = vpack.c.b16 %v2017, %v2015
        %v2136 = vpack.c.b16 %v2020, %v2018
        %v2137 = vpack.c.b16 %v2021, %v2019
        %v2138 = vpack.c.b16 %v2024, %v2022
        %v2139 = vpack.c.b16 %v2025, %v2023
        %v2140 = vpack.c.b16 %v2028, %v2026
        %v2141 = vpack.c.b16 %v2029, %v2027
        %v2142 = vpack.c.b16 %v2032, %v2030
        %v2143 = vpack.c.b16 %v2033, %v2031
        %v2144 = vpack.c.b16 %v2036, %v2034
        %v2145 = vpack.c.b16 %v2037, %v2035
        %v2146 = vpack.c.b16 %v2040, %v2038
        %v2147 = vpack.c.b16 %v2041, %v2039
        %v2148 = vpack.c.b16 %v2044, %v2042
        %v2149 = vpack.c.b16 %v2045, %v2043
        %v2150 = vpack.c.b16 %v2048, %v2046
        %v2151 = vpack.c.b16 %v2049, %v2047
        %v2152 = vpack.c.b16 %v2052, %v2050
        %v2153 = vpack.c.b16 %v2053, %v2051
        %v2154 = vpack.c.b16 %v2056, %v2054
        %v2155 = vpack.c.b16 %v2057, %v2055
        %v2156 = vpack.c.b16 %v2060, %v2058
        %v2157 = vpack.c.b16 %v2061, %v2059
        %v2158 = vpack.c.b16 %v2064, %v2062
        %v2159 = vpack.c.b16 %v2065, %v2063
        %v2160 = vpack.c.b16 %v2068, %v2066
        %v2161 = vpack.c.b16 %v2069, %v2067
        %v2162 = vpack.c.b16 %v2072, %v2070
        %v2163 = vpack.c.b16 %v2073, %v2071
        %v2164 = vpack.c.b16 %v2076, %v2074
        %v2165 = vpack.c.b16 %v2077, %v2075
        %v2166 = vpack.c.b16 %v2080, %v2078
        %v2167 = vpack.c.b16 %v2081, %v2079
        %v2168 = vpack.c.b16 %v2084, %v2082
        %v2169 = vpack.c.b16 %v2085, %v2083
        %v2170 = vpack.c.b16 %v2088, %v2086
        %v2171 = vpack.c.b16 %v2089, %v2087
        %v2172 = vpack.c.b16 %v2092, %v2090
        %v2173 = vpack.c.b16 %v2093, %v2091
        %v2174 = vpack.c.b16 %v2096, %v2094
        %v2175 = vpack.c.b16 %v2097, %v2095
        %v2176 = vpack.c.b16 %v2100, %v2098
        %v2177 = vpack.c.b16 %v2101, %v2099
        %v2178 = vpack.c.b16 %v2104, %v2102
        %v2179 = vpack.c.b16 %v2105, %v2103
        %v2180 = vpack.c.b16 %v2108, %v2106
        %v2181 = vpack.c.b16 %v2109, %v2107
        %v2182 = vpack.c.b16 %v2112, %v2110
        %v2183 = vpack.c.b16 %v2113, %v2111
        %v2184 = vpack.c.b16 %v2116, %v2114
        %v2185 = vpack.c.b16 %v2117, %v2115
        %v2186 = vpack.c.b16 %v2120, %v2118
        %v2187 = vpack.c.b16 %v2121, %v2119
        %v2188 = vpack.c.b16 %v2124, %v2122
        %v2189 = vpack.c.b16 %v2125, %v2123
        %2254 = vmatprep.subr.bf16.mxu0 %v2141
        %2255 = vmatpush1.bf16.msra.mxu0 %v2140
        %2256 = vmatprep.subr.bf16.mxu0 %v2139
        %2257 = vmatpush1.bf16.msra.mxu0 %v2138
        %2258 = vmatprep.subr.bf16.mxu0 %v2137
        %2259 = vmatpush1.bf16.msra.mxu0 %v2136
        %2260 = vmatprep.subr.bf16.mxu0 %v2135
        %2261 = vmatpush1.bf16.msra.mxu0 %v2134
        %2262 = vmatprep.subr.bf16.mxu0 %v2133
        %2263 = vmatpush1.bf16.msra.mxu0 %v2132
        %2264 = vmatprep.subr.bf16.mxu0 %v2131
        %2265 = vmatpush1.bf16.msra.mxu0 %v2130
        %2266 = vmatprep.subr.bf16.mxu0 %v2129
        %2267 = vmatpush1.bf16.msra.mxu0 %v2128
        %2268 = vmatprep.subr.bf16.mxu0 %v2127
        %2269 = vmatpush1.bf16.msra.mxu0 %v2126
        %2270 = vmatprep.subr.bf16.mxu0 %v2157
        %2271 = vmatpush2.bf16.msra.mxu0 %v2156
        %2272 = vmatprep.subr.bf16.mxu0 %v2155
        %2273 = vmatpush2.bf16.msra.mxu0 %v2154
        %2274 = vmatprep.subr.bf16.mxu0 %v2153
        %2275 = vmatpush2.bf16.msra.mxu0 %v2152
        %2276 = vmatprep.subr.bf16.mxu0 %v2151
        %2277 = vmatpush2.bf16.msra.mxu0 %v2150
        %2278 = vmatprep.subr.bf16.mxu0 %v2149
        %2279 = vmatpush2.bf16.msra.mxu0 %v2148
        %2280 = vmatprep.subr.bf16.mxu0 %v2147
        %2281 = vmatpush2.bf16.msra.mxu0 %v2146
        %2282 = vmatprep.subr.bf16.mxu0 %v2145
        %2283 = vmatpush2.bf16.msra.mxu0 %v2144
        %2284 = vmatprep.subr.bf16.mxu0 %v2143
        %2285 = vmatpush2.bf16.msra.mxu0 %v2142
        %2286 = vmatprep.mubr.bf16.mxu0 %v1795
        %2287 = vmatmul.mubr.bf16.gmra.mxu0 %v1794
        %v2288 = vpop.f32.mrf.mxu0
        %v2289 = vadd.f32 %v1927, %v2288
        %v2290 = vpop.f32.mrf.mxu0
        %v2291 = vadd.f32 %v1931, %v2290
        %v2292 = vpop.f32.mrf.mxu0
        %v2293 = vadd.f32 %v1927, %v2292
        %v2294 = vpop.f32.mrf.mxu0
        %v2295 = vadd.f32 %v1931, %v2294
        %2296 = vmatprep.mubr.bf16.mxu0 %v1799
        %2297 = vmatmul.mubr.bf16.gmra.mxu0 %v1798
        %v2298 = vpop.f32.mrf.mxu0
        %v2299 = vadd.f32 %v1927, %v2298
        %v2300 = vpop.f32.mrf.mxu0
        %v2301 = vadd.f32 %v1931, %v2300
        %v2302 = vpop.f32.mrf.mxu0
        %v2303 = vadd.f32 %v1927, %v2302
        %v2304 = vpop.f32.mrf.mxu0
        %v2305 = vadd.f32 %v1931, %v2304
        %2306 = vmatprep.mubr.bf16.mxu0 %v1803
        %2307 = vmatmul.mubr.bf16.gmra.mxu0 %v1802
        %v2308 = vpop.f32.mrf.mxu0
        %v2309 = vadd.f32 %v1927, %v2308
        %v2310 = vpop.f32.mrf.mxu0
        %v2311 = vadd.f32 %v1931, %v2310
        %v2312 = vpop.f32.mrf.mxu0
        %v2313 = vadd.f32 %v1927, %v2312
        %v2314 = vpop.f32.mrf.mxu0
        %v2315 = vadd.f32 %v1931, %v2314
        %2316 = vmatprep.mubr.bf16.mxu0 %v1807
        %2317 = vmatmul.mubr.bf16.gmra.mxu0 %v1806
        %v2318 = vpop.f32.mrf.mxu0
        %v2319 = vadd.f32 %v1927, %v2318
        %v2320 = vpop.f32.mrf.mxu0
        %v2321 = vadd.f32 %v1931, %v2320
        %v2322 = vpop.f32.mrf.mxu0
        %v2323 = vadd.f32 %v1927, %v2322
        %v2324 = vpop.f32.mrf.mxu0
        %v2325 = vadd.f32 %v1931, %v2324
        %2326 = vmatprep.mubr.bf16.mxu0 %v1811
        %2327 = vmatmul.mubr.bf16.gmra.mxu0 %v1810
        %v2328 = vpop.f32.mrf.mxu0
        %v2329 = vadd.f32 %v1927, %v2328
        %v2330 = vpop.f32.mrf.mxu0
        %v2331 = vadd.f32 %v1931, %v2330
        %v2332 = vpop.f32.mrf.mxu0
        %v2333 = vadd.f32 %v1927, %v2332
        %v2334 = vpop.f32.mrf.mxu0
        %v2335 = vadd.f32 %v1931, %v2334
        %2336 = vmatprep.mubr.bf16.mxu0 %v1815
        %2337 = vmatmul.mubr.bf16.gmra.mxu0 %v1814
        %v2338 = vpop.f32.mrf.mxu0
        %v2339 = vadd.f32 %v1927, %v2338
        %v2340 = vpop.f32.mrf.mxu0
        %v2341 = vadd.f32 %v1931, %v2340
        %v2342 = vpop.f32.mrf.mxu0
        %v2343 = vadd.f32 %v1927, %v2342
        %v2344 = vpop.f32.mrf.mxu0
        %v2345 = vadd.f32 %v1931, %v2344
        %2346 = vmatprep.mubr.bf16.mxu0 %v1819
        %2347 = vmatmul.mubr.bf16.gmra.mxu0 %v1818
        %v2348 = vpop.f32.mrf.mxu0
        %v2349 = vadd.f32 %v1927, %v2348
        %v2350 = vpop.f32.mrf.mxu0
        %v2351 = vadd.f32 %v1931, %v2350
        %v2352 = vpop.f32.mrf.mxu0
        %v2353 = vadd.f32 %v1927, %v2352
        %v2354 = vpop.f32.mrf.mxu0
        %v2355 = vadd.f32 %v1931, %v2354
        %2356 = vmatprep.mubr.bf16.mxu0 %v1823
        %2357 = vmatmul.mubr.bf16.gmra.mxu0 %v1822
        %v2358 = vpop.f32.mrf.mxu0
        %v2359 = vadd.f32 %v1927, %v2358
        %v2360 = vpop.f32.mrf.mxu0
        %v2361 = vadd.f32 %v1931, %v2360
        %v2362 = vpop.f32.mrf.mxu0
        %v2363 = vadd.f32 %v1927, %v2362
        %v2364 = vpop.f32.mrf.mxu0
        %v2365 = vadd.f32 %v1931, %v2364
        %2366 = vmatprep.mubr.bf16.mxu0 %v1827
        %2367 = vmatmul.mubr.bf16.gmra.mxu0 %v1826
        %v2368 = vpop.f32.mrf.mxu0
        %v2369 = vadd.f32 %v1927, %v2368
        %v2370 = vpop.f32.mrf.mxu0
        %v2371 = vadd.f32 %v1931, %v2370
        %v2372 = vpop.f32.mrf.mxu0
        %v2373 = vadd.f32 %v1927, %v2372
        %v2374 = vpop.f32.mrf.mxu0
        %v2375 = vadd.f32 %v1931, %v2374
        %2376 = vmatprep.mubr.bf16.mxu0 %v1831
        %2377 = vmatmul.mubr.bf16.gmra.mxu0 %v1830
        %v2378 = vpop.f32.mrf.mxu0
        %v2379 = vadd.f32 %v1927, %v2378
        %v2380 = vpop.f32.mrf.mxu0
        %v2381 = vadd.f32 %v1931, %v2380
        %v2382 = vpop.f32.mrf.mxu0
        %v2383 = vadd.f32 %v1927, %v2382
        %v2384 = vpop.f32.mrf.mxu0
        %v2385 = vadd.f32 %v1931, %v2384
        %2386 = vmatprep.mubr.bf16.mxu0 %v1835
        %2387 = vmatmul.mubr.bf16.gmra.mxu0 %v1834
        %v2388 = vpop.f32.mrf.mxu0
        %v2389 = vadd.f32 %v1927, %v2388
        %v2390 = vpop.f32.mrf.mxu0
        %v2391 = vadd.f32 %v1931, %v2390
        %v2392 = vpop.f32.mrf.mxu0
        %v2393 = vadd.f32 %v1927, %v2392
        %v2394 = vpop.f32.mrf.mxu0
        %v2395 = vadd.f32 %v1931, %v2394
        %2396 = vmatprep.mubr.bf16.mxu0 %v1839
        %2397 = vmatmul.mubr.bf16.gmra.mxu0 %v1838
        %v2398 = vpop.f32.mrf.mxu0
        %v2399 = vadd.f32 %v1927, %v2398
        %v2400 = vpop.f32.mrf.mxu0
        %v2401 = vadd.f32 %v1931, %v2400
        %v2402 = vpop.f32.mrf.mxu0
        %v2403 = vadd.f32 %v1927, %v2402
        %v2404 = vpop.f32.mrf.mxu0
        %v2405 = vadd.f32 %v1931, %v2404
        %2406 = vmatprep.mubr.bf16.mxu0 %v1843
        %2407 = vmatmul.mubr.bf16.gmra.mxu0 %v1842
        %v2408 = vpop.f32.mrf.mxu0
        %v2409 = vadd.f32 %v1927, %v2408
        %v2410 = vpop.f32.mrf.mxu0
        %v2411 = vadd.f32 %v1931, %v2410
        %v2412 = vpop.f32.mrf.mxu0
        %v2413 = vadd.f32 %v1927, %v2412
        %v2414 = vpop.f32.mrf.mxu0
        %v2415 = vadd.f32 %v1931, %v2414
        %2416 = vmatprep.mubr.bf16.mxu0 %v1847
        %2417 = vmatmul.mubr.bf16.gmra.mxu0 %v1846
        %v2418 = vpop.f32.mrf.mxu0
        %v2419 = vadd.f32 %v1927, %v2418
        %v2420 = vpop.f32.mrf.mxu0
        %v2421 = vadd.f32 %v1931, %v2420
        %v2422 = vpop.f32.mrf.mxu0
        %v2423 = vadd.f32 %v1927, %v2422
        %v2424 = vpop.f32.mrf.mxu0
        %v2425 = vadd.f32 %v1931, %v2424
        %2426 = vmatprep.mubr.bf16.mxu0 %v1851
        %2427 = vmatmul.mubr.bf16.gmra.mxu0 %v1850
        %v2428 = vpop.f32.mrf.mxu0
        %v2429 = vadd.f32 %v1927, %v2428
        %v2430 = vpop.f32.mrf.mxu0
        %v2431 = vadd.f32 %v1931, %v2430
        %v2432 = vpop.f32.mrf.mxu0
        %v2433 = vadd.f32 %v1927, %v2432
        %v2434 = vpop.f32.mrf.mxu0
        %v2435 = vadd.f32 %v1931, %v2434
        %2436 = vmatprep.mubr.bf16.mxu0 %v1855
        %2437 = vmatmul.mubr.bf16.gmra.mxu0 %v1854
        %v2438 = vpop.f32.mrf.mxu0
        %v2439 = vadd.f32 %v1927, %v2438
        %v2440 = vpop.f32.mrf.mxu0
        %v2441 = vadd.f32 %v1931, %v2440
        %v2442 = vpop.f32.mrf.mxu0
        %v2443 = vadd.f32 %v1927, %v2442
        %v2444 = vpop.f32.mrf.mxu0
        %v2445 = vadd.f32 %v1931, %v2444
        %2446 = vdwg.mxu0
        %2447 = vmatprep.subr.bf16.mxu0 %v2173
        %2448 = vmatpush1.bf16.msra.mxu0 %v2172
        %2449 = vmatprep.subr.bf16.mxu0 %v2171
        %2450 = vmatpush1.bf16.msra.mxu0 %v2170
        %2451 = vmatprep.subr.bf16.mxu0 %v2169
        %2452 = vmatpush1.bf16.msra.mxu0 %v2168
        %2453 = vmatprep.subr.bf16.mxu0 %v2167
        %2454 = vmatpush1.bf16.msra.mxu0 %v2166
        %2455 = vmatprep.subr.bf16.mxu0 %v2165
        %2456 = vmatpush1.bf16.msra.mxu0 %v2164
        %2457 = vmatprep.subr.bf16.mxu0 %v2163
        %2458 = vmatpush1.bf16.msra.mxu0 %v2162
        %2459 = vmatprep.subr.bf16.mxu0 %v2161
        %2460 = vmatpush1.bf16.msra.mxu0 %v2160
        %2461 = vmatprep.subr.bf16.mxu0 %v2159
        %2462 = vmatpush1.bf16.msra.mxu0 %v2158
        %2463 = vmatprep.subr.bf16.mxu0 %v2189
        %2464 = vmatpush2.bf16.msra.mxu0 %v2188
        %2465 = vmatprep.subr.bf16.mxu0 %v2187
        %2466 = vmatpush2.bf16.msra.mxu0 %v2186
        %2467 = vmatprep.subr.bf16.mxu0 %v2185
        %2468 = vmatpush2.bf16.msra.mxu0 %v2184
        %2469 = vmatprep.subr.bf16.mxu0 %v2183
        %2470 = vmatpush2.bf16.msra.mxu0 %v2182
        %2471 = vmatprep.subr.bf16.mxu0 %v2181
        %2472 = vmatpush2.bf16.msra.mxu0 %v2180
        %2473 = vmatprep.subr.bf16.mxu0 %v2179
        %2474 = vmatpush2.bf16.msra.mxu0 %v2178
        %2475 = vmatprep.subr.bf16.mxu0 %v2177
        %2476 = vmatpush2.bf16.msra.mxu0 %v2176
        %2477 = vmatprep.subr.bf16.mxu0 %v2175
        %2478 = vmatpush2.bf16.msra.mxu0 %v2174
        %2479 = vmatprep.mubr.bf16.mxu0 %v1797
        %2480 = vmatmul.mubr.bf16.gmra.mxu0 %v1796
        %v2481 = vpop.f32.mrf.mxu0
        %v2482 = vadd.f32 %v2289, %v2481
        %v2483 = vpop.f32.mrf.mxu0
        %v2484 = vadd.f32 %v2291, %v2483
        %v2485 = vpop.f32.mrf.mxu0
        %v2486 = vadd.f32 %v2293, %v2485
        %v2487 = vpop.f32.mrf.mxu0
        %v2488 = vadd.f32 %v2295, %v2487
        %2489 = vmatprep.mubr.bf16.mxu0 %v1801
        %2490 = vmatmul.mubr.bf16.gmra.mxu0 %v1800
        %v2491 = vpop.f32.mrf.mxu0
        %v2492 = vadd.f32 %v2299, %v2491
        %v2493 = vpop.f32.mrf.mxu0
        %v2494 = vadd.f32 %v2301, %v2493
        %v2495 = vpop.f32.mrf.mxu0
        %v2496 = vadd.f32 %v2303, %v2495
        %v2497 = vpop.f32.mrf.mxu0
        %v2498 = vadd.f32 %v2305, %v2497
        %2499 = vmatprep.mubr.bf16.mxu0 %v1805
        %2500 = vmatmul.mubr.bf16.gmra.mxu0 %v1804
        %v2501 = vpop.f32.mrf.mxu0
        %v2502 = vadd.f32 %v2309, %v2501
        %v2503 = vpop.f32.mrf.mxu0
        %v2504 = vadd.f32 %v2311, %v2503
        %v2505 = vpop.f32.mrf.mxu0
        %v2506 = vadd.f32 %v2313, %v2505
        %v2507 = vpop.f32.mrf.mxu0
        %v2508 = vadd.f32 %v2315, %v2507
        %2509 = vmatprep.mubr.bf16.mxu0 %v1809
        %2510 = vmatmul.mubr.bf16.gmra.mxu0 %v1808
        %v2511 = vpop.f32.mrf.mxu0
        %v2512 = vadd.f32 %v2319, %v2511
        %v2513 = vpop.f32.mrf.mxu0
        %v2514 = vadd.f32 %v2321, %v2513
        %v2515 = vpop.f32.mrf.mxu0
        %v2516 = vadd.f32 %v2323, %v2515
        %v2517 = vpop.f32.mrf.mxu0
        %v2518 = vadd.f32 %v2325, %v2517
        %2519 = vmatprep.mubr.bf16.mxu0 %v1813
        %2520 = vmatmul.mubr.bf16.gmra.mxu0 %v1812
        %v2521 = vpop.f32.mrf.mxu0
        %v2522 = vadd.f32 %v2329, %v2521
        %v2523 = vpop.f32.mrf.mxu0
        %v2524 = vadd.f32 %v2331, %v2523
        %v2525 = vpop.f32.mrf.mxu0
        %v2526 = vadd.f32 %v2333, %v2525
        %v2527 = vpop.f32.mrf.mxu0
        %v2528 = vadd.f32 %v2335, %v2527
        %2529 = vmatprep.mubr.bf16.mxu0 %v1817
        %2530 = vmatmul.mubr.bf16.gmra.mxu0 %v1816
        %v2531 = vpop.f32.mrf.mxu0
        %v2532 = vadd.f32 %v2339, %v2531
        %v2533 = vpop.f32.mrf.mxu0
        %v2534 = vadd.f32 %v2341, %v2533
        %v2535 = vpop.f32.mrf.mxu0
        %v2536 = vadd.f32 %v2343, %v2535
        %v2537 = vpop.f32.mrf.mxu0
        %v2538 = vadd.f32 %v2345, %v2537
        %2539 = vmatprep.mubr.bf16.mxu0 %v1821
        %2540 = vmatmul.mubr.bf16.gmra.mxu0 %v1820
        %v2541 = vpop.f32.mrf.mxu0
        %v2542 = vadd.f32 %v2349, %v2541
        %v2543 = vpop.f32.mrf.mxu0
        %v2544 = vadd.f32 %v2351, %v2543
        %v2545 = vpop.f32.mrf.mxu0
        %v2546 = vadd.f32 %v2353, %v2545
        %v2547 = vpop.f32.mrf.mxu0
        %v2548 = vadd.f32 %v2355, %v2547
        %2549 = vmatprep.mubr.bf16.mxu0 %v1825
        %2550 = vmatmul.mubr.bf16.gmra.mxu0 %v1824
        %v2551 = vpop.f32.mrf.mxu0
        %v2552 = vadd.f32 %v2359, %v2551
        %v2553 = vpop.f32.mrf.mxu0
        %v2554 = vadd.f32 %v2361, %v2553
        %v2555 = vpop.f32.mrf.mxu0
        %v2556 = vadd.f32 %v2363, %v2555
        %v2557 = vpop.f32.mrf.mxu0
        %v2558 = vadd.f32 %v2365, %v2557
        %2559 = vmatprep.mubr.bf16.mxu0 %v1829
        %2560 = vmatmul.mubr.bf16.gmra.mxu0 %v1828
        %v2561 = vpop.f32.mrf.mxu0
        %v2562 = vadd.f32 %v2369, %v2561
        %v2563 = vpop.f32.mrf.mxu0
        %v2564 = vadd.f32 %v2371, %v2563
        %v2565 = vpop.f32.mrf.mxu0
        %v2566 = vadd.f32 %v2373, %v2565
        %v2567 = vpop.f32.mrf.mxu0
        %v2568 = vadd.f32 %v2375, %v2567
        %2569 = vmatprep.mubr.bf16.mxu0 %v1833
        %2570 = vmatmul.mubr.bf16.gmra.mxu0 %v1832
        %v2571 = vpop.f32.mrf.mxu0
        %v2572 = vadd.f32 %v2379, %v2571
        %v2573 = vpop.f32.mrf.mxu0
        %v2574 = vadd.f32 %v2381, %v2573
        %v2575 = vpop.f32.mrf.mxu0
        %v2576 = vadd.f32 %v2383, %v2575
        %v2577 = vpop.f32.mrf.mxu0
        %v2578 = vadd.f32 %v2385, %v2577
        %2579 = vmatprep.mubr.bf16.mxu0 %v1837
        %2580 = vmatmul.mubr.bf16.gmra.mxu0 %v1836
        %v2581 = vpop.f32.mrf.mxu0
        %v2582 = vadd.f32 %v2389, %v2581
        %v2583 = vpop.f32.mrf.mxu0
        %v2584 = vadd.f32 %v2391, %v2583
        %v2585 = vpop.f32.mrf.mxu0
        %v2586 = vadd.f32 %v2393, %v2585
        %v2587 = vpop.f32.mrf.mxu0
        %v2588 = vadd.f32 %v2395, %v2587
        %2589 = vmatprep.mubr.bf16.mxu0 %v1841
        %2590 = vmatmul.mubr.bf16.gmra.mxu0 %v1840
        %v2591 = vpop.f32.mrf.mxu0
        %v2592 = vadd.f32 %v2399, %v2591
        %v2593 = vpop.f32.mrf.mxu0
        %v2594 = vadd.f32 %v2401, %v2593
        %v2595 = vpop.f32.mrf.mxu0
        %v2596 = vadd.f32 %v2403, %v2595
        %v2597 = vpop.f32.mrf.mxu0
        %v2598 = vadd.f32 %v2405, %v2597
        %2599 = vmatprep.mubr.bf16.mxu0 %v1845
        %2600 = vmatmul.mubr.bf16.gmra.mxu0 %v1844
        %v2601 = vpop.f32.mrf.mxu0
        %v2602 = vadd.f32 %v2409, %v2601
        %v2603 = vpop.f32.mrf.mxu0
        %v2604 = vadd.f32 %v2411, %v2603
        %v2605 = vpop.f32.mrf.mxu0
        %v2606 = vadd.f32 %v2413, %v2605
        %v2607 = vpop.f32.mrf.mxu0
        %v2608 = vadd.f32 %v2415, %v2607
        %2609 = vmatprep.mubr.bf16.mxu0 %v1849
        %2610 = vmatmul.mubr.bf16.gmra.mxu0 %v1848
        %v2611 = vpop.f32.mrf.mxu0
        %v2612 = vadd.f32 %v2419, %v2611
        %v2613 = vpop.f32.mrf.mxu0
        %v2614 = vadd.f32 %v2421, %v2613
        %v2615 = vpop.f32.mrf.mxu0
        %v2616 = vadd.f32 %v2423, %v2615
        %v2617 = vpop.f32.mrf.mxu0
        %v2618 = vadd.f32 %v2425, %v2617
        %2619 = vmatprep.mubr.bf16.mxu0 %v1853
        %2620 = vmatmul.mubr.bf16.gmra.mxu0 %v1852
        %v2621 = vpop.f32.mrf.mxu0
        %v2622 = vadd.f32 %v2429, %v2621
        %v2623 = vpop.f32.mrf.mxu0
        %v2624 = vadd.f32 %v2431, %v2623
        %v2625 = vpop.f32.mrf.mxu0
        %v2626 = vadd.f32 %v2433, %v2625
        %v2627 = vpop.f32.mrf.mxu0
        %v2628 = vadd.f32 %v2435, %v2627
        %2629 = vmatprep.mubr.bf16.mxu0 %v1857
        %2630 = vmatmul.mubr.bf16.gmra.mxu0 %v1856
        %v2631 = vpop.f32.mrf.mxu0
        %v2632 = vadd.f32 %v2439, %v2631
        %v2633 = vpop.f32.mrf.mxu0
        %v2634 = vadd.f32 %v2441, %v2633
        %v2635 = vpop.f32.mrf.mxu0
        %v2636 = vadd.f32 %v2443, %v2635
        %v2637 = vpop.f32.mrf.mxu0
        %v2638 = vadd.f32 %v2445, %v2637
        %2639 = vdwg.mxu0
        %vm2640 = vcmp.gt.f32.partialorder %v2482, 0.0
        %vm2641 = vcmp.gt.f32.partialorder %v2484, 0.0
        %vm2642 = vcmp.gt.f32.partialorder %v2486, 0.0
        %vm2643 = vcmp.gt.f32.partialorder %v2488, 0.0
        %vm2644 = vcmp.gt.f32.partialorder %v2492, 0.0
        %vm2645 = vcmp.gt.f32.partialorder %v2494, 0.0
        %vm2646 = vcmp.gt.f32.partialorder %v2496, 0.0
        %vm2647 = vcmp.gt.f32.partialorder %v2498, 0.0
        %vm2648 = vcmp.gt.f32.partialorder %v2502, 0.0
        %vm2649 = vcmp.gt.f32.partialorder %v2504, 0.0
        %vm2650 = vcmp.gt.f32.partialorder %v2506, 0.0
        %vm2651 = vcmp.gt.f32.partialorder %v2508, 0.0
        %vm2652 = vcmp.gt.f32.partialorder %v2512, 0.0
        %vm2653 = vcmp.gt.f32.partialorder %v2514, 0.0
        %vm2654 = vcmp.gt.f32.partialorder %v2516, 0.0
        %vm2655 = vcmp.gt.f32.partialorder %v2518, 0.0
        %vm2656 = vcmp.gt.f32.partialorder %v2522, 0.0
        %vm2657 = vcmp.gt.f32.partialorder %v2524, 0.0
        %vm2658 = vcmp.gt.f32.partialorder %v2526, 0.0
        %vm2659 = vcmp.gt.f32.partialorder %v2528, 0.0
        %vm2660 = vcmp.gt.f32.partialorder %v2532, 0.0
        %vm2661 = vcmp.gt.f32.partialorder %v2534, 0.0
        %vm2662 = vcmp.gt.f32.partialorder %v2536, 0.0
        %vm2663 = vcmp.gt.f32.partialorder %v2538, 0.0
        %vm2664 = vcmp.gt.f32.partialorder %v2542, 0.0
        %vm2665 = vcmp.gt.f32.partialorder %v2544, 0.0
        %vm2666 = vcmp.gt.f32.partialorder %v2546, 0.0
        %vm2667 = vcmp.gt.f32.partialorder %v2548, 0.0
        %vm2668 = vcmp.gt.f32.partialorder %v2552, 0.0
        %vm2669 = vcmp.gt.f32.partialorder %v2554, 0.0
        %vm2670 = vcmp.gt.f32.partialorder %v2556, 0.0
        %vm2671 = vcmp.gt.f32.partialorder %v2558, 0.0
        %vm2672 = vcmp.gt.f32.partialorder %v2562, 0.0
        %vm2673 = vcmp.gt.f32.partialorder %v2564, 0.0
        %vm2674 = vcmp.gt.f32.partialorder %v2566, 0.0
        %vm2675 = vcmp.gt.f32.partialorder %v2568, 0.0
        %vm2676 = vcmp.gt.f32.partialorder %v2572, 0.0
        %vm2677 = vcmp.gt.f32.partialorder %v2574, 0.0
        %vm2678 = vcmp.gt.f32.partialorder %v2576, 0.0
        %vm2679 = vcmp.gt.f32.partialorder %v2578, 0.0
        %vm2680 = vcmp.gt.f32.partialorder %v2582, 0.0
        %vm2681 = vcmp.gt.f32.partialorder %v2584, 0.0
        %vm2682 = vcmp.gt.f32.partialorder %v2586, 0.0
        %vm2683 = vcmp.gt.f32.partialorder %v2588, 0.0
        %vm2684 = vcmp.gt.f32.partialorder %v2592, 0.0
        %vm2685 = vcmp.gt.f32.partialorder %v2594, 0.0
        %vm2686 = vcmp.gt.f32.partialorder %v2596, 0.0
        %vm2687 = vcmp.gt.f32.partialorder %v2598, 0.0
        %vm2688 = vcmp.gt.f32.partialorder %v2602, 0.0
        %vm2689 = vcmp.gt.f32.partialorder %v2604, 0.0
        %vm2690 = vcmp.gt.f32.partialorder %v2606, 0.0
        %vm2691 = vcmp.gt.f32.partialorder %v2608, 0.0
        %vm2692 = vcmp.gt.f32.partialorder %v2612, 0.0
        %vm2693 = vcmp.gt.f32.partialorder %v2614, 0.0
        %vm2694 = vcmp.gt.f32.partialorder %v2616, 0.0
        %vm2695 = vcmp.gt.f32.partialorder %v2618, 0.0
        %vm2696 = vcmp.gt.f32.partialorder %v2622, 0.0
        %vm2697 = vcmp.gt.f32.partialorder %v2624, 0.0
        %vm2698 = vcmp.gt.f32.partialorder %v2626, 0.0
        %vm2699 = vcmp.gt.f32.partialorder %v2628, 0.0
        %vm2700 = vcmp.gt.f32.partialorder %v2632, 0.0
        %vm2701 = vcmp.gt.f32.partialorder %v2634, 0.0
        %vm2702 = vcmp.gt.f32.partialorder %v2636, 0.0
        %vm2703 = vcmp.gt.f32.partialorder %v2638, 0.0
        %v2704 = vmul.f32 %v2482, 0.2
        %v2705 = vmul.f32 %v2484, 0.2
        %v2706 = vmul.f32 %v2486, 0.2
        %v2707 = vmul.f32 %v2488, 0.2
        %v2708 = vmul.f32 %v2492, 0.2
        %v2709 = vmul.f32 %v2494, 0.2
        %v2710 = vmul.f32 %v2496, 0.2
        %v2711 = vmul.f32 %v2498, 0.2
        %v2712 = vmul.f32 %v2502, 0.2
        %v2713 = vmul.f32 %v2504, 0.2
        %v2714 = vmul.f32 %v2506, 0.2
        %v2715 = vmul.f32 %v2508, 0.2
        %v2716 = vmul.f32 %v2512, 0.2
        %v2717 = vmul.f32 %v2514, 0.2
        %v2718 = vmul.f32 %v2516, 0.2
        %v2719 = vmul.f32 %v2518, 0.2
        %v2720 = vmul.f32 %v2522, 0.2
        %v2721 = vmul.f32 %v2524, 0.2
        %v2722 = vmul.f32 %v2526, 0.2
        %v2723 = vmul.f32 %v2528, 0.2
        %v2724 = vmul.f32 %v2532, 0.2
        %v2725 = vmul.f32 %v2534, 0.2
        %v2726 = vmul.f32 %v2536, 0.2
        %v2727 = vmul.f32 %v2538, 0.2
        %v2728 = vmul.f32 %v2542, 0.2
        %v2729 = vmul.f32 %v2544, 0.2
        %v2730 = vmul.f32 %v2546, 0.2
        %v2731 = vmul.f32 %v2548, 0.2
        %v2732 = vmul.f32 %v2552, 0.2
        %v2733 = vmul.f32 %v2554, 0.2
        %v2734 = vmul.f32 %v2556, 0.2
        %v2735 = vmul.f32 %v2558, 0.2
        %v2736 = vmul.f32 %v2562, 0.2
        %v2737 = vmul.f32 %v2564, 0.2
        %v2738 = vmul.f32 %v2566, 0.2
        %v2739 = vmul.f32 %v2568, 0.2
        %v2740 = vmul.f32 %v2572, 0.2
        %v2741 = vmul.f32 %v2574, 0.2
        %v2742 = vmul.f32 %v2576, 0.2
        %v2743 = vmul.f32 %v2578, 0.2
        %v2744 = vmul.f32 %v2582, 0.2
        %v2745 = vmul.f32 %v2584, 0.2
        %v2746 = vmul.f32 %v2586, 0.2
        %v2747 = vmul.f32 %v2588, 0.2
        %v2748 = vmul.f32 %v2592, 0.2
        %v2749 = vmul.f32 %v2594, 0.2
        %v2750 = vmul.f32 %v2596, 0.2
        %v2751 = vmul.f32 %v2598, 0.2
        %v2752 = vmul.f32 %v2602, 0.2
        %v2753 = vmul.f32 %v2604, 0.2
        %v2754 = vmul.f32 %v2606, 0.2
        %v2755 = vmul.f32 %v2608, 0.2
        %v2756 = vmul.f32 %v2612, 0.2
        %v2757 = vmul.f32 %v2614, 0.2
        %v2758 = vmul.f32 %v2616, 0.2
        %v2759 = vmul.f32 %v2618, 0.2
        %v2760 = vmul.f32 %v2622, 0.2
        %v2761 = vmul.f32 %v2624, 0.2
        %v2762 = vmul.f32 %v2626, 0.2
        %v2763 = vmul.f32 %v2628, 0.2
        %v2764 = vmul.f32 %v2632, 0.2
        %v2765 = vmul.f32 %v2634, 0.2
        %v2766 = vmul.f32 %v2636, 0.2
        %v2767 = vmul.f32 %v2638, 0.2
        %v2768 = vsel %vm2640, %v2482, %v2704
        %v2769 = vsel %vm2641, %v2484, %v2705
        %v2770 = vsel %vm2642, %v2486, %v2706
        %v2771 = vsel %vm2643, %v2488, %v2707
        %v2772 = vsel %vm2644, %v2492, %v2708
        %v2773 = vsel %vm2645, %v2494, %v2709
        %v2774 = vsel %vm2646, %v2496, %v2710
        %v2775 = vsel %vm2647, %v2498, %v2711
        %v2776 = vsel %vm2648, %v2502, %v2712
        %v2777 = vsel %vm2649, %v2504, %v2713
        %v2778 = vsel %vm2650, %v2506, %v2714
        %v2779 = vsel %vm2651, %v2508, %v2715
        %v2780 = vsel %vm2652, %v2512, %v2716
        %v2781 = vsel %vm2653, %v2514, %v2717
        %v2782 = vsel %vm2654, %v2516, %v2718
        %v2783 = vsel %vm2655, %v2518, %v2719
        %v2784 = vsel %vm2656, %v2522, %v2720
        %v2785 = vsel %vm2657, %v2524, %v2721
        %v2786 = vsel %vm2658, %v2526, %v2722
        %v2787 = vsel %vm2659, %v2528, %v2723
        %v2788 = vsel %vm2660, %v2532, %v2724
        %v2789 = vsel %vm2661, %v2534, %v2725
        %v2790 = vsel %vm2662, %v2536, %v2726
        %v2791 = vsel %vm2663, %v2538, %v2727
        %v2792 = vsel %vm2664, %v2542, %v2728
        %v2793 = vsel %vm2665, %v2544, %v2729
        %v2794 = vsel %vm2666, %v2546, %v2730
        %v2795 = vsel %vm2667, %v2548, %v2731
        %v2796 = vsel %vm2668, %v2552, %v2732
        %v2797 = vsel %vm2669, %v2554, %v2733
        %v2798 = vsel %vm2670, %v2556, %v2734
        %v2799 = vsel %vm2671, %v2558, %v2735
        %v2800 = vsel %vm2672, %v2562, %v2736
        %v2801 = vsel %vm2673, %v2564, %v2737
        %v2802 = vsel %vm2674, %v2566, %v2738
        %v2803 = vsel %vm2675, %v2568, %v2739
        %v2804 = vsel %vm2676, %v2572, %v2740
        %v2805 = vsel %vm2677, %v2574, %v2741
        %v2806 = vsel %vm2678, %v2576, %v2742
        %v2807 = vsel %vm2679, %v2578, %v2743
        %v2808 = vsel %vm2680, %v2582, %v2744
        %v2809 = vsel %vm2681, %v2584, %v2745
        %v2810 = vsel %vm2682, %v2586, %v2746
        %v2811 = vsel %vm2683, %v2588, %v2747
        %v2812 = vsel %vm2684, %v2592, %v2748
        %v2813 = vsel %vm2685, %v2594, %v2749
        %v2814 = vsel %vm2686, %v2596, %v2750
        %v2815 = vsel %vm2687, %v2598, %v2751
        %v2816 = vsel %vm2688, %v2602, %v2752
        %v2817 = vsel %vm2689, %v2604, %v2753
        %v2818 = vsel %vm2690, %v2606, %v2754
        %v2819 = vsel %vm2691, %v2608, %v2755
        %v2820 = vsel %vm2692, %v2612, %v2756
        %v2821 = vsel %vm2693, %v2614, %v2757
        %v2822 = vsel %vm2694, %v2616, %v2758
        %v2823 = vsel %vm2695, %v2618, %v2759
        %v2824 = vsel %vm2696, %v2622, %v2760
        %v2825 = vsel %vm2697, %v2624, %v2761
        %v2826 = vsel %vm2698, %v2626, %v2762
        %v2827 = vsel %vm2699, %v2628, %v2763
        %v2828 = vsel %vm2700, %v2632, %v2764
        %v2829 = vsel %vm2701, %v2634, %v2765
        %v2830 = vsel %vm2702, %v2636, %v2766
        %v2831 = vsel %vm2703, %v2638, %v2767
        %v2832 = vpack.c.bf16 %v2770, %v2768
        %v2833 = vpack.c.bf16 %v2771, %v2769
        %v2834 = vpack.c.bf16 %v2774, %v2772
        %v2835 = vpack.c.bf16 %v2775, %v2773
        %v2836 = vpack.c.bf16 %v2778, %v2776
        %v2837 = vpack.c.bf16 %v2779, %v2777
        %v2838 = vpack.c.bf16 %v2782, %v2780
        %v2839 = vpack.c.bf16 %v2783, %v2781
        %v2840 = vpack.c.bf16 %v2786, %v2784
        %v2841 = vpack.c.bf16 %v2787, %v2785
        %v2842 = vpack.c.bf16 %v2790, %v2788
        %v2843 = vpack.c.bf16 %v2791, %v2789
        %v2844 = vpack.c.bf16 %v2794, %v2792
        %v2845 = vpack.c.bf16 %v2795, %v2793
        %v2846 = vpack.c.bf16 %v2798, %v2796
        %v2847 = vpack.c.bf16 %v2799, %v2797
        %v2848 = vpack.c.bf16 %v2802, %v2800
        %v2849 = vpack.c.bf16 %v2803, %v2801
        %v2850 = vpack.c.bf16 %v2806, %v2804
        %v2851 = vpack.c.bf16 %v2807, %v2805
        %v2852 = vpack.c.bf16 %v2810, %v2808
        %v2853 = vpack.c.bf16 %v2811, %v2809
        %v2854 = vpack.c.bf16 %v2814, %v2812
        %v2855 = vpack.c.bf16 %v2815, %v2813
        %v2856 = vpack.c.bf16 %v2818, %v2816
        %v2857 = vpack.c.bf16 %v2819, %v2817
        %v2858 = vpack.c.bf16 %v2822, %v2820
        %v2859 = vpack.c.bf16 %v2823, %v2821
        %v2860 = vpack.c.bf16 %v2826, %v2824
        %v2861 = vpack.c.bf16 %v2827, %v2825
        %v2862 = vpack.c.bf16 %v2830, %v2828
        %v2863 = vpack.c.bf16 %v2831, %v2829
        %v2864 = vld [vmem:[#allocation10] sm:$0xf]
        %v2865 = vld [vmem:[#allocation10 + $0x4] sm:$0xf]
        %v2866 = vld [vmem:[#allocation10 + $0x8] sm:$0xf]
        %v2867 = vld [vmem:[#allocation10 + $0xc] sm:$0xf]
        %v2868 = vld [vmem:[#allocation10 + $0x10] sm:$0xf]
        %v2869 = vld [vmem:[#allocation10 + $0x14] sm:$0xf]
        %v2870 = vld [vmem:[#allocation10 + $0x18] sm:$0xf]
        %v2871 = vld [vmem:[#allocation10 + $0x1c] sm:$0xf]
        %v2872 = vld [vmem:[#allocation10 + $0x20] sm:$0xf]
        %v2873 = vld [vmem:[#allocation10 + $0x24] sm:$0xf]
        %v2874 = vld [vmem:[#allocation10 + $0x28] sm:$0xf]
        %v2875 = vld [vmem:[#allocation10 + $0x2c] sm:$0xf]
        %v2876 = vld [vmem:[#allocation10 + $0x30] sm:$0xf]
        %v2877 = vld [vmem:[#allocation10 + $0x34] sm:$0xf]
        %v2878 = vld [vmem:[#allocation10 + $0x38] sm:$0xf]
        %v2879 = vld [vmem:[#allocation10 + $0x3c] sm:$0xf]
        %v2880 = vld [vmem:[#allocation10 + $0x40] sm:$0xf]
        %v2881 = vld [vmem:[#allocation10 + $0x44] sm:$0xf]
        %v2882 = vld [vmem:[#allocation10 + $0x48] sm:$0xf]
        %v2883 = vld [vmem:[#allocation10 + $0x4c] sm:$0xf]
        %v2884 = vld [vmem:[#allocation10 + $0x50] sm:$0xf]
        %v2885 = vld [vmem:[#allocation10 + $0x54] sm:$0xf]
        %v2886 = vld [vmem:[#allocation10 + $0x58] sm:$0xf]
        %v2887 = vld [vmem:[#allocation10 + $0x5c] sm:$0xf]
        %v2888 = vld [vmem:[#allocation10 + $0x60] sm:$0xf]
        %v2889 = vld [vmem:[#allocation10 + $0x64] sm:$0xf]
        %v2890 = vld [vmem:[#allocation10 + $0x68] sm:$0xf]
        %v2891 = vld [vmem:[#allocation10 + $0x6c] sm:$0xf]
        %v2892 = vld [vmem:[#allocation10 + $0x70] sm:$0xf]
        %v2893 = vld [vmem:[#allocation10 + $0x74] sm:$0xf]
        %v2894 = vld [vmem:[#allocation10 + $0x78] sm:$0xf]
        %v2895 = vld [vmem:[#allocation10 + $0x7c] sm:$0xf]
        %v2896 = vld [vmem:[%s6] sm:$0x1]
        %v2898 = vlaneseq
        %v2899 = vshrl.u32 %v2898, 7
        %v2900 = vsub.s32 0, %v2899
        %v2901 = vrot.slane %v2896, %v2900
        %v2935 = vunpack.c.l.b16 %v2864
        %v2936 = vunpack.c.l.b16 %v2865
        %v2937 = vunpack.c.l.b16 %v2866
        %v2938 = vunpack.c.l.b16 %v2867
        %v2939 = vunpack.c.l.b16 %v2868
        %v2940 = vunpack.c.l.b16 %v2869
        %v2941 = vunpack.c.l.b16 %v2870
        %v2942 = vunpack.c.l.b16 %v2871
        %v2943 = vunpack.c.l.b16 %v2872
        %v2944 = vunpack.c.l.b16 %v2873
        %v2945 = vunpack.c.l.b16 %v2874
        %v2946 = vunpack.c.l.b16 %v2875
        %v2947 = vunpack.c.l.b16 %v2876
        %v2948 = vunpack.c.l.b16 %v2877
        %v2949 = vunpack.c.l.b16 %v2878
        %v2950 = vunpack.c.l.b16 %v2879
        %v2951 = vunpack.c.l.b16 %v2880
        %v2952 = vunpack.c.l.b16 %v2881
        %v2953 = vunpack.c.l.b16 %v2882
        %v2954 = vunpack.c.l.b16 %v2883
        %v2955 = vunpack.c.l.b16 %v2884
        %v2956 = vunpack.c.l.b16 %v2885
        %v2957 = vunpack.c.l.b16 %v2886
        %v2958 = vunpack.c.l.b16 %v2887
        %v2959 = vunpack.c.l.b16 %v2888
        %v2960 = vunpack.c.l.b16 %v2889
        %v2961 = vunpack.c.l.b16 %v2890
        %v2962 = vunpack.c.l.b16 %v2891
        %v2963 = vunpack.c.l.b16 %v2892
        %v2964 = vunpack.c.l.b16 %v2893
        %v2965 = vunpack.c.l.b16 %v2894
        %v2966 = vunpack.c.l.b16 %v2895
        %v2967 = vpack.c.b16 %v2936, %v2935
        %v2968 = vpack.c.b16 %v2938, %v2937
        %v2969 = vpack.c.b16 %v2940, %v2939
        %v2970 = vpack.c.b16 %v2942, %v2941
        %v2971 = vpack.c.b16 %v2944, %v2943
        %v2972 = vpack.c.b16 %v2946, %v2945
        %v2973 = vpack.c.b16 %v2948, %v2947
        %v2974 = vpack.c.b16 %v2950, %v2949
        %v2975 = vpack.c.b16 %v2952, %v2951
        %v2976 = vpack.c.b16 %v2954, %v2953
        %v2977 = vpack.c.b16 %v2956, %v2955
        %v2978 = vpack.c.b16 %v2958, %v2957
        %v2979 = vpack.c.b16 %v2960, %v2959
        %v2980 = vpack.c.b16 %v2962, %v2961
        %v2981 = vpack.c.b16 %v2964, %v2963
        %v2982 = vpack.c.b16 %v2966, %v2965
        %2999 = vmatprep.subr.bf16.mxu0 0
        %3000 = vmatpush1.bf16.msra.mxu0 %v2974
        %3001 = vmatprep.subr.bf16.mxu0 0
        %3002 = vmatpush1.bf16.msra.mxu0 %v2973
        %3003 = vmatprep.subr.bf16.mxu0 0
        %3004 = vmatpush1.bf16.msra.mxu0 %v2972
        %3005 = vmatprep.subr.bf16.mxu0 0
        %3006 = vmatpush1.bf16.msra.mxu0 %v2971
        %3007 = vmatprep.subr.bf16.mxu0 0
        %3008 = vmatpush1.bf16.msra.mxu0 %v2970
        %3009 = vmatprep.subr.bf16.mxu0 0
        %3010 = vmatpush1.bf16.msra.mxu0 %v2969
        %3011 = vmatprep.subr.bf16.mxu0 0
        %3012 = vmatpush1.bf16.msra.mxu0 %v2968
        %3013 = vmatprep.subr.bf16.mxu0 0
        %3014 = vmatpush1.bf16.msra.mxu0 %v2967
        %3015 = vmatprep.subr.bf16.mxu0 0
        %3016 = vmatpush2.bf16.msra.mxu0 %v2982
        %3017 = vmatprep.subr.bf16.mxu0 0
        %3018 = vmatpush2.bf16.msra.mxu0 %v2981
        %3019 = vmatprep.subr.bf16.mxu0 0
        %3020 = vmatpush2.bf16.msra.mxu0 %v2980
        %3021 = vmatprep.subr.bf16.mxu0 0
        %3022 = vmatpush2.bf16.msra.mxu0 %v2979
        %3023 = vmatprep.subr.bf16.mxu0 0
        %3024 = vmatpush2.bf16.msra.mxu0 %v2978
        %3025 = vmatprep.subr.bf16.mxu0 0
        %3026 = vmatpush2.bf16.msra.mxu0 %v2977
        %3027 = vmatprep.subr.bf16.mxu0 0
        %3028 = vmatpush2.bf16.msra.mxu0 %v2976
        %3029 = vmatprep.subr.bf16.mxu0 0
        %3030 = vmatpush2.bf16.msra.mxu0 %v2975
        %3031 = vmatprep.mubr.bf16.mxu0 %v2833
        %3032 = vmatmul.mubr.bf16.gmra.mxu0 %v2832
        %v3033 = vpop.f32.mrf.mxu0
        %v3034 = vadd.f32 %v2901, %v3033
        %v3035 = vpop.f32.mrf.mxu0
        %v3036 = vpop.f32.mrf.mxu0
        %v3037 = vadd.f32 %v2901, %v3036
        %v3038 = vpop.f32.mrf.mxu0
        %3039 = vmatprep.mubr.bf16.mxu0 %v2835
        %3040 = vmatmul.mubr.bf16.gmra.mxu0 %v2834
        %v3041 = vpop.f32.mrf.mxu0
        %v3042 = vadd.f32 %v2901, %v3041
        %v3043 = vpop.f32.mrf.mxu0
        %v3044 = vpop.f32.mrf.mxu0
        %v3045 = vadd.f32 %v2901, %v3044
        %v3046 = vpop.f32.mrf.mxu0
        %3047 = vmatprep.mubr.bf16.mxu0 %v2837
        %3048 = vmatmul.mubr.bf16.gmra.mxu0 %v2836
        %v3049 = vpop.f32.mrf.mxu0
        %v3050 = vadd.f32 %v2901, %v3049
        %v3051 = vpop.f32.mrf.mxu0
        %v3052 = vpop.f32.mrf.mxu0
        %v3053 = vadd.f32 %v2901, %v3052
        %v3054 = vpop.f32.mrf.mxu0
        %3055 = vmatprep.mubr.bf16.mxu0 %v2839
        %3056 = vmatmul.mubr.bf16.gmra.mxu0 %v2838
        %v3057 = vpop.f32.mrf.mxu0
        %v3058 = vadd.f32 %v2901, %v3057
        %v3059 = vpop.f32.mrf.mxu0
        %v3060 = vpop.f32.mrf.mxu0
        %v3061 = vadd.f32 %v2901, %v3060
        %v3062 = vpop.f32.mrf.mxu0
        %3063 = vmatprep.mubr.bf16.mxu0 %v2841
        %3064 = vmatmul.mubr.bf16.gmra.mxu0 %v2840
        %v3065 = vpop.f32.mrf.mxu0
        %v3066 = vadd.f32 %v2901, %v3065
        %v3067 = vpop.f32.mrf.mxu0
        %v3068 = vpop.f32.mrf.mxu0
        %v3069 = vadd.f32 %v2901, %v3068
        %v3070 = vpop.f32.mrf.mxu0
        %3071 = vmatprep.mubr.bf16.mxu0 %v2843
        %3072 = vmatmul.mubr.bf16.gmra.mxu0 %v2842
        %v3073 = vpop.f32.mrf.mxu0
        %v3074 = vadd.f32 %v2901, %v3073
        %v3075 = vpop.f32.mrf.mxu0
        %v3076 = vpop.f32.mrf.mxu0
        %v3077 = vadd.f32 %v2901, %v3076
        %v3078 = vpop.f32.mrf.mxu0
        %3079 = vmatprep.mubr.bf16.mxu0 %v2845
        %3080 = vmatmul.mubr.bf16.gmra.mxu0 %v2844
        %v3081 = vpop.f32.mrf.mxu0
        %v3082 = vadd.f32 %v2901, %v3081
        %v3083 = vpop.f32.mrf.mxu0
        %v3084 = vpop.f32.mrf.mxu0
        %v3085 = vadd.f32 %v2901, %v3084
        %v3086 = vpop.f32.mrf.mxu0
        %3087 = vmatprep.mubr.bf16.mxu0 %v2847
        %3088 = vmatmul.mubr.bf16.gmra.mxu0 %v2846
        %v3089 = vpop.f32.mrf.mxu0
        %v3090 = vadd.f32 %v2901, %v3089
        %v3091 = vpop.f32.mrf.mxu0
        %v3092 = vpop.f32.mrf.mxu0
        %v3093 = vadd.f32 %v2901, %v3092
        %v3094 = vpop.f32.mrf.mxu0
        %3095 = vmatprep.mubr.bf16.mxu0 %v2849
        %3096 = vmatmul.mubr.bf16.gmra.mxu0 %v2848
        %v3097 = vpop.f32.mrf.mxu0
        %v3098 = vadd.f32 %v2901, %v3097
        %v3099 = vpop.f32.mrf.mxu0
        %v3100 = vpop.f32.mrf.mxu0
        %v3101 = vadd.f32 %v2901, %v3100
        %v3102 = vpop.f32.mrf.mxu0
        %3103 = vmatprep.mubr.bf16.mxu0 %v2851
        %3104 = vmatmul.mubr.bf16.gmra.mxu0 %v2850
        %v3105 = vpop.f32.mrf.mxu0
        %v3106 = vadd.f32 %v2901, %v3105
        %v3107 = vpop.f32.mrf.mxu0
        %v3108 = vpop.f32.mrf.mxu0
        %v3109 = vadd.f32 %v2901, %v3108
        %v3110 = vpop.f32.mrf.mxu0
        %3111 = vmatprep.mubr.bf16.mxu0 %v2853
        %3112 = vmatmul.mubr.bf16.gmra.mxu0 %v2852
        %v3113 = vpop.f32.mrf.mxu0
        %v3114 = vadd.f32 %v2901, %v3113
        %v3115 = vpop.f32.mrf.mxu0
        %v3116 = vpop.f32.mrf.mxu0
        %v3117 = vadd.f32 %v2901, %v3116
        %v3118 = vpop.f32.mrf.mxu0
        %3119 = vmatprep.mubr.bf16.mxu0 %v2855
        %3120 = vmatmul.mubr.bf16.gmra.mxu0 %v2854
        %v3121 = vpop.f32.mrf.mxu0
        %v3122 = vadd.f32 %v2901, %v3121
        %v3123 = vpop.f32.mrf.mxu0
        %v3124 = vpop.f32.mrf.mxu0
        %v3125 = vadd.f32 %v2901, %v3124
        %v3126 = vpop.f32.mrf.mxu0
        %3127 = vmatprep.mubr.bf16.mxu0 %v2857
        %3128 = vmatmul.mubr.bf16.gmra.mxu0 %v2856
        %v3129 = vpop.f32.mrf.mxu0
        %v3130 = vadd.f32 %v2901, %v3129
        %v3131 = vpop.f32.mrf.mxu0
        %v3132 = vpop.f32.mrf.mxu0
        %v3133 = vadd.f32 %v2901, %v3132
        %v3134 = vpop.f32.mrf.mxu0
        %3135 = vmatprep.mubr.bf16.mxu0 %v2859
        %3136 = vmatmul.mubr.bf16.gmra.mxu0 %v2858
        %v3137 = vpop.f32.mrf.mxu0
        %v3138 = vadd.f32 %v2901, %v3137
        %v3139 = vpop.f32.mrf.mxu0
        %v3140 = vpop.f32.mrf.mxu0
        %v3141 = vadd.f32 %v2901, %v3140
        %v3142 = vpop.f32.mrf.mxu0
        %3143 = vmatprep.mubr.bf16.mxu0 %v2861
        %3144 = vmatmul.mubr.bf16.gmra.mxu0 %v2860
        %v3145 = vpop.f32.mrf.mxu0
        %v3146 = vadd.f32 %v2901, %v3145
        %v3147 = vpop.f32.mrf.mxu0
        %v3148 = vpop.f32.mrf.mxu0
        %v3149 = vadd.f32 %v2901, %v3148
        %v3150 = vpop.f32.mrf.mxu0
        %3151 = vmatprep.mubr.bf16.mxu0 %v2863
        %3152 = vmatmul.mubr.bf16.gmra.mxu0 %v2862
        %v3153 = vpop.f32.mrf.mxu0
        %v3154 = vadd.f32 %v2901, %v3153
        %v3155 = vpop.f32.mrf.mxu0
        %v3156 = vpop.f32.mrf.mxu0
        %v3157 = vadd.f32 %v2901, %v3156
        %v3158 = vpop.f32.mrf.mxu0
        %3159 = vdwg.mxu0
        %vm3160 = vcmp.gt.f32.partialorder %v3034, 0.0
        %vm3161 = vcmp.gt.f32.partialorder %v3037, 0.0
        %vm3162 = vcmp.gt.f32.partialorder %v3042, 0.0
        %vm3163 = vcmp.gt.f32.partialorder %v3045, 0.0
        %vm3164 = vcmp.gt.f32.partialorder %v3050, 0.0
        %vm3165 = vcmp.gt.f32.partialorder %v3053, 0.0
        %vm3166 = vcmp.gt.f32.partialorder %v3058, 0.0
        %vm3167 = vcmp.gt.f32.partialorder %v3061, 0.0
        %vm3168 = vcmp.gt.f32.partialorder %v3066, 0.0
        %vm3169 = vcmp.gt.f32.partialorder %v3069, 0.0
        %vm3170 = vcmp.gt.f32.partialorder %v3074, 0.0
        %vm3171 = vcmp.gt.f32.partialorder %v3077, 0.0
        %vm3172 = vcmp.gt.f32.partialorder %v3082, 0.0
        %vm3173 = vcmp.gt.f32.partialorder %v3085, 0.0
        %vm3174 = vcmp.gt.f32.partialorder %v3090, 0.0
        %vm3175 = vcmp.gt.f32.partialorder %v3093, 0.0
        %vm3176 = vcmp.gt.f32.partialorder %v3098, 0.0
        %vm3177 = vcmp.gt.f32.partialorder %v3101, 0.0
        %vm3178 = vcmp.gt.f32.partialorder %v3106, 0.0
        %vm3179 = vcmp.gt.f32.partialorder %v3109, 0.0
        %vm3180 = vcmp.gt.f32.partialorder %v3114, 0.0
        %vm3181 = vcmp.gt.f32.partialorder %v3117, 0.0
        %vm3182 = vcmp.gt.f32.partialorder %v3122, 0.0
        %vm3183 = vcmp.gt.f32.partialorder %v3125, 0.0
        %vm3184 = vcmp.gt.f32.partialorder %v3130, 0.0
        %vm3185 = vcmp.gt.f32.partialorder %v3133, 0.0
        %vm3186 = vcmp.gt.f32.partialorder %v3138, 0.0
        %vm3187 = vcmp.gt.f32.partialorder %v3141, 0.0
        %vm3188 = vcmp.gt.f32.partialorder %v3146, 0.0
        %vm3189 = vcmp.gt.f32.partialorder %v3149, 0.0
        %vm3190 = vcmp.gt.f32.partialorder %v3154, 0.0
        %vm3191 = vcmp.gt.f32.partialorder %v3157, 0.0
        %v3192 = vmul.f32 %v3034, 0.2
        %v3193 = vmul.f32 %v3037, 0.2
        %v3194 = vmul.f32 %v3042, 0.2
        %v3195 = vmul.f32 %v3045, 0.2
        %v3196 = vmul.f32 %v3050, 0.2
        %v3197 = vmul.f32 %v3053, 0.2
        %v3198 = vmul.f32 %v3058, 0.2
        %v3199 = vmul.f32 %v3061, 0.2
        %v3200 = vmul.f32 %v3066, 0.2
        %v3201 = vmul.f32 %v3069, 0.2
        %v3202 = vmul.f32 %v3074, 0.2
        %v3203 = vmul.f32 %v3077, 0.2
        %v3204 = vmul.f32 %v3082, 0.2
        %v3205 = vmul.f32 %v3085, 0.2
        %v3206 = vmul.f32 %v3090, 0.2
        %v3207 = vmul.f32 %v3093, 0.2
        %v3208 = vmul.f32 %v3098, 0.2
        %v3209 = vmul.f32 %v3101, 0.2
        %v3210 = vmul.f32 %v3106, 0.2
        %v3211 = vmul.f32 %v3109, 0.2
        %v3212 = vmul.f32 %v3114, 0.2
        %v3213 = vmul.f32 %v3117, 0.2
        %v3214 = vmul.f32 %v3122, 0.2
        %v3215 = vmul.f32 %v3125, 0.2
        %v3216 = vmul.f32 %v3130, 0.2
        %v3217 = vmul.f32 %v3133, 0.2
        %v3218 = vmul.f32 %v3138, 0.2
        %v3219 = vmul.f32 %v3141, 0.2
        %v3220 = vmul.f32 %v3146, 0.2
        %v3221 = vmul.f32 %v3149, 0.2
        %v3222 = vmul.f32 %v3154, 0.2
        %v3223 = vmul.f32 %v3157, 0.2
        %v3224 = vsel %vm3160, %v3034, %v3192
        %v3225 = vsel %vm3161, %v3037, %v3193
        %v3226 = vsel %vm3162, %v3042, %v3194
        %v3227 = vsel %vm3163, %v3045, %v3195
        %v3228 = vsel %vm3164, %v3050, %v3196
        %v3229 = vsel %vm3165, %v3053, %v3197
        %v3230 = vsel %vm3166, %v3058, %v3198
        %v3231 = vsel %vm3167, %v3061, %v3199
        %v3232 = vsel %vm3168, %v3066, %v3200
        %v3233 = vsel %vm3169, %v3069, %v3201
        %v3234 = vsel %vm3170, %v3074, %v3202
        %v3235 = vsel %vm3171, %v3077, %v3203
        %v3236 = vsel %vm3172, %v3082, %v3204
        %v3237 = vsel %vm3173, %v3085, %v3205
        %v3238 = vsel %vm3174, %v3090, %v3206
        %v3239 = vsel %vm3175, %v3093, %v3207
        %v3240 = vsel %vm3176, %v3098, %v3208
        %v3241 = vsel %vm3177, %v3101, %v3209
        %v3242 = vsel %vm3178, %v3106, %v3210
        %v3243 = vsel %vm3179, %v3109, %v3211
        %v3244 = vsel %vm3180, %v3114, %v3212
        %v3245 = vsel %vm3181, %v3117, %v3213
        %v3246 = vsel %vm3182, %v3122, %v3214
        %v3247 = vsel %vm3183, %v3125, %v3215
        %v3248 = vsel %vm3184, %v3130, %v3216
        %v3249 = vsel %vm3185, %v3133, %v3217
        %v3250 = vsel %vm3186, %v3138, %v3218
        %v3251 = vsel %vm3187, %v3141, %v3219
        %v3252 = vsel %vm3188, %v3146, %v3220
        %v3253 = vsel %vm3189, %v3149, %v3221
        %v3254 = vsel %vm3190, %v3154, %v3222
        %v3255 = vsel %vm3191, %v3157, %v3223
        %v3256 = vpack.c.bf16 %v3225, %v3224
        %v3257 = vpack.c.bf16 %v3227, %v3226
        %v3258 = vpack.c.bf16 %v3229, %v3228
        %v3259 = vpack.c.bf16 %v3231, %v3230
        %v3260 = vpack.c.bf16 %v3233, %v3232
        %v3261 = vpack.c.bf16 %v3235, %v3234
        %v3262 = vpack.c.bf16 %v3237, %v3236
        %v3263 = vpack.c.bf16 %v3239, %v3238
        %v3264 = vpack.c.bf16 %v3241, %v3240
        %v3265 = vpack.c.bf16 %v3243, %v3242
        %v3266 = vpack.c.bf16 %v3245, %v3244
        %v3267 = vpack.c.bf16 %v3247, %v3246
        %v3268 = vpack.c.bf16 %v3249, %v3248
        %v3269 = vpack.c.bf16 %v3251, %v3250
        %v3270 = vpack.c.bf16 %v3253, %v3252
        %v3271 = vpack.c.bf16 %v3255, %v3254
        %v3272 = vld [vmem:[#allocation11] sm:$0xf]
        %v3273 = vld [vmem:[#allocation11 + $0x4] sm:$0xf]
        %v3274 = vld [vmem:[#allocation11 + $0x8] sm:$0xf]
        %v3275 = vld [vmem:[#allocation11 + $0xc] sm:$0xf]
        %v3276 = vld [vmem:[#allocation11 + $0x10] sm:$0xf]
        %v3277 = vld [vmem:[#allocation11 + $0x14] sm:$0xf]
        %v3278 = vld [vmem:[#allocation11 + $0x18] sm:$0xf]
        %v3279 = vld [vmem:[#allocation11 + $0x1c] sm:$0xf]
        %v3280 = vld [vmem:[#allocation11 + $0x20] sm:$0xf]
        %v3281 = vld [vmem:[#allocation11 + $0x24] sm:$0xf]
        %v3282 = vld [vmem:[#allocation11 + $0x28] sm:$0xf]
        %v3283 = vld [vmem:[#allocation11 + $0x2c] sm:$0xf]
        %v3284 = vld [vmem:[#allocation11 + $0x30] sm:$0xf]
        %v3285 = vld [vmem:[#allocation11 + $0x34] sm:$0xf]
        %v3286 = vld [vmem:[#allocation11 + $0x38] sm:$0xf]
        %v3287 = vld [vmem:[#allocation11 + $0x3c] sm:$0xf]
        %v3288 = vld [vmem:[%s8] sm:$0x1]
        %v3290 = vlaneseq
        %v3291 = vshrl.u32 %v3290, 7
        %v3292 = vsub.s32 0, %v3291
        %v3293 = vrot.slane %v3288, %v3292
        %v3311 = vunpack.c.l.b16 %v3272
        %v3312 = vunpack.c.l.b16 %v3273
        %v3313 = vunpack.c.l.b16 %v3274
        %v3314 = vunpack.c.l.b16 %v3275
        %v3315 = vunpack.c.l.b16 %v3276
        %v3316 = vunpack.c.l.b16 %v3277
        %v3317 = vunpack.c.l.b16 %v3278
        %v3318 = vunpack.c.l.b16 %v3279
        %v3319 = vunpack.c.l.b16 %v3280
        %v3320 = vunpack.c.l.b16 %v3281
        %v3321 = vunpack.c.l.b16 %v3282
        %v3322 = vunpack.c.l.b16 %v3283
        %v3323 = vunpack.c.l.b16 %v3284
        %v3324 = vunpack.c.l.b16 %v3285
        %v3325 = vunpack.c.l.b16 %v3286
        %v3326 = vunpack.c.l.b16 %v3287
        %v3327 = vpack.c.b16 %v3312, %v3311
        %v3328 = vpack.c.b16 %v3314, %v3313
        %v3329 = vpack.c.b16 %v3316, %v3315
        %v3330 = vpack.c.b16 %v3318, %v3317
        %v3331 = vpack.c.b16 %v3320, %v3319
        %v3332 = vpack.c.b16 %v3322, %v3321
        %v3333 = vpack.c.b16 %v3324, %v3323
        %v3334 = vpack.c.b16 %v3326, %v3325
        %3343 = vmatprep.subr.bf16.mxu0 0
        %3344 = vmatpush1.bf16.msra.mxu0 %v3334
        %3345 = vmatprep.subr.bf16.mxu0 0
        %3346 = vmatpush1.bf16.msra.mxu0 %v3333
        %3347 = vmatprep.subr.bf16.mxu0 0
        %3348 = vmatpush1.bf16.msra.mxu0 %v3332
        %3349 = vmatprep.subr.bf16.mxu0 0
        %3350 = vmatpush1.bf16.msra.mxu0 %v3331
        %3351 = vmatprep.subr.bf16.mxu0 0
        %3352 = vmatpush1.bf16.msra.mxu0 %v3330
        %3353 = vmatprep.subr.bf16.mxu0 0
        %3354 = vmatpush1.bf16.msra.mxu0 %v3329
        %3355 = vmatprep.subr.bf16.mxu0 0
        %3356 = vmatpush1.bf16.msra.mxu0 %v3328
        %3357 = vmatprep.subr.bf16.mxu0 0
        %3358 = vmatpush1.bf16.msra.mxu0 %v3327
        %3359 = vmatprep.subr.bf16.mxu0 0
        %3360 = vmatpush2.bf16.msra.mxu0 0
        %3361 = vmatprep.subr.bf16.mxu0 0
        %3362 = vmatpush2.bf16.msra.mxu0 0
        %3363 = vmatprep.subr.bf16.mxu0 0
        %3364 = vmatpush2.bf16.msra.mxu0 0
        %3365 = vmatprep.subr.bf16.mxu0 0
        %3366 = vmatpush2.bf16.msra.mxu0 0
        %3367 = vmatprep.subr.bf16.mxu0 0
        %3368 = vmatpush2.bf16.msra.mxu0 0
        %3369 = vmatprep.subr.bf16.mxu0 0
        %3370 = vmatpush2.bf16.msra.mxu0 0
        %3371 = vmatprep.subr.bf16.mxu0 0
        %3372 = vmatpush2.bf16.msra.mxu0 0
        %3373 = vmatprep.subr.bf16.mxu0 0
        %3374 = vmatpush2.bf16.msra.mxu0 0
        %3375 = vmatprep.mubr.bf16.mxu0 0
        %3376 = vmatmul.mubr.bf16.gmra.mxu0 %v3256
        %v3377 = vpop.f32.mrf.mxu0
        %v3378 = vadd.f32 %v3293, %v3377
        %v3379 = vpop.f32.mrf.mxu0
        %v3380 = vpop.f32.mrf.mxu0
        %v3381 = vadd.f32 %v3293, %v3380
        %v3382 = vpop.f32.mrf.mxu0
        %3383 = vmatprep.mubr.bf16.mxu0 0
        %3384 = vmatmul.mubr.bf16.gmra.mxu0 %v3257
        %v3385 = vpop.f32.mrf.mxu0
        %v3386 = vadd.f32 %v3293, %v3385
        %v3387 = vpop.f32.mrf.mxu0
        %v3388 = vpop.f32.mrf.mxu0
        %v3389 = vadd.f32 %v3293, %v3388
        %v3390 = vpop.f32.mrf.mxu0
        %3391 = vmatprep.mubr.bf16.mxu0 0
        %3392 = vmatmul.mubr.bf16.gmra.mxu0 %v3258
        %v3393 = vpop.f32.mrf.mxu0
        %v3394 = vadd.f32 %v3293, %v3393
        %v3395 = vpop.f32.mrf.mxu0
        %v3396 = vpop.f32.mrf.mxu0
        %v3397 = vadd.f32 %v3293, %v3396
        %v3398 = vpop.f32.mrf.mxu0
        %3399 = vmatprep.mubr.bf16.mxu0 0
        %3400 = vmatmul.mubr.bf16.gmra.mxu0 %v3259
        %v3401 = vpop.f32.mrf.mxu0
        %v3402 = vadd.f32 %v3293, %v3401
        %v3403 = vpop.f32.mrf.mxu0
        %v3404 = vpop.f32.mrf.mxu0
        %v3405 = vadd.f32 %v3293, %v3404
        %v3406 = vpop.f32.mrf.mxu0
        %3407 = vmatprep.mubr.bf16.mxu0 0
        %3408 = vmatmul.mubr.bf16.gmra.mxu0 %v3260
        %v3409 = vpop.f32.mrf.mxu0
        %v3410 = vadd.f32 %v3293, %v3409
        %v3411 = vpop.f32.mrf.mxu0
        %v3412 = vpop.f32.mrf.mxu0
        %v3413 = vadd.f32 %v3293, %v3412
        %v3414 = vpop.f32.mrf.mxu0
        %3415 = vmatprep.mubr.bf16.mxu0 0
        %3416 = vmatmul.mubr.bf16.gmra.mxu0 %v3261
        %v3417 = vpop.f32.mrf.mxu0
        %v3418 = vadd.f32 %v3293, %v3417
        %v3419 = vpop.f32.mrf.mxu0
        %v3420 = vpop.f32.mrf.mxu0
        %v3421 = vadd.f32 %v3293, %v3420
        %v3422 = vpop.f32.mrf.mxu0
        %3423 = vmatprep.mubr.bf16.mxu0 0
        %3424 = vmatmul.mubr.bf16.gmra.mxu0 %v3262
        %v3425 = vpop.f32.mrf.mxu0
        %v3426 = vadd.f32 %v3293, %v3425
        %v3427 = vpop.f32.mrf.mxu0
        %v3428 = vpop.f32.mrf.mxu0
        %v3429 = vadd.f32 %v3293, %v3428
        %v3430 = vpop.f32.mrf.mxu0
        %3431 = vmatprep.mubr.bf16.mxu0 0
        %3432 = vmatmul.mubr.bf16.gmra.mxu0 %v3263
        %v3433 = vpop.f32.mrf.mxu0
        %v3434 = vadd.f32 %v3293, %v3433
        %v3435 = vpop.f32.mrf.mxu0
        %v3436 = vpop.f32.mrf.mxu0
        %v3437 = vadd.f32 %v3293, %v3436
        %v3438 = vpop.f32.mrf.mxu0
        %3439 = vmatprep.mubr.bf16.mxu0 0
        %3440 = vmatmul.mubr.bf16.gmra.mxu0 %v3264
        %v3441 = vpop.f32.mrf.mxu0
        %v3442 = vadd.f32 %v3293, %v3441
        %v3443 = vpop.f32.mrf.mxu0
        %v3444 = vpop.f32.mrf.mxu0
        %v3445 = vadd.f32 %v3293, %v3444
        %v3446 = vpop.f32.mrf.mxu0
        %3447 = vmatprep.mubr.bf16.mxu0 0
        %3448 = vmatmul.mubr.bf16.gmra.mxu0 %v3265
        %v3449 = vpop.f32.mrf.mxu0
        %v3450 = vadd.f32 %v3293, %v3449
        %v3451 = vpop.f32.mrf.mxu0
        %v3452 = vpop.f32.mrf.mxu0
        %v3453 = vadd.f32 %v3293, %v3452
        %v3454 = vpop.f32.mrf.mxu0
        %3455 = vmatprep.mubr.bf16.mxu0 0
        %3456 = vmatmul.mubr.bf16.gmra.mxu0 %v3266
        %v3457 = vpop.f32.mrf.mxu0
        %v3458 = vadd.f32 %v3293, %v3457
        %v3459 = vpop.f32.mrf.mxu0
        %v3460 = vpop.f32.mrf.mxu0
        %v3461 = vadd.f32 %v3293, %v3460
        %v3462 = vpop.f32.mrf.mxu0
        %3463 = vmatprep.mubr.bf16.mxu0 0
        %3464 = vmatmul.mubr.bf16.gmra.mxu0 %v3267
        %v3465 = vpop.f32.mrf.mxu0
        %v3466 = vadd.f32 %v3293, %v3465
        %v3467 = vpop.f32.mrf.mxu0
        %v3468 = vpop.f32.mrf.mxu0
        %v3469 = vadd.f32 %v3293, %v3468
        %v3470 = vpop.f32.mrf.mxu0
        %3471 = vmatprep.mubr.bf16.mxu0 0
        %3472 = vmatmul.mubr.bf16.gmra.mxu0 %v3268
        %v3473 = vpop.f32.mrf.mxu0
        %v3474 = vadd.f32 %v3293, %v3473
        %v3475 = vpop.f32.mrf.mxu0
        %v3476 = vpop.f32.mrf.mxu0
        %v3477 = vadd.f32 %v3293, %v3476
        %v3478 = vpop.f32.mrf.mxu0
        %3479 = vmatprep.mubr.bf16.mxu0 0
        %3480 = vmatmul.mubr.bf16.gmra.mxu0 %v3269
        %v3481 = vpop.f32.mrf.mxu0
        %v3482 = vadd.f32 %v3293, %v3481
        %v3483 = vpop.f32.mrf.mxu0
        %v3484 = vpop.f32.mrf.mxu0
        %v3485 = vadd.f32 %v3293, %v3484
        %v3486 = vpop.f32.mrf.mxu0
        %3487 = vmatprep.mubr.bf16.mxu0 0
        %3488 = vmatmul.mubr.bf16.gmra.mxu0 %v3270
        %v3489 = vpop.f32.mrf.mxu0
        %v3490 = vadd.f32 %v3293, %v3489
        %v3491 = vpop.f32.mrf.mxu0
        %v3492 = vpop.f32.mrf.mxu0
        %v3493 = vadd.f32 %v3293, %v3492
        %v3494 = vpop.f32.mrf.mxu0
        %3495 = vmatprep.mubr.bf16.mxu0 0
        %3496 = vmatmul.mubr.bf16.gmra.mxu0 %v3271
        %v3497 = vpop.f32.mrf.mxu0
        %v3498 = vadd.f32 %v3293, %v3497
        %v3499 = vpop.f32.mrf.mxu0
        %v3500 = vpop.f32.mrf.mxu0
        %v3501 = vadd.f32 %v3293, %v3500
        %v3502 = vpop.f32.mrf.mxu0
        %3503 = vdwg.mxu0
        %3504 = vst [vmem:[%s422] sm:$0xff] %v3378
        %3505 = vst [vmem:[%s422 + $0x8] sm:$0xff] %v3381
        %3506 = vst [vmem:[%s422 + $0x10] sm:$0xff] %v3386
        %3507 = vst [vmem:[%s422 + $0x18] sm:$0xff] %v3389
        %3508 = vst [vmem:[%s422 + $0x20] sm:$0xff] %v3394
        %3509 = vst [vmem:[%s422 + $0x28] sm:$0xff] %v3397
        %3510 = vst [vmem:[%s422 + $0x30] sm:$0xff] %v3402
        %3511 = vst [vmem:[%s422 + $0x38] sm:$0xff] %v3405
        %3512 = vst [vmem:[%s422 + $0x40] sm:$0xff] %v3410
        %3513 = vst [vmem:[%s422 + $0x48] sm:$0xff] %v3413
        %3514 = vst [vmem:[%s422 + $0x50] sm:$0xff] %v3418
        %3515 = vst [vmem:[%s422 + $0x58] sm:$0xff] %v3421
        %3516 = vst [vmem:[%s422 + $0x60] sm:$0xff] %v3426
        %3517 = vst [vmem:[%s422 + $0x68] sm:$0xff] %v3429
        %3518 = vst [vmem:[%s422 + $0x70] sm:$0xff] %v3434
        %3519 = vst [vmem:[%s422 + $0x78] sm:$0xff] %v3437
        %3520 = vst [vmem:[%s422 + $0x80] sm:$0xff] %v3442
        %3521 = vst [vmem:[%s422 + $0x88] sm:$0xff] %v3445
        %3522 = vst [vmem:[%s422 + $0x90] sm:$0xff] %v3450
        %3523 = vst [vmem:[%s422 + $0x98] sm:$0xff] %v3453
        %3524 = vst [vmem:[%s422 + $0xa0] sm:$0xff] %v3458
        %3525 = vst [vmem:[%s422 + $0xa8] sm:$0xff] %v3461
        %3526 = vst [vmem:[%s422 + $0xb0] sm:$0xff] %v3466
        %3527 = vst [vmem:[%s422 + $0xb8] sm:$0xff] %v3469
        %3528 = vst [vmem:[%s422 + $0xc0] sm:$0xff] %v3474
        %3529 = vst [vmem:[%s422 + $0xc8] sm:$0xff] %v3477
        %3530 = vst [vmem:[%s422 + $0xd0] sm:$0xff] %v3482
        %3531 = vst [vmem:[%s422 + $0xd8] sm:$0xff] %v3485
        %3532 = vst [vmem:[%s422 + $0xe0] sm:$0xff] %v3490
        %3533 = vst [vmem:[%s422 + $0xe8] sm:$0xff] %v3493
        %3534 = vst [vmem:[%s422 + $0xf0] sm:$0xff] %v3498
        %3535 = vst [vmem:[%s422 + $0xf8] sm:$0xff] %v3501
        %s3536 = sand.u32 %s231, 1
        %s3537 = scalar_lea.sflag [#allocation4], %s3536
        %s3538 = sand.u32 %s231, 1
        %s3539 = smul.addr %s3538, 256
        %s3540 = scalar_lea.vmem [#allocation13], %s3539
        // Predicated region
        $region81: #{tpu_custom_call.1} parent=55 // pred_check
          %p3541 = pneg %p241
        $region82: #{tpu_custom_call.1} parent=55 // pred_check_branch
          %3543 = sbr.rel (%p3541) target = $region84
        $region83: #{tpu_custom_call.1} parent=55 // pred_region
          %s3544 = smul.u32 32, %s29
          %s3546 = ssub.s32 4096, 4096
          %3547 = vsyncadd %s3537, %s3546
          %s3548 = smul.addr %s3544, 128
          %s3549 = scalar_lea.hbm %s9, %s3548
          %s3550 = sshll.u32 %s3540, 4
          %s3551 = int_to_ptr.vmem [resolvable:$true] %s3550
          %3556 = dma.vmem_to_hbm [thread:$0]  %s3551, 4096, %s3549, %s3537, 128, 128, 8
        $region84: #{tpu_custom_call.1} parent=55 // pred_fallthru
          _
      $region56: #{tpu_custom_call.1} parent=5 // pred_fallthru
        _
      %p3557 = scmp.le.s32.totalorder 2, %s24
      // Predicated region
      $region85: #{tpu_custom_call.1} parent=5 // pred_check
        %p3558 = pneg %p3557
      $region86: #{tpu_custom_call.1} parent=5 // pred_check_branch
        %3560 = sbr.rel (%p3558) target = $region88
      $region87: #{tpu_custom_call.1} parent=5 // pred_region
        %s3561 = ssub.s32 %s24, 2
        // Predicated region
        $region89: #{tpu_custom_call.1} parent=87 // pred_check
          %p3562 = pneg %p247
        $region90: #{tpu_custom_call.1} parent=87 // pred_check_branch
          %3564 = sbr.rel (%p3562) target = $region92
        $region91: #{tpu_custom_call.1} parent=87 // pred_region
          %s3565 = sand.u32 %s232, 1
          %s3566 = scalar_lea.sflag [#allocation4], %s3565
          %s3567 = sand.u32 %s232, 1
          %s3568 = smul.addr %s3567, 256
          %s3569 = scalar_lea.vmem [#allocation13], %s3568
          %3570 = dma.done %s3566, 4096
        $region92: #{tpu_custom_call.1} parent=87 // pred_fallthru
          _
      $region88: #{tpu_custom_call.1} parent=5 // pred_fallthru
        _
    $region6: #{tpu_custom_call.1} parent=1 // loop_footer
      %s28 = sadd.s32 1, %s24
    $region7: #{tpu_custom_call.1} parent=1 // loop_footer_branch
      %23 = sbr.rel target = $region3
    $region8: #{tpu_custom_call.1} parent=1 // loop_exit
      _
    %3571 = vsyncpa [#allocation3], 1
    %s3572 = scalar_lea.sflag [#allocation3], 1
    %3573 = vsyncpa %s3572, 1
    %3574 = vsyncpa [#allocation6], 1
    %3575 = vsyncpa [#allocation9], 1
    %3576 = vsyncpa [#allocation12], 1
    %3577 = vsyncpa [#allocation4], 1
    %s3578 = scalar_lea.sflag [#allocation4], 1
    %3579 = vsyncpa %s3578, 1

</llo_original>
